<compile_context>
chip_gen: v7x
topology: tpu7x:2x2x1
jax: 0.10.0
libtpu: 0.0.40
codegen_flags: <defaults>
</compile_context>

<pallas_src>
import jax
import jax.numpy as jnp
from jax.experimental import pallas as pl
from jax.experimental.pallas import tpu as pltpu

HP = 128  # padded per-gate lane width (real H = 64, lanes 64:128 are zero)


# ----------------------------- Pallas kernel --------------------------------

def risk_kernel(xprice_ref,                  # (T*BP, 1)   time-major, batch-padded
                order_ref,                   # (BP, F)
                wih0_ref, b0_ref, whh0_ref,  # (1, 4HP), (1, 4HP), (HP, 4HP)
                w1_ref, b1_ref,              # (2HP, 4HP), (1, 4HP)  stacked [Wih1;Whh1]
                word_ref, bord_ref,          # (F, Fo), (1, Fo)
                wc1l_ref, wc1o_ref, bc1_ref,  # (HP, C), (Fo, C), (1, C)
                wc2_ref, bc2_ref,             # (C, 1), (1, 1)
                out_ref):                     # (BP, 1)
    Hp = whh0_ref.shape[0]
    BP = out_ref.shape[0]
    T = xprice_ref.shape[0] // BP

    # Hoisted layer-0 input projection for all timesteps (I == 1):
    #   xproj[t*BP + b, :] = price[t, b] * w_ih0_row + (b_ih0 + b_hh0)
    xproj = xprice_ref[...] * wih0_ref[...] + b0_ref[...]         # (T*BP, 4HP)

    whh0 = whh0_ref[...]
    w1 = w1_ref[...]
    b1 = b1_ref[...]

    def lstm_gates(g, c):
        # Gates in PyTorch order (i, f, g, o), each in its own 128-lane block.
        i = jax.nn.sigmoid(g[:, 0 * Hp:1 * Hp])
        f = jax.nn.sigmoid(g[:, 1 * Hp:2 * Hp])
        gg = jnp.tanh(g[:, 2 * Hp:3 * Hp])
        o = jax.nn.sigmoid(g[:, 3 * Hp:4 * Hp])
        c_new = f * c + i * gg
        h_new = o * jnp.tanh(c_new)
        return h_new, c_new

    c0 = jnp.zeros((BP, Hp), jnp.float32)
    c1 = jnp.zeros((BP, Hp), jnp.float32)

    # t = 0: h0 = h1 = 0, so the layer-0 recurrent dot and the W_hh1 half of
    # the layer-1 dot are identically zero — skip them.
    h0, c0 = lstm_gates(xproj[0:BP, :], c0)
    g1 = jnp.dot(h0, w1[:Hp, :], preferred_element_type=jnp.float32) + b1
    h1, c1 = lstm_gates(g1, c1)

    # Fully unrolled recurrence: T is small and static, so static slices only.
    for t in range(1, T):
        # layer 0: only the recurrent matmul remains on the critical path
        g0 = xproj[t * BP:(t + 1) * BP, :] + jnp.dot(
            h0, whh0, preferred_element_type=jnp.float32)
        h0, c0 = lstm_gates(g0, c0)
        # layer 1: single fused K=2*HP dot instead of two K=HP dots + add
        g1 = jnp.dot(jnp.concatenate([h0, h1], axis=-1), w1,
                     preferred_element_type=jnp.float32) + b1
        h1, c1 = lstm_gates(g1, c1)

    # order branch: Linear + ReLU (independent of the recurrence; scheduler
    # can hide it under the serial LSTM chain)
    order_feat = jnp.maximum(
        jnp.dot(order_ref[...], word_ref[...],
                preferred_element_type=jnp.float32) + bord_ref[...], 0.0)

    # combined head: concat([h1, order_feat]) @ Wc1 split into two matmuls
    hidden = jnp.maximum(
        jnp.dot(h1, wc1l_ref[...], preferred_element_type=jnp.float32)
        + jnp.dot(order_feat, wc1o_ref[...], preferred_element_type=jnp.float32)
        + bc1_ref[...], 0.0)

    risk = jax.nn.sigmoid(
        jnp.dot(hidden, wc2_ref[...], preferred_element_type=jnp.float32)
        + bc2_ref[...])
    out_ref[...] = risk.astype(out_ref.dtype)


# ------------------------------- wrapper -------------------------------------

def risk_assessment_forward(price_history, order_features, packed):
    """price_history: (B, T, 1); order_features: (B, F) -> (B, 1)."""
    B, T, I = price_history.shape
    assert I == 1
    BP = max(8, ((B + 7) // 8) * 8)       # pad batch to full sublanes

    price_tm = jnp.transpose(price_history.astype(jnp.float32), (1, 0, 2))  # (T, B, 1)
    price_tm = jnp.pad(price_tm, ((0, 0), (0, BP - B), (0, 0)))             # (T, BP, 1)
    price_flat = price_tm.reshape(T * BP, 1)
    order_p = jnp.pad(order_features.astype(jnp.float32), ((0, BP - B), (0, 0)))

    args = (
        price_flat, order_p,
        packed["wih0"], packed["b0"], packed["whh0"],
        packed["w1"], packed["b1"],
        packed["word"], packed["bord"],
        packed["wc1l"], packed["wc1o"], packed["bc1"],
        packed["wc2"], packed["bc2"],
    )
    vmem = pl.BlockSpec(memory_space=pltpu.MemorySpace.VMEM)
    out = pl.pallas_call(
        risk_kernel,
        out_shape=jax.ShapeDtypeStruct((BP, 1), jnp.float32),
        in_specs=[vmem] * len(args),
        out_specs=vmem,
    )(*args)
    return out[:B]


# --------------------------- parameter construction --------------------------

def init_raw_params(key, I=1, H=64, F=3, FO=32, C=32):
    """PyTorch-layout parameters (uniform +-1/sqrt(fan), like nn.LSTM/Linear)."""
    ks = iter(jax.random.split(key, 16))

    def unif(k, shape, fan_in):
        bound = 1.0 / jnp.sqrt(float(fan_in))
        return jax.random.uniform(k, shape, jnp.float32, -bound, bound)

    return dict(
        w_ih0=unif(next(ks), (4 * H, I), H), w_hh0=unif(next(ks), (4 * H, H), H),
        b_ih0=unif(next(ks), (4 * H,), H), b_hh0=unif(next(ks), (4 * H,), H),
        w_ih1=unif(next(ks), (4 * H, H), H), w_hh1=unif(next(ks), (4 * H, H), H),
        b_ih1=unif(next(ks), (4 * H,), H), b_hh1=unif(next(ks), (4 * H,), H),
        w_ord=unif(next(ks), (FO, F), F), b_ord=unif(next(ks), (FO,), F),
        w_c1=unif(next(ks), (C, H + FO), H + FO), b_c1=unif(next(ks), (C,), H + FO),
        w_c2=unif(next(ks), (1, C), C), b_c2=unif(next(ks), (1,), C),
    )


def pack_params(raw, hp=HP):
    """Transpose, pad gates to 128-lane blocks, and stack layer-1 weights."""
    H = raw["w_hh0"].shape[1]

    def gate_pad_cols(w):  # (K, 4H) -> (K, 4*hp): gate k occupies cols [k*hp, k*hp+H)
        out = jnp.zeros((w.shape[0], 4 * hp), jnp.float32)
        for k in range(4):
            out = out.at[:, k * hp:k * hp + H].set(w[:, k * H:(k + 1) * H])
        return out

    def pad_rows(w, rows):
        return jnp.pad(w, ((0, rows - w.shape[0]), (0, 0)))

    wih0 = gate_pad_cols(raw["w_ih0"].T)                           # (1, 4hp)
    b0 = gate_pad_cols((raw["b_ih0"] + raw["b_hh0"])[None, :])     # (1, 4hp)
    whh0 = pad_rows(gate_pad_cols(raw["w_hh0"].T), hp)             # (hp, 4hp)
    wih1 = pad_rows(gate_pad_cols(raw["w_ih1"].T), hp)             # (hp, 4hp)
    whh1 = pad_rows(gate_pad_cols(raw["w_hh1"].T), hp)             # (hp, 4hp)
    w1 = jnp.concatenate([wih1, whh1], axis=0)                     # (2hp, 4hp)
    b1 = gate_pad_cols((raw["b_ih1"] + raw["b_hh1"])[None, :])     # (1, 4hp)

    return dict(
        wih0=wih0, b0=b0, whh0=whh0, w1=w1, b1=b1,
        word=raw["w_ord"].T, bord=raw["b_ord"][None, :],
        wc1l=pad_rows(raw["w_c1"][:, :H].T, hp),                   # (hp, C)
        wc1o=raw["w_c1"][:, H:].T,                                 # (Fo, C)
        bc1=raw["b_c1"][None, :],
        wc2=raw["w_c2"].T, bc2=raw["b_c2"][None, :],
    )


# ------------------------------ pure-JAX reference ---------------------------

def reference_forward(price_history, order_features, raw):
    H = raw["w_hh0"].shape[1]

    def cell(x, h, c, w_ih, w_hh, b_ih, b_hh):
        g = x @ w_ih.T + h @ w_hh.T + b_ih + b_hh
        i = jax.nn.sigmoid(g[:, :H])
        f = jax.nn.sigmoid(g[:, H:2 * H])
        gg = jnp.tanh(g[:, 2 * H:3 * H])
        o = jax.nn.sigmoid(g[:, 3 * H:])
        c = f * c + i * gg
        return o * jnp.tanh(c), c

    B, T, _ = price_history.shape
    h0 = c0 = h1 = c1 = jnp.zeros((B, H), jnp.float32)
    for t in range(T):
        h0, c0 = cell(price_history[:, t, :], h0, c0,
                      raw["w_ih0"], raw["w_hh0"], raw["b_ih0"], raw["b_hh0"])
        h1, c1 = cell(h0, h1, c1,
                      raw["w_ih1"], raw["w_hh1"], raw["b_ih1"], raw["b_hh1"])
    order_feat = jnp.maximum(order_features @ raw["w_ord"].T + raw["b_ord"], 0.0)
    combined = jnp.concatenate([h1, order_feat], axis=1)
    hidden = jnp.maximum(combined @ raw["w_c1"].T + raw["b_c1"], 0.0)
    return jax.nn.sigmoid(hidden @ raw["w_c2"].T + raw["b_c2"])


# ---------------------------------- main --------------------------------------

if __name__ == "__main__":
    key = jax.random.PRNGKey(0)
    k_p, k_x, k_o = jax.random.split(key, 3)

    batch, seq_len = 2, 8
    lstm_input_size, order_feature_size = 1, 3

    raw_params = init_raw_params(k_p)
    packed_params = pack_params(raw_params)

    price_history = jax.random.normal(k_x, (batch, seq_len, lstm_input_size), jnp.float32)
    order_features = jax.random.normal(k_o, (batch, order_feature_size), jnp.float32)

    risk = risk_assessment_forward(price_history, order_features, packed_params)
    risk = jax.block_until_ready(risk)

    ref = reference_forward(price_history, order_features, raw_params)
    assert risk.shape == (batch, 1)
    assert jnp.allclose(risk, ref, atol=1e-5, rtol=1e-5), (risk, ref)

    print("KERNEL_OK")
</pallas_src>

<mosaic_0001>
module attributes {stable_mosaic.version = 11 : i64} {
  func.func @risk_kernel(%arg0: memref<64x1xf32, #tpu.memory_space<vmem>>, %arg1: memref<8x3xf32, #tpu.memory_space<vmem>>, %arg2: memref<1x512xf32, #tpu.memory_space<vmem>>, %arg3: memref<1x512xf32, #tpu.memory_space<vmem>>, %arg4: memref<128x512xf32, #tpu.memory_space<vmem>>, %arg5: memref<256x512xf32, #tpu.memory_space<vmem>>, %arg6: memref<1x512xf32, #tpu.memory_space<vmem>>, %arg7: memref<3x32xf32, #tpu.memory_space<vmem>>, %arg8: memref<1x32xf32, #tpu.memory_space<vmem>>, %arg9: memref<128x32xf32, #tpu.memory_space<vmem>>, %arg10: memref<32x32xf32, #tpu.memory_space<vmem>>, %arg11: memref<1x32xf32, #tpu.memory_space<vmem>>, %arg12: memref<32x1xf32, #tpu.memory_space<vmem>>, %arg13: memref<1x1xf32, #tpu.memory_space<vmem>>, %arg14: memref<8x1xf32, #tpu.memory_space<vmem>>) attributes {dimension_semantics = [], scalar_prefetch = 0 : i64, scratch_operands = 0 : i64, tpu.core_type = #tpu.core_type<tc>} {
    %c0 = arith.constant 0 : index
    %c0_0 = arith.constant 0 : index
    %0 = vector.load %arg0[%c0, %c0_0] : memref<64x1xf32, #tpu.memory_space<vmem>>, vector<64x1xf32>
    %c0_1 = arith.constant 0 : index
    %c0_2 = arith.constant 0 : index
    %1 = vector.load %arg2[%c0_1, %c0_2] : memref<1x512xf32, #tpu.memory_space<vmem>>, vector<1x512xf32>
    %2 = vector.broadcast %0 : vector<64x1xf32> to vector<64x512xf32>
    %3 = vector.broadcast %1 : vector<1x512xf32> to vector<64x512xf32>
    %4 = arith.mulf %2, %3 : vector<64x512xf32>
    %c0_3 = arith.constant 0 : index
    %c0_4 = arith.constant 0 : index
    %5 = vector.load %arg3[%c0_3, %c0_4] : memref<1x512xf32, #tpu.memory_space<vmem>>, vector<1x512xf32>
    %6 = vector.broadcast %5 : vector<1x512xf32> to vector<64x512xf32>
    %7 = arith.addf %4, %6 : vector<64x512xf32>
    %c0_5 = arith.constant 0 : index
    %c0_6 = arith.constant 0 : index
    %8 = vector.load %arg4[%c0_5, %c0_6] : memref<128x512xf32, #tpu.memory_space<vmem>>, vector<128x512xf32>
    %c0_7 = arith.constant 0 : index
    %c0_8 = arith.constant 0 : index
    %9 = vector.load %arg5[%c0_7, %c0_8] : memref<256x512xf32, #tpu.memory_space<vmem>>, vector<256x512xf32>
    %c0_9 = arith.constant 0 : index
    %c0_10 = arith.constant 0 : index
    %10 = vector.load %arg6[%c0_9, %c0_10] : memref<1x512xf32, #tpu.memory_space<vmem>>, vector<1x512xf32>
    %cst = arith.constant 0.000000e+00 : f32
    %11 = vector.broadcast %cst : f32 to vector<8x128xf32>
    %cst_11 = arith.constant 0.000000e+00 : f32
    %12 = vector.broadcast %cst_11 : f32 to vector<8x128xf32>
    %13 = vector.extract_strided_slice %7 {offsets = [0, 0], sizes = [8, 512], strides = [1, 1]} : vector<64x512xf32> to vector<8x512xf32>
    %14 = vector.extract_strided_slice %13 {offsets = [0, 0], sizes = [8, 128], strides = [1, 1]} : vector<8x512xf32> to vector<8x128xf32>
    %15 = arith.negf %14 : vector<8x128xf32>
    %16 = math.exp %15 : vector<8x128xf32>
    %cst_12 = arith.constant 1.000000e+00 : f32
    %17 = vector.broadcast %cst_12 : f32 to vector<8x128xf32>
    %18 = arith.addf %17, %16 : vector<8x128xf32>
    %19 = arith.divf %17, %18 : vector<8x128xf32>
    %20 = vector.extract_strided_slice %13 {offsets = [0, 128], sizes = [8, 128], strides = [1, 1]} : vector<8x512xf32> to vector<8x128xf32>
    %21 = arith.negf %20 : vector<8x128xf32>
    %22 = math.exp %21 : vector<8x128xf32>
    %cst_13 = arith.constant 1.000000e+00 : f32
    %23 = vector.broadcast %cst_13 : f32 to vector<8x128xf32>
    %24 = arith.addf %23, %22 : vector<8x128xf32>
    %25 = arith.divf %23, %24 : vector<8x128xf32>
    %26 = vector.extract_strided_slice %13 {offsets = [0, 256], sizes = [8, 128], strides = [1, 1]} : vector<8x512xf32> to vector<8x128xf32>
    %27 = math.tanh %26 : vector<8x128xf32>
    %28 = vector.extract_strided_slice %13 {offsets = [0, 384], sizes = [8, 128], strides = [1, 1]} : vector<8x512xf32> to vector<8x128xf32>
    %29 = arith.negf %28 : vector<8x128xf32>
    %30 = math.exp %29 : vector<8x128xf32>
    %cst_14 = arith.constant 1.000000e+00 : f32
    %31 = vector.broadcast %cst_14 : f32 to vector<8x128xf32>
    %32 = arith.addf %31, %30 : vector<8x128xf32>
    %33 = arith.divf %31, %32 : vector<8x128xf32>
    %34 = arith.mulf %25, %11 : vector<8x128xf32>
    %35 = arith.mulf %19, %27 : vector<8x128xf32>
    %36 = arith.addf %34, %35 : vector<8x128xf32>
    %37 = math.tanh %36 : vector<8x128xf32>
    %38 = arith.mulf %33, %37 : vector<8x128xf32>
    %39 = vector.extract_strided_slice %9 {offsets = [0, 0], sizes = [128, 512], strides = [1, 1]} : vector<256x512xf32> to vector<128x512xf32>
    %cst_15 = arith.constant dense<0.000000e+00> : vector<8x512xf32>
    %40 = tpu.matmul %38, %39, %cst_15 {dimension_numbers = #tpu.dot_dimension_numbers<[1], [0], [0], [1], [0, 0, 1, 1], [], []>} : vector<8x128xf32>, vector<128x512xf32>, vector<8x512xf32> -> vector<8x512xf32>
    %41 = vector.broadcast %10 : vector<1x512xf32> to vector<8x512xf32>
    %42 = arith.addf %40, %41 : vector<8x512xf32>
    %43 = vector.extract_strided_slice %42 {offsets = [0, 0], sizes = [8, 128], strides = [1, 1]} : vector<8x512xf32> to vector<8x128xf32>
    %44 = arith.negf %43 : vector<8x128xf32>
    %45 = math.exp %44 : vector<8x128xf32>
    %cst_16 = arith.constant 1.000000e+00 : f32
    %46 = vector.broadcast %cst_16 : f32 to vector<8x128xf32>
    %47 = arith.addf %46, %45 : vector<8x128xf32>
    %48 = arith.divf %46, %47 : vector<8x128xf32>
    %49 = vector.extract_strided_slice %42 {offsets = [0, 128], sizes = [8, 128], strides = [1, 1]} : vector<8x512xf32> to vector<8x128xf32>
    %50 = arith.negf %49 : vector<8x128xf32>
    %51 = math.exp %50 : vector<8x128xf32>
    %cst_17 = arith.constant 1.000000e+00 : f32
    %52 = vector.broadcast %cst_17 : f32 to vector<8x128xf32>
    %53 = arith.addf %52, %51 : vector<8x128xf32>
    %54 = arith.divf %52, %53 : vector<8x128xf32>
    %55 = vector.extract_strided_slice %42 {offsets = [0, 256], sizes = [8, 128], strides = [1, 1]} : vector<8x512xf32> to vector<8x128xf32>
    %56 = math.tanh %55 : vector<8x128xf32>
    %57 = vector.extract_strided_slice %42 {offsets = [0, 384], sizes = [8, 128], strides = [1, 1]} : vector<8x512xf32> to vector<8x128xf32>
    %58 = arith.negf %57 : vector<8x128xf32>
    %59 = math.exp %58 : vector<8x128xf32>
    %cst_18 = arith.constant 1.000000e+00 : f32
    %60 = vector.broadcast %cst_18 : f32 to vector<8x128xf32>
    %61 = arith.addf %60, %59 : vector<8x128xf32>
    %62 = arith.divf %60, %61 : vector<8x128xf32>
    %63 = arith.mulf %54, %12 : vector<8x128xf32>
    %64 = arith.mulf %48, %56 : vector<8x128xf32>
    %65 = arith.addf %63, %64 : vector<8x128xf32>
    %66 = math.tanh %65 : vector<8x128xf32>
    %67 = arith.mulf %62, %66 : vector<8x128xf32>
    %68 = vector.extract_strided_slice %7 {offsets = [8, 0], sizes = [8, 512], strides = [1, 1]} : vector<64x512xf32> to vector<8x512xf32>
    %cst_19 = arith.constant dense<0.000000e+00> : vector<8x512xf32>
    %69 = tpu.matmul %38, %8, %cst_19 {dimension_numbers = #tpu.dot_dimension_numbers<[1], [0], [0], [1], [0, 0, 1, 1], [], []>} : vector<8x128xf32>, vector<128x512xf32>, vector<8x512xf32> -> vector<8x512xf32>
    %70 = arith.addf %68, %69 : vector<8x512xf32>
    %71 = vector.extract_strided_slice %70 {offsets = [0, 0], sizes = [8, 128], strides = [1, 1]} : vector<8x512xf32> to vector<8x128xf32>
    %72 = arith.negf %71 : vector<8x128xf32>
    %73 = math.exp %72 : vector<8x128xf32>
    %cst_20 = arith.constant 1.000000e+00 : f32
    %74 = vector.broadcast %cst_20 : f32 to vector<8x128xf32>
    %75 = arith.addf %74, %73 : vector<8x128xf32>
    %76 = arith.divf %74, %75 : vector<8x128xf32>
    %77 = vector.extract_strided_slice %70 {offsets = [0, 128], sizes = [8, 128], strides = [1, 1]} : vector<8x512xf32> to vector<8x128xf32>
    %78 = arith.negf %77 : vector<8x128xf32>
    %79 = math.exp %78 : vector<8x128xf32>
    %cst_21 = arith.constant 1.000000e+00 : f32
    %80 = vector.broadcast %cst_21 : f32 to vector<8x128xf32>
    %81 = arith.addf %80, %79 : vector<8x128xf32>
    %82 = arith.divf %80, %81 : vector<8x128xf32>
    %83 = vector.extract_strided_slice %70 {offsets = [0, 256], sizes = [8, 128], strides = [1, 1]} : vector<8x512xf32> to vector<8x128xf32>
    %84 = math.tanh %83 : vector<8x128xf32>
    %85 = vector.extract_strided_slice %70 {offsets = [0, 384], sizes = [8, 128], strides = [1, 1]} : vector<8x512xf32> to vector<8x128xf32>
    %86 = arith.negf %85 : vector<8x128xf32>
    %87 = math.exp %86 : vector<8x128xf32>
    %cst_22 = arith.constant 1.000000e+00 : f32
    %88 = vector.broadcast %cst_22 : f32 to vector<8x128xf32>
    %89 = arith.addf %88, %87 : vector<8x128xf32>
    %90 = arith.divf %88, %89 : vector<8x128xf32>
    %91 = arith.mulf %82, %36 : vector<8x128xf32>
    %92 = arith.mulf %76, %84 : vector<8x128xf32>
    %93 = arith.addf %91, %92 : vector<8x128xf32>
    %94 = math.tanh %93 : vector<8x128xf32>
    %95 = arith.mulf %90, %94 : vector<8x128xf32>
    %96 = tpu.concatenate %95, %67 in 1 : vector<8x128xf32>, vector<8x128xf32> -> vector<8x256xf32>
    %cst_23 = arith.constant dense<0.000000e+00> : vector<8x512xf32>
    %97 = tpu.matmul %96, %9, %cst_23 {dimension_numbers = #tpu.dot_dimension_numbers<[1], [0], [0], [1], [0, 0, 1, 1], [], []>} : vector<8x256xf32>, vector<256x512xf32>, vector<8x512xf32> -> vector<8x512xf32>
    %98 = vector.broadcast %10 : vector<1x512xf32> to vector<8x512xf32>
    %99 = arith.addf %97, %98 : vector<8x512xf32>
    %100 = vector.extract_strided_slice %99 {offsets = [0, 0], sizes = [8, 128], strides = [1, 1]} : vector<8x512xf32> to vector<8x128xf32>
    %101 = arith.negf %100 : vector<8x128xf32>
    %102 = math.exp %101 : vector<8x128xf32>
    %cst_24 = arith.constant 1.000000e+00 : f32
    %103 = vector.broadcast %cst_24 : f32 to vector<8x128xf32>
    %104 = arith.addf %103, %102 : vector<8x128xf32>
    %105 = arith.divf %103, %104 : vector<8x128xf32>
    %106 = vector.extract_strided_slice %99 {offsets = [0, 128], sizes = [8, 128], strides = [1, 1]} : vector<8x512xf32> to vector<8x128xf32>
    %107 = arith.negf %106 : vector<8x128xf32>
    %108 = math.exp %107 : vector<8x128xf32>
    %cst_25 = arith.constant 1.000000e+00 : f32
    %109 = vector.broadcast %cst_25 : f32 to vector<8x128xf32>
    %110 = arith.addf %109, %108 : vector<8x128xf32>
    %111 = arith.divf %109, %110 : vector<8x128xf32>
    %112 = vector.extract_strided_slice %99 {offsets = [0, 256], sizes = [8, 128], strides = [1, 1]} : vector<8x512xf32> to vector<8x128xf32>
    %113 = math.tanh %112 : vector<8x128xf32>
    %114 = vector.extract_strided_slice %99 {offsets = [0, 384], sizes = [8, 128], strides = [1, 1]} : vector<8x512xf32> to vector<8x128xf32>
    %115 = arith.negf %114 : vector<8x128xf32>
    %116 = math.exp %115 : vector<8x128xf32>
    %cst_26 = arith.constant 1.000000e+00 : f32
    %117 = vector.broadcast %cst_26 : f32 to vector<8x128xf32>
    %118 = arith.addf %117, %116 : vector<8x128xf32>
    %119 = arith.divf %117, %118 : vector<8x128xf32>
    %120 = arith.mulf %111, %65 : vector<8x128xf32>
    %121 = arith.mulf %105, %113 : vector<8x128xf32>
    %122 = arith.addf %120, %121 : vector<8x128xf32>
    %123 = math.tanh %122 : vector<8x128xf32>
    %124 = arith.mulf %119, %123 : vector<8x128xf32>
    %125 = vector.extract_strided_slice %7 {offsets = [16, 0], sizes = [8, 512], strides = [1, 1]} : vector<64x512xf32> to vector<8x512xf32>
    %cst_27 = arith.constant dense<0.000000e+00> : vector<8x512xf32>
    %126 = tpu.matmul %95, %8, %cst_27 {dimension_numbers = #tpu.dot_dimension_numbers<[1], [0], [0], [1], [0, 0, 1, 1], [], []>} : vector<8x128xf32>, vector<128x512xf32>, vector<8x512xf32> -> vector<8x512xf32>
    %127 = arith.addf %125, %126 : vector<8x512xf32>
    %128 = vector.extract_strided_slice %127 {offsets = [0, 0], sizes = [8, 128], strides = [1, 1]} : vector<8x512xf32> to vector<8x128xf32>
    %129 = arith.negf %128 : vector<8x128xf32>
    %130 = math.exp %129 : vector<8x128xf32>
    %cst_28 = arith.constant 1.000000e+00 : f32
    %131 = vector.broadcast %cst_28 : f32 to vector<8x128xf32>
    %132 = arith.addf %131, %130 : vector<8x128xf32>
    %133 = arith.divf %131, %132 : vector<8x128xf32>
    %134 = vector.extract_strided_slice %127 {offsets = [0, 128], sizes = [8, 128], strides = [1, 1]} : vector<8x512xf32> to vector<8x128xf32>
    %135 = arith.negf %134 : vector<8x128xf32>
    %136 = math.exp %135 : vector<8x128xf32>
    %cst_29 = arith.constant 1.000000e+00 : f32
    %137 = vector.broadcast %cst_29 : f32 to vector<8x128xf32>
    %138 = arith.addf %137, %136 : vector<8x128xf32>
    %139 = arith.divf %137, %138 : vector<8x128xf32>
    %140 = vector.extract_strided_slice %127 {offsets = [0, 256], sizes = [8, 128], strides = [1, 1]} : vector<8x512xf32> to vector<8x128xf32>
    %141 = math.tanh %140 : vector<8x128xf32>
    %142 = vector.extract_strided_slice %127 {offsets = [0, 384], sizes = [8, 128], strides = [1, 1]} : vector<8x512xf32> to vector<8x128xf32>
    %143 = arith.negf %142 : vector<8x128xf32>
    %144 = math.exp %143 : vector<8x128xf32>
    %cst_30 = arith.constant 1.000000e+00 : f32
    %145 = vector.broadcast %cst_30 : f32 to vector<8x128xf32>
    %146 = arith.addf %145, %144 : vector<8x128xf32>
    %147 = arith.divf %145, %146 : vector<8x128xf32>
    %148 = arith.mulf %139, %93 : vector<8x128xf32>
    %149 = arith.mulf %133, %141 : vector<8x128xf32>
    %150 = arith.addf %148, %149 : vector<8x128xf32>
    %151 = math.tanh %150 : vector<8x128xf32>
    %152 = arith.mulf %147, %151 : vector<8x128xf32>
    %153 = tpu.concatenate %152, %124 in 1 : vector<8x128xf32>, vector<8x128xf32> -> vector<8x256xf32>
    %cst_31 = arith.constant dense<0.000000e+00> : vector<8x512xf32>
    %154 = tpu.matmul %153, %9, %cst_31 {dimension_numbers = #tpu.dot_dimension_numbers<[1], [0], [0], [1], [0, 0, 1, 1], [], []>} : vector<8x256xf32>, vector<256x512xf32>, vector<8x512xf32> -> vector<8x512xf32>
    %155 = vector.broadcast %10 : vector<1x512xf32> to vector<8x512xf32>
    %156 = arith.addf %154, %155 : vector<8x512xf32>
    %157 = vector.extract_strided_slice %156 {offsets = [0, 0], sizes = [8, 128], strides = [1, 1]} : vector<8x512xf32> to vector<8x128xf32>
    %158 = arith.negf %157 : vector<8x128xf32>
    %159 = math.exp %158 : vector<8x128xf32>
    %cst_32 = arith.constant 1.000000e+00 : f32
    %160 = vector.broadcast %cst_32 : f32 to vector<8x128xf32>
    %161 = arith.addf %160, %159 : vector<8x128xf32>
    %162 = arith.divf %160, %161 : vector<8x128xf32>
    %163 = vector.extract_strided_slice %156 {offsets = [0, 128], sizes = [8, 128], strides = [1, 1]} : vector<8x512xf32> to vector<8x128xf32>
    %164 = arith.negf %163 : vector<8x128xf32>
    %165 = math.exp %164 : vector<8x128xf32>
    %cst_33 = arith.constant 1.000000e+00 : f32
    %166 = vector.broadcast %cst_33 : f32 to vector<8x128xf32>
    %167 = arith.addf %166, %165 : vector<8x128xf32>
    %168 = arith.divf %166, %167 : vector<8x128xf32>
    %169 = vector.extract_strided_slice %156 {offsets = [0, 256], sizes = [8, 128], strides = [1, 1]} : vector<8x512xf32> to vector<8x128xf32>
    %170 = math.tanh %169 : vector<8x128xf32>
    %171 = vector.extract_strided_slice %156 {offsets = [0, 384], sizes = [8, 128], strides = [1, 1]} : vector<8x512xf32> to vector<8x128xf32>
    %172 = arith.negf %171 : vector<8x128xf32>
    %173 = math.exp %172 : vector<8x128xf32>
    %cst_34 = arith.constant 1.000000e+00 : f32
    %174 = vector.broadcast %cst_34 : f32 to vector<8x128xf32>
    %175 = arith.addf %174, %173 : vector<8x128xf32>
    %176 = arith.divf %174, %175 : vector<8x128xf32>
    %177 = arith.mulf %168, %122 : vector<8x128xf32>
    %178 = arith.mulf %162, %170 : vector<8x128xf32>
    %179 = arith.addf %177, %178 : vector<8x128xf32>
    %180 = math.tanh %179 : vector<8x128xf32>
    %181 = arith.mulf %176, %180 : vector<8x128xf32>
    %182 = vector.extract_strided_slice %7 {offsets = [24, 0], sizes = [8, 512], strides = [1, 1]} : vector<64x512xf32> to vector<8x512xf32>
    %cst_35 = arith.constant dense<0.000000e+00> : vector<8x512xf32>
    %183 = tpu.matmul %152, %8, %cst_35 {dimension_numbers = #tpu.dot_dimension_numbers<[1], [0], [0], [1], [0, 0, 1, 1], [], []>} : vector<8x128xf32>, vector<128x512xf32>, vector<8x512xf32> -> vector<8x512xf32>
    %184 = arith.addf %182, %183 : vector<8x512xf32>
    %185 = vector.extract_strided_slice %184 {offsets = [0, 0], sizes = [8, 128], strides = [1, 1]} : vector<8x512xf32> to vector<8x128xf32>
    %186 = arith.negf %185 : vector<8x128xf32>
    %187 = math.exp %186 : vector<8x128xf32>
    %cst_36 = arith.constant 1.000000e+00 : f32
    %188 = vector.broadcast %cst_36 : f32 to vector<8x128xf32>
    %189 = arith.addf %188, %187 : vector<8x128xf32>
    %190 = arith.divf %188, %189 : vector<8x128xf32>
    %191 = vector.extract_strided_slice %184 {offsets = [0, 128], sizes = [8, 128], strides = [1, 1]} : vector<8x512xf32> to vector<8x128xf32>
    %192 = arith.negf %191 : vector<8x128xf32>
    %193 = math.exp %192 : vector<8x128xf32>
    %cst_37 = arith.constant 1.000000e+00 : f32
    %194 = vector.broadcast %cst_37 : f32 to vector<8x128xf32>
    %195 = arith.addf %194, %193 : vector<8x128xf32>
    %196 = arith.divf %194, %195 : vector<8x128xf32>
    %197 = vector.extract_strided_slice %184 {offsets = [0, 256], sizes = [8, 128], strides = [1, 1]} : vector<8x512xf32> to vector<8x128xf32>
    %198 = math.tanh %197 : vector<8x128xf32>
    %199 = vector.extract_strided_slice %184 {offsets = [0, 384], sizes = [8, 128], strides = [1, 1]} : vector<8x512xf32> to vector<8x128xf32>
    %200 = arith.negf %199 : vector<8x128xf32>
    %201 = math.exp %200 : vector<8x128xf32>
    %cst_38 = arith.constant 1.000000e+00 : f32
    %202 = vector.broadcast %cst_38 : f32 to vector<8x128xf32>
    %203 = arith.addf %202, %201 : vector<8x128xf32>
    %204 = arith.divf %202, %203 : vector<8x128xf32>
    %205 = arith.mulf %196, %150 : vector<8x128xf32>
    %206 = arith.mulf %190, %198 : vector<8x128xf32>
    %207 = arith.addf %205, %206 : vector<8x128xf32>
    %208 = math.tanh %207 : vector<8x128xf32>
    %209 = arith.mulf %204, %208 : vector<8x128xf32>
    %210 = tpu.concatenate %209, %181 in 1 : vector<8x128xf32>, vector<8x128xf32> -> vector<8x256xf32>
    %cst_39 = arith.constant dense<0.000000e+00> : vector<8x512xf32>
    %211 = tpu.matmul %210, %9, %cst_39 {dimension_numbers = #tpu.dot_dimension_numbers<[1], [0], [0], [1], [0, 0, 1, 1], [], []>} : vector<8x256xf32>, vector<256x512xf32>, vector<8x512xf32> -> vector<8x512xf32>
    %212 = vector.broadcast %10 : vector<1x512xf32> to vector<8x512xf32>
    %213 = arith.addf %211, %212 : vector<8x512xf32>
    %214 = vector.extract_strided_slice %213 {offsets = [0, 0], sizes = [8, 128], strides = [1, 1]} : vector<8x512xf32> to vector<8x128xf32>
    %215 = arith.negf %214 : vector<8x128xf32>
    %216 = math.exp %215 : vector<8x128xf32>
    %cst_40 = arith.constant 1.000000e+00 : f32
    %217 = vector.broadcast %cst_40 : f32 to vector<8x128xf32>
    %218 = arith.addf %217, %216 : vector<8x128xf32>
    %219 = arith.divf %217, %218 : vector<8x128xf32>
    %220 = vector.extract_strided_slice %213 {offsets = [0, 128], sizes = [8, 128], strides = [1, 1]} : vector<8x512xf32> to vector<8x128xf32>
    %221 = arith.negf %220 : vector<8x128xf32>
    %222 = math.exp %221 : vector<8x128xf32>
    %cst_41 = arith.constant 1.000000e+00 : f32
    %223 = vector.broadcast %cst_41 : f32 to vector<8x128xf32>
    %224 = arith.addf %223, %222 : vector<8x128xf32>
    %225 = arith.divf %223, %224 : vector<8x128xf32>
    %226 = vector.extract_strided_slice %213 {offsets = [0, 256], sizes = [8, 128], strides = [1, 1]} : vector<8x512xf32> to vector<8x128xf32>
    %227 = math.tanh %226 : vector<8x128xf32>
    %228 = vector.extract_strided_slice %213 {offsets = [0, 384], sizes = [8, 128], strides = [1, 1]} : vector<8x512xf32> to vector<8x128xf32>
    %229 = arith.negf %228 : vector<8x128xf32>
    %230 = math.exp %229 : vector<8x128xf32>
    %cst_42 = arith.constant 1.000000e+00 : f32
    %231 = vector.broadcast %cst_42 : f32 to vector<8x128xf32>
    %232 = arith.addf %231, %230 : vector<8x128xf32>
    %233 = arith.divf %231, %232 : vector<8x128xf32>
    %234 = arith.mulf %225, %179 : vector<8x128xf32>
    %235 = arith.mulf %219, %227 : vector<8x128xf32>
    %236 = arith.addf %234, %235 : vector<8x128xf32>
    %237 = math.tanh %236 : vector<8x128xf32>
    %238 = arith.mulf %233, %237 : vector<8x128xf32>
    %239 = vector.extract_strided_slice %7 {offsets = [32, 0], sizes = [8, 512], strides = [1, 1]} : vector<64x512xf32> to vector<8x512xf32>
    %cst_43 = arith.constant dense<0.000000e+00> : vector<8x512xf32>
    %240 = tpu.matmul %209, %8, %cst_43 {dimension_numbers = #tpu.dot_dimension_numbers<[1], [0], [0], [1], [0, 0, 1, 1], [], []>} : vector<8x128xf32>, vector<128x512xf32>, vector<8x512xf32> -> vector<8x512xf32>
    %241 = arith.addf %239, %240 : vector<8x512xf32>
    %242 = vector.extract_strided_slice %241 {offsets = [0, 0], sizes = [8, 128], strides = [1, 1]} : vector<8x512xf32> to vector<8x128xf32>
    %243 = arith.negf %242 : vector<8x128xf32>
    %244 = math.exp %243 : vector<8x128xf32>
    %cst_44 = arith.constant 1.000000e+00 : f32
    %245 = vector.broadcast %cst_44 : f32 to vector<8x128xf32>
    %246 = arith.addf %245, %244 : vector<8x128xf32>
    %247 = arith.divf %245, %246 : vector<8x128xf32>
    %248 = vector.extract_strided_slice %241 {offsets = [0, 128], sizes = [8, 128], strides = [1, 1]} : vector<8x512xf32> to vector<8x128xf32>
    %249 = arith.negf %248 : vector<8x128xf32>
    %250 = math.exp %249 : vector<8x128xf32>
    %cst_45 = arith.constant 1.000000e+00 : f32
    %251 = vector.broadcast %cst_45 : f32 to vector<8x128xf32>
    %252 = arith.addf %251, %250 : vector<8x128xf32>
    %253 = arith.divf %251, %252 : vector<8x128xf32>
    %254 = vector.extract_strided_slice %241 {offsets = [0, 256], sizes = [8, 128], strides = [1, 1]} : vector<8x512xf32> to vector<8x128xf32>
    %255 = math.tanh %254 : vector<8x128xf32>
    %256 = vector.extract_strided_slice %241 {offsets = [0, 384], sizes = [8, 128], strides = [1, 1]} : vector<8x512xf32> to vector<8x128xf32>
    %257 = arith.negf %256 : vector<8x128xf32>
    %258 = math.exp %257 : vector<8x128xf32>
    %cst_46 = arith.constant 1.000000e+00 : f32
    %259 = vector.broadcast %cst_46 : f32 to vector<8x128xf32>
    %260 = arith.addf %259, %258 : vector<8x128xf32>
    %261 = arith.divf %259, %260 : vector<8x128xf32>
    %262 = arith.mulf %253, %207 : vector<8x128xf32>
    %263 = arith.mulf %247, %255 : vector<8x128xf32>
    %264 = arith.addf %262, %263 : vector<8x128xf32>
    %265 = math.tanh %264 : vector<8x128xf32>
    %266 = arith.mulf %261, %265 : vector<8x128xf32>
    %267 = tpu.concatenate %266, %238 in 1 : vector<8x128xf32>, vector<8x128xf32> -> vector<8x256xf32>
    %cst_47 = arith.constant dense<0.000000e+00> : vector<8x512xf32>
    %268 = tpu.matmul %267, %9, %cst_47 {dimension_numbers = #tpu.dot_dimension_numbers<[1], [0], [0], [1], [0, 0, 1, 1], [], []>} : vector<8x256xf32>, vector<256x512xf32>, vector<8x512xf32> -> vector<8x512xf32>
    %269 = vector.broadcast %10 : vector<1x512xf32> to vector<8x512xf32>
    %270 = arith.addf %268, %269 : vector<8x512xf32>
    %271 = vector.extract_strided_slice %270 {offsets = [0, 0], sizes = [8, 128], strides = [1, 1]} : vector<8x512xf32> to vector<8x128xf32>
    %272 = arith.negf %271 : vector<8x128xf32>
    %273 = math.exp %272 : vector<8x128xf32>
    %cst_48 = arith.constant 1.000000e+00 : f32
    %274 = vector.broadcast %cst_48 : f32 to vector<8x128xf32>
    %275 = arith.addf %274, %273 : vector<8x128xf32>
    %276 = arith.divf %274, %275 : vector<8x128xf32>
    %277 = vector.extract_strided_slice %270 {offsets = [0, 128], sizes = [8, 128], strides = [1, 1]} : vector<8x512xf32> to vector<8x128xf32>
    %278 = arith.negf %277 : vector<8x128xf32>
    %279 = math.exp %278 : vector<8x128xf32>
    %cst_49 = arith.constant 1.000000e+00 : f32
    %280 = vector.broadcast %cst_49 : f32 to vector<8x128xf32>
    %281 = arith.addf %280, %279 : vector<8x128xf32>
    %282 = arith.divf %280, %281 : vector<8x128xf32>
    %283 = vector.extract_strided_slice %270 {offsets = [0, 256], sizes = [8, 128], strides = [1, 1]} : vector<8x512xf32> to vector<8x128xf32>
    %284 = math.tanh %283 : vector<8x128xf32>
    %285 = vector.extract_strided_slice %270 {offsets = [0, 384], sizes = [8, 128], strides = [1, 1]} : vector<8x512xf32> to vector<8x128xf32>
    %286 = arith.negf %285 : vector<8x128xf32>
    %287 = math.exp %286 : vector<8x128xf32>
    %cst_50 = arith.constant 1.000000e+00 : f32
    %288 = vector.broadcast %cst_50 : f32 to vector<8x128xf32>
    %289 = arith.addf %288, %287 : vector<8x128xf32>
    %290 = arith.divf %288, %289 : vector<8x128xf32>
    %291 = arith.mulf %282, %236 : vector<8x128xf32>
    %292 = arith.mulf %276, %284 : vector<8x128xf32>
    %293 = arith.addf %291, %292 : vector<8x128xf32>
    %294 = math.tanh %293 : vector<8x128xf32>
    %295 = arith.mulf %290, %294 : vector<8x128xf32>
    %296 = vector.extract_strided_slice %7 {offsets = [40, 0], sizes = [8, 512], strides = [1, 1]} : vector<64x512xf32> to vector<8x512xf32>
    %cst_51 = arith.constant dense<0.000000e+00> : vector<8x512xf32>
    %297 = tpu.matmul %266, %8, %cst_51 {dimension_numbers = #tpu.dot_dimension_numbers<[1], [0], [0], [1], [0, 0, 1, 1], [], []>} : vector<8x128xf32>, vector<128x512xf32>, vector<8x512xf32> -> vector<8x512xf32>
    %298 = arith.addf %296, %297 : vector<8x512xf32>
    %299 = vector.extract_strided_slice %298 {offsets = [0, 0], sizes = [8, 128], strides = [1, 1]} : vector<8x512xf32> to vector<8x128xf32>
    %300 = arith.negf %299 : vector<8x128xf32>
    %301 = math.exp %300 : vector<8x128xf32>
    %cst_52 = arith.constant 1.000000e+00 : f32
    %302 = vector.broadcast %cst_52 : f32 to vector<8x128xf32>
    %303 = arith.addf %302, %301 : vector<8x128xf32>
    %304 = arith.divf %302, %303 : vector<8x128xf32>
    %305 = vector.extract_strided_slice %298 {offsets = [0, 128], sizes = [8, 128], strides = [1, 1]} : vector<8x512xf32> to vector<8x128xf32>
    %306 = arith.negf %305 : vector<8x128xf32>
    %307 = math.exp %306 : vector<8x128xf32>
    %cst_53 = arith.constant 1.000000e+00 : f32
    %308 = vector.broadcast %cst_53 : f32 to vector<8x128xf32>
    %309 = arith.addf %308, %307 : vector<8x128xf32>
    %310 = arith.divf %308, %309 : vector<8x128xf32>
    %311 = vector.extract_strided_slice %298 {offsets = [0, 256], sizes = [8, 128], strides = [1, 1]} : vector<8x512xf32> to vector<8x128xf32>
    %312 = math.tanh %311 : vector<8x128xf32>
    %313 = vector.extract_strided_slice %298 {offsets = [0, 384], sizes = [8, 128], strides = [1, 1]} : vector<8x512xf32> to vector<8x128xf32>
    %314 = arith.negf %313 : vector<8x128xf32>
    %315 = math.exp %314 : vector<8x128xf32>
    %cst_54 = arith.constant 1.000000e+00 : f32
    %316 = vector.broadcast %cst_54 : f32 to vector<8x128xf32>
    %317 = arith.addf %316, %315 : vector<8x128xf32>
    %318 = arith.divf %316, %317 : vector<8x128xf32>
    %319 = arith.mulf %310, %264 : vector<8x128xf32>
    %320 = arith.mulf %304, %312 : vector<8x128xf32>
    %321 = arith.addf %319, %320 : vector<8x128xf32>
    %322 = math.tanh %321 : vector<8x128xf32>
    %323 = arith.mulf %318, %322 : vector<8x128xf32>
    %324 = tpu.concatenate %323, %295 in 1 : vector<8x128xf32>, vector<8x128xf32> -> vector<8x256xf32>
    %cst_55 = arith.constant dense<0.000000e+00> : vector<8x512xf32>
    %325 = tpu.matmul %324, %9, %cst_55 {dimension_numbers = #tpu.dot_dimension_numbers<[1], [0], [0], [1], [0, 0, 1, 1], [], []>} : vector<8x256xf32>, vector<256x512xf32>, vector<8x512xf32> -> vector<8x512xf32>
    %326 = vector.broadcast %10 : vector<1x512xf32> to vector<8x512xf32>
    %327 = arith.addf %325, %326 : vector<8x512xf32>
    %328 = vector.extract_strided_slice %327 {offsets = [0, 0], sizes = [8, 128], strides = [1, 1]} : vector<8x512xf32> to vector<8x128xf32>
    %329 = arith.negf %328 : vector<8x128xf32>
    %330 = math.exp %329 : vector<8x128xf32>
    %cst_56 = arith.constant 1.000000e+00 : f32
    %331 = vector.broadcast %cst_56 : f32 to vector<8x128xf32>
    %332 = arith.addf %331, %330 : vector<8x128xf32>
    %333 = arith.divf %331, %332 : vector<8x128xf32>
    %334 = vector.extract_strided_slice %327 {offsets = [0, 128], sizes = [8, 128], strides = [1, 1]} : vector<8x512xf32> to vector<8x128xf32>
    %335 = arith.negf %334 : vector<8x128xf32>
    %336 = math.exp %335 : vector<8x128xf32>
    %cst_57 = arith.constant 1.000000e+00 : f32
    %337 = vector.broadcast %cst_57 : f32 to vector<8x128xf32>
    %338 = arith.addf %337, %336 : vector<8x128xf32>
    %339 = arith.divf %337, %338 : vector<8x128xf32>
    %340 = vector.extract_strided_slice %327 {offsets = [0, 256], sizes = [8, 128], strides = [1, 1]} : vector<8x512xf32> to vector<8x128xf32>
    %341 = math.tanh %340 : vector<8x128xf32>
    %342 = vector.extract_strided_slice %327 {offsets = [0, 384], sizes = [8, 128], strides = [1, 1]} : vector<8x512xf32> to vector<8x128xf32>
    %343 = arith.negf %342 : vector<8x128xf32>
    %344 = math.exp %343 : vector<8x128xf32>
    %cst_58 = arith.constant 1.000000e+00 : f32
    %345 = vector.broadcast %cst_58 : f32 to vector<8x128xf32>
    %346 = arith.addf %345, %344 : vector<8x128xf32>
    %347 = arith.divf %345, %346 : vector<8x128xf32>
    %348 = arith.mulf %339, %293 : vector<8x128xf32>
    %349 = arith.mulf %333, %341 : vector<8x128xf32>
    %350 = arith.addf %348, %349 : vector<8x128xf32>
    %351 = math.tanh %350 : vector<8x128xf32>
    %352 = arith.mulf %347, %351 : vector<8x128xf32>
    %353 = vector.extract_strided_slice %7 {offsets = [48, 0], sizes = [8, 512], strides = [1, 1]} : vector<64x512xf32> to vector<8x512xf32>
    %cst_59 = arith.constant dense<0.000000e+00> : vector<8x512xf32>
    %354 = tpu.matmul %323, %8, %cst_59 {dimension_numbers = #tpu.dot_dimension_numbers<[1], [0], [0], [1], [0, 0, 1, 1], [], []>} : vector<8x128xf32>, vector<128x512xf32>, vector<8x512xf32> -> vector<8x512xf32>
    %355 = arith.addf %353, %354 : vector<8x512xf32>
    %356 = vector.extract_strided_slice %355 {offsets = [0, 0], sizes = [8, 128], strides = [1, 1]} : vector<8x512xf32> to vector<8x128xf32>
    %357 = arith.negf %356 : vector<8x128xf32>
    %358 = math.exp %357 : vector<8x128xf32>
    %cst_60 = arith.constant 1.000000e+00 : f32
    %359 = vector.broadcast %cst_60 : f32 to vector<8x128xf32>
    %360 = arith.addf %359, %358 : vector<8x128xf32>
    %361 = arith.divf %359, %360 : vector<8x128xf32>
    %362 = vector.extract_strided_slice %355 {offsets = [0, 128], sizes = [8, 128], strides = [1, 1]} : vector<8x512xf32> to vector<8x128xf32>
    %363 = arith.negf %362 : vector<8x128xf32>
    %364 = math.exp %363 : vector<8x128xf32>
    %cst_61 = arith.constant 1.000000e+00 : f32
    %365 = vector.broadcast %cst_61 : f32 to vector<8x128xf32>
    %366 = arith.addf %365, %364 : vector<8x128xf32>
    %367 = arith.divf %365, %366 : vector<8x128xf32>
    %368 = vector.extract_strided_slice %355 {offsets = [0, 256], sizes = [8, 128], strides = [1, 1]} : vector<8x512xf32> to vector<8x128xf32>
    %369 = math.tanh %368 : vector<8x128xf32>
    %370 = vector.extract_strided_slice %355 {offsets = [0, 384], sizes = [8, 128], strides = [1, 1]} : vector<8x512xf32> to vector<8x128xf32>
    %371 = arith.negf %370 : vector<8x128xf32>
    %372 = math.exp %371 : vector<8x128xf32>
    %cst_62 = arith.constant 1.000000e+00 : f32
    %373 = vector.broadcast %cst_62 : f32 to vector<8x128xf32>
    %374 = arith.addf %373, %372 : vector<8x128xf32>
    %375 = arith.divf %373, %374 : vector<8x128xf32>
    %376 = arith.mulf %367, %321 : vector<8x128xf32>
    %377 = arith.mulf %361, %369 : vector<8x128xf32>
    %378 = arith.addf %376, %377 : vector<8x128xf32>
    %379 = math.tanh %378 : vector<8x128xf32>
    %380 = arith.mulf %375, %379 : vector<8x128xf32>
    %381 = tpu.concatenate %380, %352 in 1 : vector<8x128xf32>, vector<8x128xf32> -> vector<8x256xf32>
    %cst_63 = arith.constant dense<0.000000e+00> : vector<8x512xf32>
    %382 = tpu.matmul %381, %9, %cst_63 {dimension_numbers = #tpu.dot_dimension_numbers<[1], [0], [0], [1], [0, 0, 1, 1], [], []>} : vector<8x256xf32>, vector<256x512xf32>, vector<8x512xf32> -> vector<8x512xf32>
    %383 = vector.broadcast %10 : vector<1x512xf32> to vector<8x512xf32>
    %384 = arith.addf %382, %383 : vector<8x512xf32>
    %385 = vector.extract_strided_slice %384 {offsets = [0, 0], sizes = [8, 128], strides = [1, 1]} : vector<8x512xf32> to vector<8x128xf32>
    %386 = arith.negf %385 : vector<8x128xf32>
    %387 = math.exp %386 : vector<8x128xf32>
    %cst_64 = arith.constant 1.000000e+00 : f32
    %388 = vector.broadcast %cst_64 : f32 to vector<8x128xf32>
    %389 = arith.addf %388, %387 : vector<8x128xf32>
    %390 = arith.divf %388, %389 : vector<8x128xf32>
    %391 = vector.extract_strided_slice %384 {offsets = [0, 128], sizes = [8, 128], strides = [1, 1]} : vector<8x512xf32> to vector<8x128xf32>
    %392 = arith.negf %391 : vector<8x128xf32>
    %393 = math.exp %392 : vector<8x128xf32>
    %cst_65 = arith.constant 1.000000e+00 : f32
    %394 = vector.broadcast %cst_65 : f32 to vector<8x128xf32>
    %395 = arith.addf %394, %393 : vector<8x128xf32>
    %396 = arith.divf %394, %395 : vector<8x128xf32>
    %397 = vector.extract_strided_slice %384 {offsets = [0, 256], sizes = [8, 128], strides = [1, 1]} : vector<8x512xf32> to vector<8x128xf32>
    %398 = math.tanh %397 : vector<8x128xf32>
    %399 = vector.extract_strided_slice %384 {offsets = [0, 384], sizes = [8, 128], strides = [1, 1]} : vector<8x512xf32> to vector<8x128xf32>
    %400 = arith.negf %399 : vector<8x128xf32>
    %401 = math.exp %400 : vector<8x128xf32>
    %cst_66 = arith.constant 1.000000e+00 : f32
    %402 = vector.broadcast %cst_66 : f32 to vector<8x128xf32>
    %403 = arith.addf %402, %401 : vector<8x128xf32>
    %404 = arith.divf %402, %403 : vector<8x128xf32>
    %405 = arith.mulf %396, %350 : vector<8x128xf32>
    %406 = arith.mulf %390, %398 : vector<8x128xf32>
    %407 = arith.addf %405, %406 : vector<8x128xf32>
    %408 = math.tanh %407 : vector<8x128xf32>
    %409 = arith.mulf %404, %408 : vector<8x128xf32>
    %410 = vector.extract_strided_slice %7 {offsets = [56, 0], sizes = [8, 512], strides = [1, 1]} : vector<64x512xf32> to vector<8x512xf32>
    %cst_67 = arith.constant dense<0.000000e+00> : vector<8x512xf32>
    %411 = tpu.matmul %380, %8, %cst_67 {dimension_numbers = #tpu.dot_dimension_numbers<[1], [0], [0], [1], [0, 0, 1, 1], [], []>} : vector<8x128xf32>, vector<128x512xf32>, vector<8x512xf32> -> vector<8x512xf32>
    %412 = arith.addf %410, %411 : vector<8x512xf32>
    %413 = vector.extract_strided_slice %412 {offsets = [0, 0], sizes = [8, 128], strides = [1, 1]} : vector<8x512xf32> to vector<8x128xf32>
    %414 = arith.negf %413 : vector<8x128xf32>
    %415 = math.exp %414 : vector<8x128xf32>
    %cst_68 = arith.constant 1.000000e+00 : f32
    %416 = vector.broadcast %cst_68 : f32 to vector<8x128xf32>
    %417 = arith.addf %416, %415 : vector<8x128xf32>
    %418 = arith.divf %416, %417 : vector<8x128xf32>
    %419 = vector.extract_strided_slice %412 {offsets = [0, 128], sizes = [8, 128], strides = [1, 1]} : vector<8x512xf32> to vector<8x128xf32>
    %420 = arith.negf %419 : vector<8x128xf32>
    %421 = math.exp %420 : vector<8x128xf32>
    %cst_69 = arith.constant 1.000000e+00 : f32
    %422 = vector.broadcast %cst_69 : f32 to vector<8x128xf32>
    %423 = arith.addf %422, %421 : vector<8x128xf32>
    %424 = arith.divf %422, %423 : vector<8x128xf32>
    %425 = vector.extract_strided_slice %412 {offsets = [0, 256], sizes = [8, 128], strides = [1, 1]} : vector<8x512xf32> to vector<8x128xf32>
    %426 = math.tanh %425 : vector<8x128xf32>
    %427 = vector.extract_strided_slice %412 {offsets = [0, 384], sizes = [8, 128], strides = [1, 1]} : vector<8x512xf32> to vector<8x128xf32>
    %428 = arith.negf %427 : vector<8x128xf32>
    %429 = math.exp %428 : vector<8x128xf32>
    %cst_70 = arith.constant 1.000000e+00 : f32
    %430 = vector.broadcast %cst_70 : f32 to vector<8x128xf32>
    %431 = arith.addf %430, %429 : vector<8x128xf32>
    %432 = arith.divf %430, %431 : vector<8x128xf32>
    %433 = arith.mulf %424, %378 : vector<8x128xf32>
    %434 = arith.mulf %418, %426 : vector<8x128xf32>
    %435 = arith.addf %433, %434 : vector<8x128xf32>
    %436 = math.tanh %435 : vector<8x128xf32>
    %437 = arith.mulf %432, %436 : vector<8x128xf32>
    %438 = tpu.concatenate %437, %409 in 1 : vector<8x128xf32>, vector<8x128xf32> -> vector<8x256xf32>
    %cst_71 = arith.constant dense<0.000000e+00> : vector<8x512xf32>
    %439 = tpu.matmul %438, %9, %cst_71 {dimension_numbers = #tpu.dot_dimension_numbers<[1], [0], [0], [1], [0, 0, 1, 1], [], []>} : vector<8x256xf32>, vector<256x512xf32>, vector<8x512xf32> -> vector<8x512xf32>
    %440 = vector.broadcast %10 : vector<1x512xf32> to vector<8x512xf32>
    %441 = arith.addf %439, %440 : vector<8x512xf32>
    %442 = vector.extract_strided_slice %441 {offsets = [0, 0], sizes = [8, 128], strides = [1, 1]} : vector<8x512xf32> to vector<8x128xf32>
    %443 = arith.negf %442 : vector<8x128xf32>
    %444 = math.exp %443 : vector<8x128xf32>
    %cst_72 = arith.constant 1.000000e+00 : f32
    %445 = vector.broadcast %cst_72 : f32 to vector<8x128xf32>
    %446 = arith.addf %445, %444 : vector<8x128xf32>
    %447 = arith.divf %445, %446 : vector<8x128xf32>
    %448 = vector.extract_strided_slice %441 {offsets = [0, 128], sizes = [8, 128], strides = [1, 1]} : vector<8x512xf32> to vector<8x128xf32>
    %449 = arith.negf %448 : vector<8x128xf32>
    %450 = math.exp %449 : vector<8x128xf32>
    %cst_73 = arith.constant 1.000000e+00 : f32
    %451 = vector.broadcast %cst_73 : f32 to vector<8x128xf32>
    %452 = arith.addf %451, %450 : vector<8x128xf32>
    %453 = arith.divf %451, %452 : vector<8x128xf32>
    %454 = vector.extract_strided_slice %441 {offsets = [0, 256], sizes = [8, 128], strides = [1, 1]} : vector<8x512xf32> to vector<8x128xf32>
    %455 = math.tanh %454 : vector<8x128xf32>
    %456 = vector.extract_strided_slice %441 {offsets = [0, 384], sizes = [8, 128], strides = [1, 1]} : vector<8x512xf32> to vector<8x128xf32>
    %457 = arith.negf %456 : vector<8x128xf32>
    %458 = math.exp %457 : vector<8x128xf32>
    %cst_74 = arith.constant 1.000000e+00 : f32
    %459 = vector.broadcast %cst_74 : f32 to vector<8x128xf32>
    %460 = arith.addf %459, %458 : vector<8x128xf32>
    %461 = arith.divf %459, %460 : vector<8x128xf32>
    %462 = arith.mulf %453, %407 : vector<8x128xf32>
    %463 = arith.mulf %447, %455 : vector<8x128xf32>
    %464 = arith.addf %462, %463 : vector<8x128xf32>
    %465 = math.tanh %464 : vector<8x128xf32>
    %466 = arith.mulf %461, %465 : vector<8x128xf32>
    %c0_75 = arith.constant 0 : index
    %c0_76 = arith.constant 0 : index
    %467 = vector.load %arg1[%c0_75, %c0_76] : memref<8x3xf32, #tpu.memory_space<vmem>>, vector<8x3xf32>
    %c0_77 = arith.constant 0 : index
    %c0_78 = arith.constant 0 : index
    %468 = vector.load %arg7[%c0_77, %c0_78] : memref<3x32xf32, #tpu.memory_space<vmem>>, vector<3x32xf32>
    %cst_79 = arith.constant dense<0.000000e+00> : vector<8x32xf32>
    %469 = tpu.matmul %467, %468, %cst_79 {dimension_numbers = #tpu.dot_dimension_numbers<[1], [0], [0], [1], [0, 0, 1, 1], [], []>} : vector<8x3xf32>, vector<3x32xf32>, vector<8x32xf32> -> vector<8x32xf32>
    %c0_80 = arith.constant 0 : index
    %c0_81 = arith.constant 0 : index
    %470 = vector.load %arg8[%c0_80, %c0_81] : memref<1x32xf32, #tpu.memory_space<vmem>>, vector<1x32xf32>
    %471 = vector.broadcast %470 : vector<1x32xf32> to vector<8x32xf32>
    %472 = arith.addf %469, %471 : vector<8x32xf32>
    %cst_82 = arith.constant 0.000000e+00 : f32
    %473 = vector.broadcast %cst_82 : f32 to vector<8x32xf32>
    %474 = arith.maximumf %472, %473 : vector<8x32xf32>
    %c0_83 = arith.constant 0 : index
    %c0_84 = arith.constant 0 : index
    %475 = vector.load %arg9[%c0_83, %c0_84] : memref<128x32xf32, #tpu.memory_space<vmem>>, vector<128x32xf32>
    %cst_85 = arith.constant dense<0.000000e+00> : vector<8x32xf32>
    %476 = tpu.matmul %466, %475, %cst_85 {dimension_numbers = #tpu.dot_dimension_numbers<[1], [0], [0], [1], [0, 0, 1, 1], [], []>} : vector<8x128xf32>, vector<128x32xf32>, vector<8x32xf32> -> vector<8x32xf32>
    %c0_86 = arith.constant 0 : index
    %c0_87 = arith.constant 0 : index
    %477 = vector.load %arg10[%c0_86, %c0_87] : memref<32x32xf32, #tpu.memory_space<vmem>>, vector<32x32xf32>
    %cst_88 = arith.constant dense<0.000000e+00> : vector<8x32xf32>
    %478 = tpu.matmul %474, %477, %cst_88 {dimension_numbers = #tpu.dot_dimension_numbers<[1], [0], [0], [1], [0, 0, 1, 1], [], []>} : vector<8x32xf32>, vector<32x32xf32>, vector<8x32xf32> -> vector<8x32xf32>
    %479 = arith.addf %476, %478 : vector<8x32xf32>
    %c0_89 = arith.constant 0 : index
    %c0_90 = arith.constant 0 : index
    %480 = vector.load %arg11[%c0_89, %c0_90] : memref<1x32xf32, #tpu.memory_space<vmem>>, vector<1x32xf32>
    %481 = vector.broadcast %480 : vector<1x32xf32> to vector<8x32xf32>
    %482 = arith.addf %479, %481 : vector<8x32xf32>
    %cst_91 = arith.constant 0.000000e+00 : f32
    %483 = vector.broadcast %cst_91 : f32 to vector<8x32xf32>
    %484 = arith.maximumf %482, %483 : vector<8x32xf32>
    %c0_92 = arith.constant 0 : index
    %c0_93 = arith.constant 0 : index
    %485 = vector.load %arg12[%c0_92, %c0_93] : memref<32x1xf32, #tpu.memory_space<vmem>>, vector<32x1xf32>
    %cst_94 = arith.constant dense<0.000000e+00> : vector<8x1xf32>
    %486 = tpu.matmul %484, %485, %cst_94 {dimension_numbers = #tpu.dot_dimension_numbers<[1], [0], [0], [1], [0, 0, 1, 1], [], []>} : vector<8x32xf32>, vector<32x1xf32>, vector<8x1xf32> -> vector<8x1xf32>
    %c0_95 = arith.constant 0 : index
    %c0_96 = arith.constant 0 : index
    %487 = vector.load %arg13[%c0_95, %c0_96] : memref<1x1xf32, #tpu.memory_space<vmem>>, vector<1x1xf32>
    %488 = vector.broadcast %487 : vector<1x1xf32> to vector<8x1xf32>
    %489 = arith.addf %486, %488 : vector<8x1xf32>
    %490 = arith.negf %489 : vector<8x1xf32>
    %491 = math.exp %490 : vector<8x1xf32>
    %cst_97 = arith.constant 1.000000e+00 : f32
    %492 = vector.broadcast %cst_97 : f32 to vector<8x1xf32>
    %493 = arith.addf %492, %491 : vector<8x1xf32>
    %494 = arith.divf %492, %493 : vector<8x1xf32>
    %c0_98 = arith.constant 0 : index
    %c0_99 = arith.constant 0 : index
    %495 = vector.load %arg14[%c0_98, %c0_99] : memref<8x1xf32, #tpu.memory_space<vmem>>, vector<8x1xf32>
    tpu.vector_store %arg14[%c0_98, %c0_99], %494 {strides = array<i32>} : memref<8x1xf32, #tpu.memory_space<vmem>>, vector<8x1xf32>,
    return
  }
}

</mosaic_0001>

<llo_original>
// kernel: tpu_custom_call.1
$region0: #{tpu_custom_call.1}
  #allocation0 [shape = 'u32[]', space=smem, size = 0x4, offset = 0x4, fixed_abs, tag = 'smem constant byte address 0x4 - core index']
  #allocation1 [shape = 'u32[144,128]{1,0:T(1,128)}', space=vmem, size = 0x12000, scoped, tag = 'internal scratch']
  #allocation2 [shape = 'f32[1,1]{1,0:T(1,128)S(1)}', space=vmem, size = 0x200, scoped, tag = 'scoped memory for tpu_custom_call.1']
  %s0 = inlined_call_operand.vmem [shape: f32[64,1], index: 0, kind: input, shape index: {}]
  %s1 = inlined_call_operand.vmem [shape: f32[8,3], index: 1, kind: input, shape index: {}]
  %s2 = inlined_call_operand.vmem [shape: f32[1,512], index: 2, kind: input, shape index: {}]
  %s3 = inlined_call_operand.vmem [shape: f32[1,512], index: 3, kind: input, shape index: {}]
  %s4 = inlined_call_operand.hbm [shape: f32[128,512], index: 4, kind: input, shape index: {}]
  %s5 = inlined_call_operand.hbm [shape: f32[256,512], index: 5, kind: input, shape index: {}]
  %s6 = inlined_call_operand.vmem [shape: f32[1,512], index: 6, kind: input, shape index: {}]
  %s7 = inlined_call_operand.vmem [shape: f32[3,32], index: 7, kind: input, shape index: {}]
  %s8 = inlined_call_operand.vmem [shape: f32[1,32], index: 8, kind: input, shape index: {}]
  %s9 = inlined_call_operand.vmem [shape: f32[128,32], index: 9, kind: input, shape index: {}]
  %s10 = inlined_call_operand.vmem [shape: f32[32,32], index: 10, kind: input, shape index: {}]
  %s11 = inlined_call_operand.vmem [shape: f32[1,32], index: 11, kind: input, shape index: {}]
  %s12 = inlined_call_operand.vmem [shape: f32[32,1], index: 12, kind: input, shape index: {}]
  %s13 = inlined_call_operand.<no memory space> [shape: f32[1,1], index: 13, kind: input, shape index: {}]
  %s14 = inlined_call_operand.vmem [shape: f32[8,1], index: 14, kind: output, shape index: {}]
  %s15 = sld [smem:[#allocation0]]
  $region74: #{tpu_custom_call.1} parent=0
    _
  %s17 = ssub.s32 1, %s15
  %s18 = scalar_select 0, %s17, %s15
  %v19 = vstv %s13
  %20 = vst [vmem:[#allocation2] sm:$0x1] %v19
  $region1: #{tpu_custom_call.1} parent=0
    #allocation3 [shape = 'u8[262144]{0}', space=vmem, size = 0x40000, scoped, tag = 'input window, operand 4, single buffered']
    #allocation4 [shape = 's32[1]{0}', space=sflag, size = 0x4, scoped, tag = 'scoped memory for tpu_custom_call.1']
    #allocation5 [shape = 'u8[524288]{0}', space=vmem, size = 0x80000, scoped, tag = 'input window, operand 5, single buffered']
    #allocation6 [shape = 's32[1]{0}', space=sflag, size = 0x4, scoped, tag = 'scoped memory for tpu_custom_call.1']
    %21 = vsyncpa [#allocation4], 0
    %22 = vsyncpa [#allocation6], 0
    // Predicated region
    $region2: #{tpu_custom_call.1} parent=1 // pred_check
      _
    $region3: #{tpu_custom_call.1} parent=1 // pred_check_branch
      %24 = sbr.rel (0) target = $region5
    $region4: #{tpu_custom_call.1} parent=1 // pred_region
      _
    $region5: #{tpu_custom_call.1} parent=1 // pred_fallthru
      _
    // Predicated region
    $region6: #{tpu_custom_call.1} parent=1 // pred_check
      _
    $region7: #{tpu_custom_call.1} parent=1 // pred_check_branch
      %26 = sbr.rel (0) target = $region9
    $region8: #{tpu_custom_call.1} parent=1 // pred_region
      _
    $region9: #{tpu_custom_call.1} parent=1 // pred_fallthru
      _
    // Predicated region
    $region10: #{tpu_custom_call.1} parent=1 // pred_check
      _
    $region11: #{tpu_custom_call.1} parent=1 // pred_check_branch
      %28 = sbr.rel (0) target = $region13
    $region12: #{tpu_custom_call.1} parent=1 // pred_region
      _
    $region13: #{tpu_custom_call.1} parent=1 // pred_fallthru
      _
    // Predicated region
    $region14: #{tpu_custom_call.1} parent=1 // pred_check
      _
    $region15: #{tpu_custom_call.1} parent=1 // pred_check_branch
      %30 = sbr.rel (0) target = $region17
    $region16: #{tpu_custom_call.1} parent=1 // pred_region
      _
    $region17: #{tpu_custom_call.1} parent=1 // pred_fallthru
      _
    // Predicated region
    $region18: #{tpu_custom_call.1} parent=1 // pred_check
      _
    $region19: #{tpu_custom_call.1} parent=1 // pred_check_branch
      %32 = sbr.rel (0) target = $region21
    $region20: #{tpu_custom_call.1} parent=1 // pred_region
      %s34 = ssub.s32 8192, 8192
      %35 = vsyncadd [#allocation4], %s34
      %s36 = sshll.u32 [#allocation3], 4
      %s37 = int_to_ptr.vmem [resolvable:$true] %s36
      %42 = dma.hbm_to_vmem [thread:$0]  %s4, 8192, %s37, [#allocation4], 512, 512, 32
    $region21: #{tpu_custom_call.1} parent=1 // pred_fallthru
      _
    // Predicated region
    $region22: #{tpu_custom_call.1} parent=1 // pred_check
      _
    $region23: #{tpu_custom_call.1} parent=1 // pred_check_branch
      %44 = sbr.rel (0) target = $region25
    $region24: #{tpu_custom_call.1} parent=1 // pred_region
      %s46 = ssub.s32 16384, 16384
      %47 = vsyncadd [#allocation6], %s46
      %s48 = sshll.u32 [#allocation5], 4
      %s49 = int_to_ptr.vmem [resolvable:$true] %s48
      %54 = dma.hbm_to_vmem [thread:$0]  %s5, 16384, %s49, [#allocation6], 512, 512, 32
    $region25: #{tpu_custom_call.1} parent=1 // pred_fallthru
      _
    // Predicated region
    $region26: #{tpu_custom_call.1} parent=1 // pred_check
      _
    $region27: #{tpu_custom_call.1} parent=1 // pred_check_branch
      %56 = sbr.rel (0) target = $region29
    $region28: #{tpu_custom_call.1} parent=1 // pred_region
      _
    $region29: #{tpu_custom_call.1} parent=1 // pred_fallthru
      _
    // Predicated region
    $region30: #{tpu_custom_call.1} parent=1 // pred_check
      _
    $region31: #{tpu_custom_call.1} parent=1 // pred_check_branch
      %58 = sbr.rel (0) target = $region33
    $region32: #{tpu_custom_call.1} parent=1 // pred_region
      _
    $region33: #{tpu_custom_call.1} parent=1 // pred_fallthru
      _
    // Predicated region
    $region34: #{tpu_custom_call.1} parent=1 // pred_check
      _
    $region35: #{tpu_custom_call.1} parent=1 // pred_check_branch
      %60 = sbr.rel (0) target = $region37
    $region36: #{tpu_custom_call.1} parent=1 // pred_region
      _
    $region37: #{tpu_custom_call.1} parent=1 // pred_fallthru
      _
    // Predicated region
    $region38: #{tpu_custom_call.1} parent=1 // pred_check
      _
    $region39: #{tpu_custom_call.1} parent=1 // pred_check_branch
      %62 = sbr.rel (0) target = $region41
    $region40: #{tpu_custom_call.1} parent=1 // pred_region
      _
    $region41: #{tpu_custom_call.1} parent=1 // pred_fallthru
      _
    // Predicated region
    $region42: #{tpu_custom_call.1} parent=1 // pred_check
      _
    $region43: #{tpu_custom_call.1} parent=1 // pred_check_branch
      %64 = sbr.rel (0) target = $region45
    $region44: #{tpu_custom_call.1} parent=1 // pred_region
      _
    $region45: #{tpu_custom_call.1} parent=1 // pred_fallthru
      _
    // Predicated region
    $region46: #{tpu_custom_call.1} parent=1 // pred_check
      _
    $region47: #{tpu_custom_call.1} parent=1 // pred_check_branch
      %66 = sbr.rel (0) target = $region49
    $region48: #{tpu_custom_call.1} parent=1 // pred_region
      _
    $region49: #{tpu_custom_call.1} parent=1 // pred_fallthru
      _
    // Predicated region
    $region50: #{tpu_custom_call.1} parent=1 // pred_check
      _
    $region51: #{tpu_custom_call.1} parent=1 // pred_check_branch
      %68 = sbr.rel (0) target = $region53
    $region52: #{tpu_custom_call.1} parent=1 // pred_region
      _
    $region53: #{tpu_custom_call.1} parent=1 // pred_fallthru
      _
    // Predicated region
    $region54: #{tpu_custom_call.1} parent=1 // pred_check
      _
    $region55: #{tpu_custom_call.1} parent=1 // pred_check_branch
      %70 = sbr.rel (0) target = $region57
    $region56: #{tpu_custom_call.1} parent=1 // pred_region
      _
    $region57: #{tpu_custom_call.1} parent=1 // pred_fallthru
      _
    // Predicated region
    $region58: #{tpu_custom_call.1} parent=1 // pred_check
      _
    $region59: #{tpu_custom_call.1} parent=1 // pred_check_branch
      %72 = sbr.rel (0) target = $region61
    $region60: #{tpu_custom_call.1} parent=1 // pred_region
      %73 = dma.done [#allocation4], 8192
    $region61: #{tpu_custom_call.1} parent=1 // pred_fallthru
      _
    // Predicated region
    $region62: #{tpu_custom_call.1} parent=1 // pred_check
      _
    $region63: #{tpu_custom_call.1} parent=1 // pred_check_branch
      %75 = sbr.rel (0) target = $region65
    $region64: #{tpu_custom_call.1} parent=1 // pred_region
      %76 = dma.done [#allocation6], 16384
    $region65: #{tpu_custom_call.1} parent=1 // pred_fallthru
      _
    %v77 = vld [vmem:[%s0] sm:$0xff]
    %v78 = vld [vmem:[%s0 + $0x8] sm:$0xff]
    %v79 = vld [vmem:[%s0 + $0x10] sm:$0xff]
    %v80 = vld [vmem:[%s0 + $0x18] sm:$0xff]
    %v81 = vld [vmem:[%s0 + $0x20] sm:$0xff]
    %v82 = vld [vmem:[%s0 + $0x28] sm:$0xff]
    %v83 = vld [vmem:[%s0 + $0x30] sm:$0xff]
    %v84 = vld [vmem:[%s0 + $0x38] sm:$0xff]
    %v85 = vld [vmem:[%s2] sm:$0xf]
    %87 = vset.pattern.permute.xlu0 0
    %88 = vperm.xlu0 %87, %v77
    %v89 = vpop.permute.xlu0 %88
    %92 = vset.pattern.permute.xlu0 0
    %93 = vperm.xlu0 %92, %v78
    %v94 = vpop.permute.xlu0 %93
    %97 = vset.pattern.permute.xlu0 0
    %98 = vperm.xlu0 %97, %v79
    %v99 = vpop.permute.xlu0 %98
    %102 = vset.pattern.permute.xlu0 0
    %103 = vperm.xlu0 %102, %v80
    %v104 = vpop.permute.xlu0 %103
    %107 = vset.pattern.permute.xlu0 0
    %108 = vperm.xlu0 %107, %v81
    %v109 = vpop.permute.xlu0 %108
    %112 = vset.pattern.permute.xlu0 0
    %113 = vperm.xlu0 %112, %v82
    %v114 = vpop.permute.xlu0 %113
    %117 = vset.pattern.permute.xlu0 0
    %118 = vperm.xlu0 %117, %v83
    %v119 = vpop.permute.xlu0 %118
    %122 = vset.pattern.permute.xlu0 0
    %123 = vperm.xlu0 %122, %v84
    %v124 = vpop.permute.xlu0 %123
    %v127 = vlaneseq
    %v128 = vshrl.u32 %v127, 7
    %v129 = vsub.s32 0, %v128
    %v130 = vrot.slane %v85, %v129
    %v131 = vlaneseq
    %v132 = vshrl.u32 %v131, 7
    %v133 = vsub.s32 1, %v132
    %v134 = vrot.slane %v85, %v133
    %v135 = vlaneseq
    %v136 = vshrl.u32 %v135, 7
    %v137 = vsub.s32 2, %v136
    %v138 = vrot.slane %v85, %v137
    %v139 = vlaneseq
    %v140 = vshrl.u32 %v139, 7
    %v141 = vsub.s32 3, %v140
    %v142 = vrot.slane %v85, %v141
    %v147 = vmul.f32 %v89, %v130
    %v148 = vmul.f32 %v89, %v134
    %v149 = vmul.f32 %v89, %v138
    %v150 = vmul.f32 %v89, %v142
    %v151 = vmul.f32 %v94, %v130
    %v152 = vmul.f32 %v94, %v134
    %v153 = vmul.f32 %v94, %v138
    %v154 = vmul.f32 %v94, %v142
    %v155 = vmul.f32 %v99, %v130
    %v156 = vmul.f32 %v99, %v134
    %v157 = vmul.f32 %v99, %v138
    %v158 = vmul.f32 %v99, %v142
    %v159 = vmul.f32 %v104, %v130
    %v160 = vmul.f32 %v104, %v134
    %v161 = vmul.f32 %v104, %v138
    %v162 = vmul.f32 %v104, %v142
    %v163 = vmul.f32 %v109, %v130
    %v164 = vmul.f32 %v109, %v134
    %v165 = vmul.f32 %v109, %v138
    %v166 = vmul.f32 %v109, %v142
    %v167 = vmul.f32 %v114, %v130
    %v168 = vmul.f32 %v114, %v134
    %v169 = vmul.f32 %v114, %v138
    %v170 = vmul.f32 %v114, %v142
    %v171 = vmul.f32 %v119, %v130
    %v172 = vmul.f32 %v119, %v134
    %v173 = vmul.f32 %v119, %v138
    %v174 = vmul.f32 %v119, %v142
    %v175 = vmul.f32 %v124, %v130
    %v176 = vmul.f32 %v124, %v134
    %v177 = vmul.f32 %v124, %v138
    %v178 = vmul.f32 %v124, %v142
    %v179 = vld [vmem:[%s3] sm:$0xf]
    %v181 = vlaneseq
    %v182 = vshrl.u32 %v181, 7
    %v183 = vsub.s32 0, %v182
    %v184 = vrot.slane %v179, %v183
    %v185 = vlaneseq
    %v186 = vshrl.u32 %v185, 7
    %v187 = vsub.s32 1, %v186
    %v188 = vrot.slane %v179, %v187
    %v189 = vlaneseq
    %v190 = vshrl.u32 %v189, 7
    %v191 = vsub.s32 2, %v190
    %v192 = vrot.slane %v179, %v191
    %v193 = vlaneseq
    %v194 = vshrl.u32 %v193, 7
    %v195 = vsub.s32 3, %v194
    %v196 = vrot.slane %v179, %v195
    %v201 = vadd.f32 %v147, %v184
    %v202 = vadd.f32 %v148, %v188
    %v203 = vadd.f32 %v149, %v192
    %v204 = vadd.f32 %v150, %v196
    %v205 = vadd.f32 %v151, %v184
    %v206 = vadd.f32 %v152, %v188
    %v207 = vadd.f32 %v153, %v192
    %v208 = vadd.f32 %v154, %v196
    %v209 = vadd.f32 %v155, %v184
    %v210 = vadd.f32 %v156, %v188
    %v211 = vadd.f32 %v157, %v192
    %v212 = vadd.f32 %v158, %v196
    %v213 = vadd.f32 %v159, %v184
    %v214 = vadd.f32 %v160, %v188
    %v215 = vadd.f32 %v161, %v192
    %v216 = vadd.f32 %v162, %v196
    %v217 = vadd.f32 %v163, %v184
    %v218 = vadd.f32 %v164, %v188
    %v219 = vadd.f32 %v165, %v192
    %v220 = vadd.f32 %v166, %v196
    %v221 = vadd.f32 %v167, %v184
    %v222 = vadd.f32 %v168, %v188
    %v223 = vadd.f32 %v169, %v192
    %v224 = vadd.f32 %v170, %v196
    %v225 = vadd.f32 %v171, %v184
    %v226 = vadd.f32 %v172, %v188
    %v227 = vadd.f32 %v173, %v192
    %v228 = vadd.f32 %v174, %v196
    %v229 = vadd.f32 %v175, %v184
    %v230 = vadd.f32 %v176, %v188
    %v231 = vadd.f32 %v177, %v192
    %v232 = vadd.f32 %v178, %v196
    %v233 = vld [vmem:[#allocation3] sm:$0xff]
    %v234 = vld [vmem:[#allocation3 + $0x8] sm:$0xff]
    %v235 = vld [vmem:[#allocation3 + $0x10] sm:$0xff]
    %v236 = vld [vmem:[#allocation3 + $0x18] sm:$0xff]
    %v237 = vld [vmem:[#allocation3 + $0x20] sm:$0xff]
    %v238 = vld [vmem:[#allocation3 + $0x28] sm:$0xff]
    %v239 = vld [vmem:[#allocation3 + $0x30] sm:$0xff]
    %v240 = vld [vmem:[#allocation3 + $0x38] sm:$0xff]
    %v241 = vld [vmem:[#allocation3 + $0x40] sm:$0xff]
    %v242 = vld [vmem:[#allocation3 + $0x48] sm:$0xff]
    %v243 = vld [vmem:[#allocation3 + $0x50] sm:$0xff]
    %v244 = vld [vmem:[#allocation3 + $0x58] sm:$0xff]
    %v245 = vld [vmem:[#allocation3 + $0x60] sm:$0xff]
    %v246 = vld [vmem:[#allocation3 + $0x68] sm:$0xff]
    %v247 = vld [vmem:[#allocation3 + $0x70] sm:$0xff]
    %v248 = vld [vmem:[#allocation3 + $0x78] sm:$0xff]
    %v249 = vld [vmem:[#allocation3 + $0x80] sm:$0xff]
    %v250 = vld [vmem:[#allocation3 + $0x88] sm:$0xff]
    %v251 = vld [vmem:[#allocation3 + $0x90] sm:$0xff]
    %v252 = vld [vmem:[#allocation3 + $0x98] sm:$0xff]
    %v253 = vld [vmem:[#allocation3 + $0xa0] sm:$0xff]
    %v254 = vld [vmem:[#allocation3 + $0xa8] sm:$0xff]
    %v255 = vld [vmem:[#allocation3 + $0xb0] sm:$0xff]
    %v256 = vld [vmem:[#allocation3 + $0xb8] sm:$0xff]
    %v257 = vld [vmem:[#allocation3 + $0xc0] sm:$0xff]
    %v258 = vld [vmem:[#allocation3 + $0xc8] sm:$0xff]
    %v259 = vld [vmem:[#allocation3 + $0xd0] sm:$0xff]
    %v260 = vld [vmem:[#allocation3 + $0xd8] sm:$0xff]
    %v261 = vld [vmem:[#allocation3 + $0xe0] sm:$0xff]
    %v262 = vld [vmem:[#allocation3 + $0xe8] sm:$0xff]
    %v263 = vld [vmem:[#allocation3 + $0xf0] sm:$0xff]
    %v264 = vld [vmem:[#allocation3 + $0xf8] sm:$0xff]
    %v265 = vld [vmem:[#allocation3 + $0x100] sm:$0xff]
    %v266 = vld [vmem:[#allocation3 + $0x108] sm:$0xff]
    %v267 = vld [vmem:[#allocation3 + $0x110] sm:$0xff]
    %v268 = vld [vmem:[#allocation3 + $0x118] sm:$0xff]
    %v269 = vld [vmem:[#allocation3 + $0x120] sm:$0xff]
    %v270 = vld [vmem:[#allocation3 + $0x128] sm:$0xff]
    %v271 = vld [vmem:[#allocation3 + $0x130] sm:$0xff]
    %v272 = vld [vmem:[#allocation3 + $0x138] sm:$0xff]
    %v273 = vld [vmem:[#allocation3 + $0x140] sm:$0xff]
    %v274 = vld [vmem:[#allocation3 + $0x148] sm:$0xff]
    %v275 = vld [vmem:[#allocation3 + $0x150] sm:$0xff]
    %v276 = vld [vmem:[#allocation3 + $0x158] sm:$0xff]
    %v277 = vld [vmem:[#allocation3 + $0x160] sm:$0xff]
    %v278 = vld [vmem:[#allocation3 + $0x168] sm:$0xff]
    %v279 = vld [vmem:[#allocation3 + $0x170] sm:$0xff]
    %v280 = vld [vmem:[#allocation3 + $0x178] sm:$0xff]
    %v281 = vld [vmem:[#allocation3 + $0x180] sm:$0xff]
    %v282 = vld [vmem:[#allocation3 + $0x188] sm:$0xff]
    %v283 = vld [vmem:[#allocation3 + $0x190] sm:$0xff]
    %v284 = vld [vmem:[#allocation3 + $0x198] sm:$0xff]
    %v285 = vld [vmem:[#allocation3 + $0x1a0] sm:$0xff]
    %v286 = vld [vmem:[#allocation3 + $0x1a8] sm:$0xff]
    %v287 = vld [vmem:[#allocation3 + $0x1b0] sm:$0xff]
    %v288 = vld [vmem:[#allocation3 + $0x1b8] sm:$0xff]
    %v289 = vld [vmem:[#allocation3 + $0x1c0] sm:$0xff]
    %v290 = vld [vmem:[#allocation3 + $0x1c8] sm:$0xff]
    %v291 = vld [vmem:[#allocation3 + $0x1d0] sm:$0xff]
    %v292 = vld [vmem:[#allocation3 + $0x1d8] sm:$0xff]
    %v293 = vld [vmem:[#allocation3 + $0x1e0] sm:$0xff]
    %v294 = vld [vmem:[#allocation3 + $0x1e8] sm:$0xff]
    %v295 = vld [vmem:[#allocation3 + $0x1f0] sm:$0xff]
    %v296 = vld [vmem:[#allocation3 + $0x1f8] sm:$0xff]
    %v297 = vld [vmem:[#allocation5] sm:$0xff]
    %v298 = vld [vmem:[#allocation5 + $0x8] sm:$0xff]
    %v299 = vld [vmem:[#allocation5 + $0x10] sm:$0xff]
    %v300 = vld [vmem:[#allocation5 + $0x18] sm:$0xff]
    %v301 = vld [vmem:[#allocation5 + $0x20] sm:$0xff]
    %v302 = vld [vmem:[#allocation5 + $0x28] sm:$0xff]
    %v303 = vld [vmem:[#allocation5 + $0x30] sm:$0xff]
    %v304 = vld [vmem:[#allocation5 + $0x38] sm:$0xff]
    %v305 = vld [vmem:[#allocation5 + $0x40] sm:$0xff]
    %v306 = vld [vmem:[#allocation5 + $0x48] sm:$0xff]
    %v307 = vld [vmem:[#allocation5 + $0x50] sm:$0xff]
    %v308 = vld [vmem:[#allocation5 + $0x58] sm:$0xff]
    %v309 = vld [vmem:[#allocation5 + $0x60] sm:$0xff]
    %v310 = vld [vmem:[#allocation5 + $0x68] sm:$0xff]
    %v311 = vld [vmem:[#allocation5 + $0x70] sm:$0xff]
    %v312 = vld [vmem:[#allocation5 + $0x78] sm:$0xff]
    %v313 = vld [vmem:[#allocation5 + $0x80] sm:$0xff]
    %v314 = vld [vmem:[#allocation5 + $0x88] sm:$0xff]
    %v315 = vld [vmem:[#allocation5 + $0x90] sm:$0xff]
    %v316 = vld [vmem:[#allocation5 + $0x98] sm:$0xff]
    %v317 = vld [vmem:[#allocation5 + $0xa0] sm:$0xff]
    %v318 = vld [vmem:[#allocation5 + $0xa8] sm:$0xff]
    %v319 = vld [vmem:[#allocation5 + $0xb0] sm:$0xff]
    %v320 = vld [vmem:[#allocation5 + $0xb8] sm:$0xff]
    %v321 = vld [vmem:[#allocation5 + $0xc0] sm:$0xff]
    %v322 = vld [vmem:[#allocation5 + $0xc8] sm:$0xff]
    %v323 = vld [vmem:[#allocation5 + $0xd0] sm:$0xff]
    %v324 = vld [vmem:[#allocation5 + $0xd8] sm:$0xff]
    %v325 = vld [vmem:[#allocation5 + $0xe0] sm:$0xff]
    %v326 = vld [vmem:[#allocation5 + $0xe8] sm:$0xff]
    %v327 = vld [vmem:[#allocation5 + $0xf0] sm:$0xff]
    %v328 = vld [vmem:[#allocation5 + $0xf8] sm:$0xff]
    %v329 = vld [vmem:[#allocation5 + $0x100] sm:$0xff]
    %v330 = vld [vmem:[#allocation5 + $0x108] sm:$0xff]
    %v331 = vld [vmem:[#allocation5 + $0x110] sm:$0xff]
    %v332 = vld [vmem:[#allocation5 + $0x118] sm:$0xff]
    %v333 = vld [vmem:[#allocation5 + $0x120] sm:$0xff]
    %v334 = vld [vmem:[#allocation5 + $0x128] sm:$0xff]
    %v335 = vld [vmem:[#allocation5 + $0x130] sm:$0xff]
    %v336 = vld [vmem:[#allocation5 + $0x138] sm:$0xff]
    %v337 = vld [vmem:[#allocation5 + $0x140] sm:$0xff]
    %v338 = vld [vmem:[#allocation5 + $0x148] sm:$0xff]
    %v339 = vld [vmem:[#allocation5 + $0x150] sm:$0xff]
    %v340 = vld [vmem:[#allocation5 + $0x158] sm:$0xff]
    %v341 = vld [vmem:[#allocation5 + $0x160] sm:$0xff]
    %v342 = vld [vmem:[#allocation5 + $0x168] sm:$0xff]
    %v343 = vld [vmem:[#allocation5 + $0x170] sm:$0xff]
    %v344 = vld [vmem:[#allocation5 + $0x178] sm:$0xff]
    %v345 = vld [vmem:[#allocation5 + $0x180] sm:$0xff]
    %v346 = vld [vmem:[#allocation5 + $0x188] sm:$0xff]
    %v347 = vld [vmem:[#allocation5 + $0x190] sm:$0xff]
    %v348 = vld [vmem:[#allocation5 + $0x198] sm:$0xff]
    %v349 = vld [vmem:[#allocation5 + $0x1a0] sm:$0xff]
    %v350 = vld [vmem:[#allocation5 + $0x1a8] sm:$0xff]
    %v351 = vld [vmem:[#allocation5 + $0x1b0] sm:$0xff]
    %v352 = vld [vmem:[#allocation5 + $0x1b8] sm:$0xff]
    %v353 = vld [vmem:[#allocation5 + $0x1c0] sm:$0xff]
    %v354 = vld [vmem:[#allocation5 + $0x1c8] sm:$0xff]
    %v355 = vld [vmem:[#allocation5 + $0x1d0] sm:$0xff]
    %v356 = vld [vmem:[#allocation5 + $0x1d8] sm:$0xff]
    %v357 = vld [vmem:[#allocation5 + $0x1e0] sm:$0xff]
    %v358 = vld [vmem:[#allocation5 + $0x1e8] sm:$0xff]
    %v359 = vld [vmem:[#allocation5 + $0x1f0] sm:$0xff]
    %v360 = vld [vmem:[#allocation5 + $0x1f8] sm:$0xff]
    %v361 = vld [vmem:[#allocation5 + $0x200] sm:$0xff]
    %v362 = vld [vmem:[#allocation5 + $0x208] sm:$0xff]
    %v363 = vld [vmem:[#allocation5 + $0x210] sm:$0xff]
    %v364 = vld [vmem:[#allocation5 + $0x218] sm:$0xff]
    %v365 = vld [vmem:[#allocation5 + $0x220] sm:$0xff]
    %v366 = vld [vmem:[#allocation5 + $0x228] sm:$0xff]
    %v367 = vld [vmem:[#allocation5 + $0x230] sm:$0xff]
    %v368 = vld [vmem:[#allocation5 + $0x238] sm:$0xff]
    %v369 = vld [vmem:[#allocation5 + $0x240] sm:$0xff]
    %v370 = vld [vmem:[#allocation5 + $0x248] sm:$0xff]
    %v371 = vld [vmem:[#allocation5 + $0x250] sm:$0xff]
    %v372 = vld [vmem:[#allocation5 + $0x258] sm:$0xff]
    %v373 = vld [vmem:[#allocation5 + $0x260] sm:$0xff]
    %v374 = vld [vmem:[#allocation5 + $0x268] sm:$0xff]
    %v375 = vld [vmem:[#allocation5 + $0x270] sm:$0xff]
    %v376 = vld [vmem:[#allocation5 + $0x278] sm:$0xff]
    %v377 = vld [vmem:[#allocation5 + $0x280] sm:$0xff]
    %v378 = vld [vmem:[#allocation5 + $0x288] sm:$0xff]
    %v379 = vld [vmem:[#allocation5 + $0x290] sm:$0xff]
    %v380 = vld [vmem:[#allocation5 + $0x298] sm:$0xff]
    %v381 = vld [vmem:[#allocation5 + $0x2a0] sm:$0xff]
    %v382 = vld [vmem:[#allocation5 + $0x2a8] sm:$0xff]
    %v383 = vld [vmem:[#allocation5 + $0x2b0] sm:$0xff]
    %v384 = vld [vmem:[#allocation5 + $0x2b8] sm:$0xff]
    %v385 = vld [vmem:[#allocation5 + $0x2c0] sm:$0xff]
    %v386 = vld [vmem:[#allocation5 + $0x2c8] sm:$0xff]
    %v387 = vld [vmem:[#allocation5 + $0x2d0] sm:$0xff]
    %v388 = vld [vmem:[#allocation5 + $0x2d8] sm:$0xff]
    %v389 = vld [vmem:[#allocation5 + $0x2e0] sm:$0xff]
    %v390 = vld [vmem:[#allocation5 + $0x2e8] sm:$0xff]
    %v391 = vld [vmem:[#allocation5 + $0x2f0] sm:$0xff]
    %v392 = vld [vmem:[#allocation5 + $0x2f8] sm:$0xff]
    %v393 = vld [vmem:[#allocation5 + $0x300] sm:$0xff]
    %v394 = vld [vmem:[#allocation5 + $0x308] sm:$0xff]
    %v395 = vld [vmem:[#allocation5 + $0x310] sm:$0xff]
    %v396 = vld [vmem:[#allocation5 + $0x318] sm:$0xff]
    %v397 = vld [vmem:[#allocation5 + $0x320] sm:$0xff]
    %v398 = vld [vmem:[#allocation5 + $0x328] sm:$0xff]
    %v399 = vld [vmem:[#allocation5 + $0x330] sm:$0xff]
    %v400 = vld [vmem:[#allocation5 + $0x338] sm:$0xff]
    %v401 = vld [vmem:[#allocation5 + $0x340] sm:$0xff]
    %v402 = vld [vmem:[#allocation5 + $0x348] sm:$0xff]
    %v403 = vld [vmem:[#allocation5 + $0x350] sm:$0xff]
    %v404 = vld [vmem:[#allocation5 + $0x358] sm:$0xff]
    %v405 = vld [vmem:[#allocation5 + $0x360] sm:$0xff]
    %v406 = vld [vmem:[#allocation5 + $0x368] sm:$0xff]
    %v407 = vld [vmem:[#allocation5 + $0x370] sm:$0xff]
    %v408 = vld [vmem:[#allocation5 + $0x378] sm:$0xff]
    %v409 = vld [vmem:[#allocation5 + $0x380] sm:$0xff]
    %v410 = vld [vmem:[#allocation5 + $0x388] sm:$0xff]
    %v411 = vld [vmem:[#allocation5 + $0x390] sm:$0xff]
    %v412 = vld [vmem:[#allocation5 + $0x398] sm:$0xff]
    %v413 = vld [vmem:[#allocation5 + $0x3a0] sm:$0xff]
    %v414 = vld [vmem:[#allocation5 + $0x3a8] sm:$0xff]
    %v415 = vld [vmem:[#allocation5 + $0x3b0] sm:$0xff]
    %v416 = vld [vmem:[#allocation5 + $0x3b8] sm:$0xff]
    %v417 = vld [vmem:[#allocation5 + $0x3c0] sm:$0xff]
    %v418 = vld [vmem:[#allocation5 + $0x3c8] sm:$0xff]
    %v419 = vld [vmem:[#allocation5 + $0x3d0] sm:$0xff]
    %v420 = vld [vmem:[#allocation5 + $0x3d8] sm:$0xff]
    %v421 = vld [vmem:[#allocation5 + $0x3e0] sm:$0xff]
    %v422 = vld [vmem:[#allocation5 + $0x3e8] sm:$0xff]
    %v423 = vld [vmem:[#allocation5 + $0x3f0] sm:$0xff]
    %v424 = vld [vmem:[#allocation5 + $0x3f8] sm:$0xff]
    %v425 = vld [vmem:[%s6] sm:$0xf]
    %v426 = vxor.u32 %v201, 2147483648
    %v427 = vmul.f32 %v426, 1.442695
    %v428 = vpow.pop %v427
    %v429 = vadd.f32 %v428, 1.0
    %v430 = vrcp.pop %v429
    %v431 = vmul.f32 1.0, %v430
    %v432 = vxor.u32 %v202, 2147483648
    %v433 = vmul.f32 %v432, 1.442695
    %v434 = vpow.pop %v433
    %v435 = vadd.f32 %v434, 1.0
    %v436 = vrcp.pop %v435
    %v437 = vmul.f32 1.0, %v436
    %v438 = vtanh.pop %v203
    %v439 = vxor.u32 %v204, 2147483648
    %v440 = vmul.f32 %v439, 1.442695
    %v441 = vpow.pop %v440
    %v442 = vadd.f32 %v441, 1.0
    %v443 = vrcp.pop %v442
    %v444 = vmul.f32 1.0, %v443
    %v445 = vmul.f32 %v437, 0.0
    %v446 = vmul.f32 %v431, %v438
    %v447 = vadd.f32 %v445, %v446
    %v448 = vtanh.pop %v447
    %v449 = vmul.f32 %v444, %v448
    %v451 = vlaneseq
    %v452 = vshrl.u32 %v451, 7
    %v453 = vsub.s32 0, %v452
    %v454 = vrot.slane %v425, %v453
    %v455 = vlaneseq
    %v456 = vshrl.u32 %v455, 7
    %v457 = vsub.s32 1, %v456
    %v458 = vrot.slane %v425, %v457
    %v459 = vlaneseq
    %v460 = vshrl.u32 %v459, 7
    %v461 = vsub.s32 2, %v460
    %v462 = vrot.slane %v425, %v461
    %v463 = vlaneseq
    %v464 = vshrl.u32 %v463, 7
    %v465 = vsub.s32 3, %v464
    %v466 = vrot.slane %v425, %v465
    %471 = vmatprep.subr.mxu0 %v298
    %472 = vmatpush1.msra.mxu0 %v297
    %473 = vmatprep.subr.mxu0 %v302
    %474 = vmatpush1.msra.mxu0 %v301
    %475 = vmatprep.subr.mxu0 %v306
    %476 = vmatpush1.msra.mxu0 %v305
    %477 = vmatprep.subr.mxu0 %v310
    %478 = vmatpush1.msra.mxu0 %v309
    %479 = vmatprep.subr.mxu0 %v314
    %480 = vmatpush1.msra.mxu0 %v313
    %481 = vmatprep.subr.mxu0 %v318
    %482 = vmatpush1.msra.mxu0 %v317
    %483 = vmatprep.subr.mxu0 %v322
    %484 = vmatpush1.msra.mxu0 %v321
    %485 = vmatprep.subr.mxu0 %v326
    %486 = vmatpush1.msra.mxu0 %v325
    %487 = vmatprep.subr.mxu0 %v330
    %488 = vmatpush1.msra.mxu0 %v329
    %489 = vmatprep.subr.mxu0 %v334
    %490 = vmatpush1.msra.mxu0 %v333
    %491 = vmatprep.subr.mxu0 %v338
    %492 = vmatpush1.msra.mxu0 %v337
    %493 = vmatprep.subr.mxu0 %v342
    %494 = vmatpush1.msra.mxu0 %v341
    %495 = vmatprep.subr.mxu0 %v346
    %496 = vmatpush1.msra.mxu0 %v345
    %497 = vmatprep.subr.mxu0 %v350
    %498 = vmatpush1.msra.mxu0 %v349
    %499 = vmatprep.subr.mxu0 %v354
    %500 = vmatpush1.msra.mxu0 %v353
    %501 = vmatprep.subr.mxu0 %v358
    %502 = vmatpush1.msra.mxu0 %v357
    %503 = vmatprep.subr.mxu0 0.0
    %504 = vmatpush1.msra.mxu0 0.0
    %505 = vmatprep.subr.mxu0 0.0
    %506 = vmatpush1.msra.mxu0 0.0
    %507 = vmatprep.subr.mxu0 0.0
    %508 = vmatpush1.msra.mxu0 0.0
    %509 = vmatprep.subr.mxu0 0.0
    %510 = vmatpush1.msra.mxu0 0.0
    %511 = vmatprep.subr.mxu0 0.0
    %512 = vmatpush1.msra.mxu0 0.0
    %513 = vmatprep.subr.mxu0 0.0
    %514 = vmatpush1.msra.mxu0 0.0
    %515 = vmatprep.subr.mxu0 0.0
    %516 = vmatpush1.msra.mxu0 0.0
    %517 = vmatprep.subr.mxu0 0.0
    %518 = vmatpush1.msra.mxu0 0.0
    %519 = vmatprep.subr.mxu0 0.0
    %520 = vmatpush1.msra.mxu0 0.0
    %521 = vmatprep.subr.mxu0 0.0
    %522 = vmatpush1.msra.mxu0 0.0
    %523 = vmatprep.subr.mxu0 0.0
    %524 = vmatpush1.msra.mxu0 0.0
    %525 = vmatprep.subr.mxu0 0.0
    %526 = vmatpush1.msra.mxu0 0.0
    %527 = vmatprep.subr.mxu0 0.0
    %528 = vmatpush1.msra.mxu0 0.0
    %529 = vmatprep.subr.mxu0 0.0
    %530 = vmatpush1.msra.mxu0 0.0
    %531 = vmatprep.subr.mxu0 0.0
    %532 = vmatpush1.msra.mxu0 0.0
    %533 = vmatprep.subr.mxu0 0.0
    %534 = vmatpush1.msra.mxu0 0.0
    %535 = vmatprep.mubr.f32.mxu0 0.0
    %536 = vmatmul.mubr.f32.gmra.mrb[0].mxu0 %v449
    %v537 = vpop.f32.mrb[0].mxu0
    %v538 = vadd.f32 %v454, %v537
    %v539 = vpop.f32.mrb[0].mxu0
    %v540 = vadd.f32 %v458, %v539
    %541 = vdwg.mxu0
    %542 = vmatprep.subr.mxu0 %v300
    %543 = vmatpush1.msra.mxu0 %v299
    %544 = vmatprep.subr.mxu0 %v304
    %545 = vmatpush1.msra.mxu0 %v303
    %546 = vmatprep.subr.mxu0 %v308
    %547 = vmatpush1.msra.mxu0 %v307
    %548 = vmatprep.subr.mxu0 %v312
    %549 = vmatpush1.msra.mxu0 %v311
    %550 = vmatprep.subr.mxu0 %v316
    %551 = vmatpush1.msra.mxu0 %v315
    %552 = vmatprep.subr.mxu0 %v320
    %553 = vmatpush1.msra.mxu0 %v319
    %554 = vmatprep.subr.mxu0 %v324
    %555 = vmatpush1.msra.mxu0 %v323
    %556 = vmatprep.subr.mxu0 %v328
    %557 = vmatpush1.msra.mxu0 %v327
    %558 = vmatprep.subr.mxu0 %v332
    %559 = vmatpush1.msra.mxu0 %v331
    %560 = vmatprep.subr.mxu0 %v336
    %561 = vmatpush1.msra.mxu0 %v335
    %562 = vmatprep.subr.mxu0 %v340
    %563 = vmatpush1.msra.mxu0 %v339
    %564 = vmatprep.subr.mxu0 %v344
    %565 = vmatpush1.msra.mxu0 %v343
    %566 = vmatprep.subr.mxu0 %v348
    %567 = vmatpush1.msra.mxu0 %v347
    %568 = vmatprep.subr.mxu0 %v352
    %569 = vmatpush1.msra.mxu0 %v351
    %570 = vmatprep.subr.mxu0 %v356
    %571 = vmatpush1.msra.mxu0 %v355
    %572 = vmatprep.subr.mxu0 %v360
    %573 = vmatpush1.msra.mxu0 %v359
    %574 = vmatprep.subr.mxu0 0.0
    %575 = vmatpush1.msra.mxu0 0.0
    %576 = vmatprep.subr.mxu0 0.0
    %577 = vmatpush1.msra.mxu0 0.0
    %578 = vmatprep.subr.mxu0 0.0
    %579 = vmatpush1.msra.mxu0 0.0
    %580 = vmatprep.subr.mxu0 0.0
    %581 = vmatpush1.msra.mxu0 0.0
    %582 = vmatprep.subr.mxu0 0.0
    %583 = vmatpush1.msra.mxu0 0.0
    %584 = vmatprep.subr.mxu0 0.0
    %585 = vmatpush1.msra.mxu0 0.0
    %586 = vmatprep.subr.mxu0 0.0
    %587 = vmatpush1.msra.mxu0 0.0
    %588 = vmatprep.subr.mxu0 0.0
    %589 = vmatpush1.msra.mxu0 0.0
    %590 = vmatprep.subr.mxu0 0.0
    %591 = vmatpush1.msra.mxu0 0.0
    %592 = vmatprep.subr.mxu0 0.0
    %593 = vmatpush1.msra.mxu0 0.0
    %594 = vmatprep.subr.mxu0 0.0
    %595 = vmatpush1.msra.mxu0 0.0
    %596 = vmatprep.subr.mxu0 0.0
    %597 = vmatpush1.msra.mxu0 0.0
    %598 = vmatprep.subr.mxu0 0.0
    %599 = vmatpush1.msra.mxu0 0.0
    %600 = vmatprep.subr.mxu0 0.0
    %601 = vmatpush1.msra.mxu0 0.0
    %602 = vmatprep.subr.mxu0 0.0
    %603 = vmatpush1.msra.mxu0 0.0
    %604 = vmatprep.subr.mxu0 0.0
    %605 = vmatpush1.msra.mxu0 0.0
    %606 = vmatprep.mubr.f32.mxu0 0.0
    %607 = vmatmul.mubr.f32.gmra.mrb[0].mxu0 %v449
    %v608 = vpop.f32.mrb[0].mxu0
    %v609 = vadd.f32 %v462, %v608
    %v610 = vpop.f32.mrb[0].mxu0
    %v611 = vadd.f32 %v466, %v610
    %612 = vdwg.mxu0
    %v613 = vxor.u32 %v538, 2147483648
    %v614 = vmul.f32 %v613, 1.442695
    %v615 = vpow.pop %v614
    %v616 = vadd.f32 %v615, 1.0
    %v617 = vrcp.pop %v616
    %v618 = vmul.f32 1.0, %v617
    %v619 = vxor.u32 %v540, 2147483648
    %v620 = vmul.f32 %v619, 1.442695
    %v621 = vpow.pop %v620
    %v622 = vadd.f32 %v621, 1.0
    %v623 = vrcp.pop %v622
    %v624 = vmul.f32 1.0, %v623
    %v625 = vtanh.pop %v609
    %v626 = vxor.u32 %v611, 2147483648
    %v627 = vmul.f32 %v626, 1.442695
    %v628 = vpow.pop %v627
    %v629 = vadd.f32 %v628, 1.0
    %v630 = vrcp.pop %v629
    %v631 = vmul.f32 1.0, %v630
    %v632 = vmul.f32 %v624, 0.0
    %v633 = vmul.f32 %v618, %v625
    %v634 = vadd.f32 %v632, %v633
    %v635 = vtanh.pop %v634
    %v636 = vmul.f32 %v631, %v635
    %637 = vmatprep.subr.mxu0 %v234
    %638 = vmatpush1.msra.mxu0 %v233
    %639 = vmatprep.subr.mxu0 %v238
    %640 = vmatpush1.msra.mxu0 %v237
    %641 = vmatprep.subr.mxu0 %v242
    %642 = vmatpush1.msra.mxu0 %v241
    %643 = vmatprep.subr.mxu0 %v246
    %644 = vmatpush1.msra.mxu0 %v245
    %645 = vmatprep.subr.mxu0 %v250
    %646 = vmatpush1.msra.mxu0 %v249
    %647 = vmatprep.subr.mxu0 %v254
    %648 = vmatpush1.msra.mxu0 %v253
    %649 = vmatprep.subr.mxu0 %v258
    %650 = vmatpush1.msra.mxu0 %v257
    %651 = vmatprep.subr.mxu0 %v262
    %652 = vmatpush1.msra.mxu0 %v261
    %653 = vmatprep.subr.mxu0 %v266
    %654 = vmatpush1.msra.mxu0 %v265
    %655 = vmatprep.subr.mxu0 %v270
    %656 = vmatpush1.msra.mxu0 %v269
    %657 = vmatprep.subr.mxu0 %v274
    %658 = vmatpush1.msra.mxu0 %v273
    %659 = vmatprep.subr.mxu0 %v278
    %660 = vmatpush1.msra.mxu0 %v277
    %661 = vmatprep.subr.mxu0 %v282
    %662 = vmatpush1.msra.mxu0 %v281
    %663 = vmatprep.subr.mxu0 %v286
    %664 = vmatpush1.msra.mxu0 %v285
    %665 = vmatprep.subr.mxu0 %v290
    %666 = vmatpush1.msra.mxu0 %v289
    %667 = vmatprep.subr.mxu0 %v294
    %668 = vmatpush1.msra.mxu0 %v293
    %669 = vmatprep.subr.mxu0 0.0
    %670 = vmatpush1.msra.mxu0 0.0
    %671 = vmatprep.subr.mxu0 0.0
    %672 = vmatpush1.msra.mxu0 0.0
    %673 = vmatprep.subr.mxu0 0.0
    %674 = vmatpush1.msra.mxu0 0.0
    %675 = vmatprep.subr.mxu0 0.0
    %676 = vmatpush1.msra.mxu0 0.0
    %677 = vmatprep.subr.mxu0 0.0
    %678 = vmatpush1.msra.mxu0 0.0
    %679 = vmatprep.subr.mxu0 0.0
    %680 = vmatpush1.msra.mxu0 0.0
    %681 = vmatprep.subr.mxu0 0.0
    %682 = vmatpush1.msra.mxu0 0.0
    %683 = vmatprep.subr.mxu0 0.0
    %684 = vmatpush1.msra.mxu0 0.0
    %685 = vmatprep.subr.mxu0 0.0
    %686 = vmatpush1.msra.mxu0 0.0
    %687 = vmatprep.subr.mxu0 0.0
    %688 = vmatpush1.msra.mxu0 0.0
    %689 = vmatprep.subr.mxu0 0.0
    %690 = vmatpush1.msra.mxu0 0.0
    %691 = vmatprep.subr.mxu0 0.0
    %692 = vmatpush1.msra.mxu0 0.0
    %693 = vmatprep.subr.mxu0 0.0
    %694 = vmatpush1.msra.mxu0 0.0
    %695 = vmatprep.subr.mxu0 0.0
    %696 = vmatpush1.msra.mxu0 0.0
    %697 = vmatprep.subr.mxu0 0.0
    %698 = vmatpush1.msra.mxu0 0.0
    %699 = vmatprep.subr.mxu0 0.0
    %700 = vmatpush1.msra.mxu0 0.0
    %701 = vmatprep.mubr.f32.mxu0 0.0
    %702 = vmatmul.mubr.f32.gmra.mrb[0].mxu0 %v449
    %v703 = vpop.f32.mrb[0].mxu0
    %v704 = vadd.f32 0.0, %v703
    %v705 = vpop.f32.mrb[0].mxu0
    %v706 = vadd.f32 0.0, %v705
    %707 = vdwg.mxu0
    %708 = vmatprep.subr.mxu0 %v236
    %709 = vmatpush1.msra.mxu0 %v235
    %710 = vmatprep.subr.mxu0 %v240
    %711 = vmatpush1.msra.mxu0 %v239
    %712 = vmatprep.subr.mxu0 %v244
    %713 = vmatpush1.msra.mxu0 %v243
    %714 = vmatprep.subr.mxu0 %v248
    %715 = vmatpush1.msra.mxu0 %v247
    %716 = vmatprep.subr.mxu0 %v252
    %717 = vmatpush1.msra.mxu0 %v251
    %718 = vmatprep.subr.mxu0 %v256
    %719 = vmatpush1.msra.mxu0 %v255
    %720 = vmatprep.subr.mxu0 %v260
    %721 = vmatpush1.msra.mxu0 %v259
    %722 = vmatprep.subr.mxu0 %v264
    %723 = vmatpush1.msra.mxu0 %v263
    %724 = vmatprep.subr.mxu0 %v268
    %725 = vmatpush1.msra.mxu0 %v267
    %726 = vmatprep.subr.mxu0 %v272
    %727 = vmatpush1.msra.mxu0 %v271
    %728 = vmatprep.subr.mxu0 %v276
    %729 = vmatpush1.msra.mxu0 %v275
    %730 = vmatprep.subr.mxu0 %v280
    %731 = vmatpush1.msra.mxu0 %v279
    %732 = vmatprep.subr.mxu0 %v284
    %733 = vmatpush1.msra.mxu0 %v283
    %734 = vmatprep.subr.mxu0 %v288
    %735 = vmatpush1.msra.mxu0 %v287
    %736 = vmatprep.subr.mxu0 %v292
    %737 = vmatpush1.msra.mxu0 %v291
    %738 = vmatprep.subr.mxu0 %v296
    %739 = vmatpush1.msra.mxu0 %v295
    %740 = vmatprep.subr.mxu0 0.0
    %741 = vmatpush1.msra.mxu0 0.0
    %742 = vmatprep.subr.mxu0 0.0
    %743 = vmatpush1.msra.mxu0 0.0
    %744 = vmatprep.subr.mxu0 0.0
    %745 = vmatpush1.msra.mxu0 0.0
    %746 = vmatprep.subr.mxu0 0.0
    %747 = vmatpush1.msra.mxu0 0.0
    %748 = vmatprep.subr.mxu0 0.0
    %749 = vmatpush1.msra.mxu0 0.0
    %750 = vmatprep.subr.mxu0 0.0
    %751 = vmatpush1.msra.mxu0 0.0
    %752 = vmatprep.subr.mxu0 0.0
    %753 = vmatpush1.msra.mxu0 0.0
    %754 = vmatprep.subr.mxu0 0.0
    %755 = vmatpush1.msra.mxu0 0.0
    %756 = vmatprep.subr.mxu0 0.0
    %757 = vmatpush1.msra.mxu0 0.0
    %758 = vmatprep.subr.mxu0 0.0
    %759 = vmatpush1.msra.mxu0 0.0
    %760 = vmatprep.subr.mxu0 0.0
    %761 = vmatpush1.msra.mxu0 0.0
    %762 = vmatprep.subr.mxu0 0.0
    %763 = vmatpush1.msra.mxu0 0.0
    %764 = vmatprep.subr.mxu0 0.0
    %765 = vmatpush1.msra.mxu0 0.0
    %766 = vmatprep.subr.mxu0 0.0
    %767 = vmatpush1.msra.mxu0 0.0
    %768 = vmatprep.subr.mxu0 0.0
    %769 = vmatpush1.msra.mxu0 0.0
    %770 = vmatprep.subr.mxu0 0.0
    %771 = vmatpush1.msra.mxu0 0.0
    %772 = vmatprep.mubr.f32.mxu0 0.0
    %773 = vmatmul.mubr.f32.gmra.mrb[0].mxu0 %v449
    %v774 = vpop.f32.mrb[0].mxu0
    %v775 = vadd.f32 0.0, %v774
    %v776 = vpop.f32.mrb[0].mxu0
    %v777 = vadd.f32 0.0, %v776
    %778 = vdwg.mxu0
    %v779 = vadd.f32 %v205, %v704
    %v780 = vadd.f32 %v206, %v706
    %v781 = vadd.f32 %v207, %v775
    %v782 = vadd.f32 %v208, %v777
    %v783 = vxor.u32 %v779, 2147483648
    %v784 = vmul.f32 %v783, 1.442695
    %v785 = vpow.pop %v784
    %v786 = vadd.f32 %v785, 1.0
    %v787 = vrcp.pop %v786
    %v788 = vmul.f32 1.0, %v787
    %v789 = vxor.u32 %v780, 2147483648
    %v790 = vmul.f32 %v789, 1.442695
    %v791 = vpow.pop %v790
    %v792 = vadd.f32 %v791, 1.0
    %v793 = vrcp.pop %v792
    %v794 = vmul.f32 1.0, %v793
    %v795 = vtanh.pop %v781
    %v796 = vxor.u32 %v782, 2147483648
    %v797 = vmul.f32 %v796, 1.442695
    %v798 = vpow.pop %v797
    %v799 = vadd.f32 %v798, 1.0
    %v800 = vrcp.pop %v799
    %v801 = vmul.f32 1.0, %v800
    %v802 = vmul.f32 %v794, %v447
    %v803 = vmul.f32 %v788, %v795
    %v804 = vadd.f32 %v802, %v803
    %v805 = vtanh.pop %v804
    %v806 = vmul.f32 %v801, %v805
    %807 = vmatprep.subr.mxu0 %v298
    %808 = vmatpush1.msra.mxu0 %v297
    %809 = vmatprep.subr.mxu0 %v302
    %810 = vmatpush1.msra.mxu0 %v301
    %811 = vmatprep.subr.mxu0 %v306
    %812 = vmatpush1.msra.mxu0 %v305
    %813 = vmatprep.subr.mxu0 %v310
    %814 = vmatpush1.msra.mxu0 %v309
    %815 = vmatprep.subr.mxu0 %v314
    %816 = vmatpush1.msra.mxu0 %v313
    %817 = vmatprep.subr.mxu0 %v318
    %818 = vmatpush1.msra.mxu0 %v317
    %819 = vmatprep.subr.mxu0 %v322
    %820 = vmatpush1.msra.mxu0 %v321
    %821 = vmatprep.subr.mxu0 %v326
    %822 = vmatpush1.msra.mxu0 %v325
    %823 = vmatprep.subr.mxu0 %v330
    %824 = vmatpush1.msra.mxu0 %v329
    %825 = vmatprep.subr.mxu0 %v334
    %826 = vmatpush1.msra.mxu0 %v333
    %827 = vmatprep.subr.mxu0 %v338
    %828 = vmatpush1.msra.mxu0 %v337
    %829 = vmatprep.subr.mxu0 %v342
    %830 = vmatpush1.msra.mxu0 %v341
    %831 = vmatprep.subr.mxu0 %v346
    %832 = vmatpush1.msra.mxu0 %v345
    %833 = vmatprep.subr.mxu0 %v350
    %834 = vmatpush1.msra.mxu0 %v349
    %835 = vmatprep.subr.mxu0 %v354
    %836 = vmatpush1.msra.mxu0 %v353
    %837 = vmatprep.subr.mxu0 %v358
    %838 = vmatpush1.msra.mxu0 %v357
    %839 = vmatprep.subr.mxu0 %v362
    %840 = vmatpush1.msra.mxu0 %v361
    %841 = vmatprep.subr.mxu0 %v366
    %842 = vmatpush1.msra.mxu0 %v365
    %843 = vmatprep.subr.mxu0 %v370
    %844 = vmatpush1.msra.mxu0 %v369
    %845 = vmatprep.subr.mxu0 %v374
    %846 = vmatpush1.msra.mxu0 %v373
    %847 = vmatprep.subr.mxu0 %v378
    %848 = vmatpush1.msra.mxu0 %v377
    %849 = vmatprep.subr.mxu0 %v382
    %850 = vmatpush1.msra.mxu0 %v381
    %851 = vmatprep.subr.mxu0 %v386
    %852 = vmatpush1.msra.mxu0 %v385
    %853 = vmatprep.subr.mxu0 %v390
    %854 = vmatpush1.msra.mxu0 %v389
    %855 = vmatprep.subr.mxu0 %v394
    %856 = vmatpush1.msra.mxu0 %v393
    %857 = vmatprep.subr.mxu0 %v398
    %858 = vmatpush1.msra.mxu0 %v397
    %859 = vmatprep.subr.mxu0 %v402
    %860 = vmatpush1.msra.mxu0 %v401
    %861 = vmatprep.subr.mxu0 %v406
    %862 = vmatpush1.msra.mxu0 %v405
    %863 = vmatprep.subr.mxu0 %v410
    %864 = vmatpush1.msra.mxu0 %v409
    %865 = vmatprep.subr.mxu0 %v414
    %866 = vmatpush1.msra.mxu0 %v413
    %867 = vmatprep.subr.mxu0 %v418
    %868 = vmatpush1.msra.mxu0 %v417
    %869 = vmatprep.subr.mxu0 %v422
    %870 = vmatpush1.msra.mxu0 %v421
    %871 = vmatprep.mubr.f32.mxu0 %v636
    %872 = vmatmul.mubr.f32.gmra.mrb[0].mxu0 %v806
    %v873 = vpop.f32.mrb[0].mxu0
    %v874 = vadd.f32 %v454, %v873
    %v875 = vpop.f32.mrb[0].mxu0
    %v876 = vadd.f32 %v458, %v875
    %877 = vdwg.mxu0
    %878 = vmatprep.subr.mxu0 %v300
    %879 = vmatpush1.msra.mxu0 %v299
    %880 = vmatprep.subr.mxu0 %v304
    %881 = vmatpush1.msra.mxu0 %v303
    %882 = vmatprep.subr.mxu0 %v308
    %883 = vmatpush1.msra.mxu0 %v307
    %884 = vmatprep.subr.mxu0 %v312
    %885 = vmatpush1.msra.mxu0 %v311
    %886 = vmatprep.subr.mxu0 %v316
    %887 = vmatpush1.msra.mxu0 %v315
    %888 = vmatprep.subr.mxu0 %v320
    %889 = vmatpush1.msra.mxu0 %v319
    %890 = vmatprep.subr.mxu0 %v324
    %891 = vmatpush1.msra.mxu0 %v323
    %892 = vmatprep.subr.mxu0 %v328
    %893 = vmatpush1.msra.mxu0 %v327
    %894 = vmatprep.subr.mxu0 %v332
    %895 = vmatpush1.msra.mxu0 %v331
    %896 = vmatprep.subr.mxu0 %v336
    %897 = vmatpush1.msra.mxu0 %v335
    %898 = vmatprep.subr.mxu0 %v340
    %899 = vmatpush1.msra.mxu0 %v339
    %900 = vmatprep.subr.mxu0 %v344
    %901 = vmatpush1.msra.mxu0 %v343
    %902 = vmatprep.subr.mxu0 %v348
    %903 = vmatpush1.msra.mxu0 %v347
    %904 = vmatprep.subr.mxu0 %v352
    %905 = vmatpush1.msra.mxu0 %v351
    %906 = vmatprep.subr.mxu0 %v356
    %907 = vmatpush1.msra.mxu0 %v355
    %908 = vmatprep.subr.mxu0 %v360
    %909 = vmatpush1.msra.mxu0 %v359
    %910 = vmatprep.subr.mxu0 %v364
    %911 = vmatpush1.msra.mxu0 %v363
    %912 = vmatprep.subr.mxu0 %v368
    %913 = vmatpush1.msra.mxu0 %v367
    %914 = vmatprep.subr.mxu0 %v372
    %915 = vmatpush1.msra.mxu0 %v371
    %916 = vmatprep.subr.mxu0 %v376
    %917 = vmatpush1.msra.mxu0 %v375
    %918 = vmatprep.subr.mxu0 %v380
    %919 = vmatpush1.msra.mxu0 %v379
    %920 = vmatprep.subr.mxu0 %v384
    %921 = vmatpush1.msra.mxu0 %v383
    %922 = vmatprep.subr.mxu0 %v388
    %923 = vmatpush1.msra.mxu0 %v387
    %924 = vmatprep.subr.mxu0 %v392
    %925 = vmatpush1.msra.mxu0 %v391
    %926 = vmatprep.subr.mxu0 %v396
    %927 = vmatpush1.msra.mxu0 %v395
    %928 = vmatprep.subr.mxu0 %v400
    %929 = vmatpush1.msra.mxu0 %v399
    %930 = vmatprep.subr.mxu0 %v404
    %931 = vmatpush1.msra.mxu0 %v403
    %932 = vmatprep.subr.mxu0 %v408
    %933 = vmatpush1.msra.mxu0 %v407
    %934 = vmatprep.subr.mxu0 %v412
    %935 = vmatpush1.msra.mxu0 %v411
    %936 = vmatprep.subr.mxu0 %v416
    %937 = vmatpush1.msra.mxu0 %v415
    %938 = vmatprep.subr.mxu0 %v420
    %939 = vmatpush1.msra.mxu0 %v419
    %940 = vmatprep.subr.mxu0 %v424
    %941 = vmatpush1.msra.mxu0 %v423
    %942 = vmatprep.mubr.f32.mxu0 %v636
    %943 = vmatmul.mubr.f32.gmra.mrb[0].mxu0 %v806
    %v944 = vpop.f32.mrb[0].mxu0
    %v945 = vadd.f32 %v462, %v944
    %v946 = vpop.f32.mrb[0].mxu0
    %v947 = vadd.f32 %v466, %v946
    %948 = vdwg.mxu0
    %v949 = vxor.u32 %v874, 2147483648
    %v950 = vmul.f32 %v949, 1.442695
    %v951 = vpow.pop %v950
    %v952 = vadd.f32 %v951, 1.0
    %v953 = vrcp.pop %v952
    %v954 = vmul.f32 1.0, %v953
    %v955 = vxor.u32 %v876, 2147483648
    %v956 = vmul.f32 %v955, 1.442695
    %v957 = vpow.pop %v956
    %v958 = vadd.f32 %v957, 1.0
    %v959 = vrcp.pop %v958
    %v960 = vmul.f32 1.0, %v959
    %v961 = vtanh.pop %v945
    %v962 = vxor.u32 %v947, 2147483648
    %v963 = vmul.f32 %v962, 1.442695
    %v964 = vpow.pop %v963
    %v965 = vadd.f32 %v964, 1.0
    %v966 = vrcp.pop %v965
    %v967 = vmul.f32 1.0, %v966
    %v968 = vmul.f32 %v960, %v634
    %v969 = vmul.f32 %v954, %v961
    %v970 = vadd.f32 %v968, %v969
    %v971 = vtanh.pop %v970
    %v972 = vmul.f32 %v967, %v971
    %973 = vmatprep.subr.mxu0 %v234
    %974 = vmatpush1.msra.mxu0 %v233
    %975 = vmatprep.subr.mxu0 %v238
    %976 = vmatpush1.msra.mxu0 %v237
    %977 = vmatprep.subr.mxu0 %v242
    %978 = vmatpush1.msra.mxu0 %v241
    %979 = vmatprep.subr.mxu0 %v246
    %980 = vmatpush1.msra.mxu0 %v245
    %981 = vmatprep.subr.mxu0 %v250
    %982 = vmatpush1.msra.mxu0 %v249
    %983 = vmatprep.subr.mxu0 %v254
    %984 = vmatpush1.msra.mxu0 %v253
    %985 = vmatprep.subr.mxu0 %v258
    %986 = vmatpush1.msra.mxu0 %v257
    %987 = vmatprep.subr.mxu0 %v262
    %988 = vmatpush1.msra.mxu0 %v261
    %989 = vmatprep.subr.mxu0 %v266
    %990 = vmatpush1.msra.mxu0 %v265
    %991 = vmatprep.subr.mxu0 %v270
    %992 = vmatpush1.msra.mxu0 %v269
    %993 = vmatprep.subr.mxu0 %v274
    %994 = vmatpush1.msra.mxu0 %v273
    %995 = vmatprep.subr.mxu0 %v278
    %996 = vmatpush1.msra.mxu0 %v277
    %997 = vmatprep.subr.mxu0 %v282
    %998 = vmatpush1.msra.mxu0 %v281
    %999 = vmatprep.subr.mxu0 %v286
    %1000 = vmatpush1.msra.mxu0 %v285
    %1001 = vmatprep.subr.mxu0 %v290
    %1002 = vmatpush1.msra.mxu0 %v289
    %1003 = vmatprep.subr.mxu0 %v294
    %1004 = vmatpush1.msra.mxu0 %v293
    %1005 = vmatprep.subr.mxu0 0.0
    %1006 = vmatpush1.msra.mxu0 0.0
    %1007 = vmatprep.subr.mxu0 0.0
    %1008 = vmatpush1.msra.mxu0 0.0
    %1009 = vmatprep.subr.mxu0 0.0
    %1010 = vmatpush1.msra.mxu0 0.0
    %1011 = vmatprep.subr.mxu0 0.0
    %1012 = vmatpush1.msra.mxu0 0.0
    %1013 = vmatprep.subr.mxu0 0.0
    %1014 = vmatpush1.msra.mxu0 0.0
    %1015 = vmatprep.subr.mxu0 0.0
    %1016 = vmatpush1.msra.mxu0 0.0
    %1017 = vmatprep.subr.mxu0 0.0
    %1018 = vmatpush1.msra.mxu0 0.0
    %1019 = vmatprep.subr.mxu0 0.0
    %1020 = vmatpush1.msra.mxu0 0.0
    %1021 = vmatprep.subr.mxu0 0.0
    %1022 = vmatpush1.msra.mxu0 0.0
    %1023 = vmatprep.subr.mxu0 0.0
    %1024 = vmatpush1.msra.mxu0 0.0
    %1025 = vmatprep.subr.mxu0 0.0
    %1026 = vmatpush1.msra.mxu0 0.0
    %1027 = vmatprep.subr.mxu0 0.0
    %1028 = vmatpush1.msra.mxu0 0.0
    %1029 = vmatprep.subr.mxu0 0.0
    %1030 = vmatpush1.msra.mxu0 0.0
    %1031 = vmatprep.subr.mxu0 0.0
    %1032 = vmatpush1.msra.mxu0 0.0
    %1033 = vmatprep.subr.mxu0 0.0
    %1034 = vmatpush1.msra.mxu0 0.0
    %1035 = vmatprep.subr.mxu0 0.0
    %1036 = vmatpush1.msra.mxu0 0.0
    %1037 = vmatprep.mubr.f32.mxu0 0.0
    %1038 = vmatmul.mubr.f32.gmra.mrb[0].mxu0 %v806
    %v1039 = vpop.f32.mrb[0].mxu0
    %v1040 = vadd.f32 0.0, %v1039
    %v1041 = vpop.f32.mrb[0].mxu0
    %v1042 = vadd.f32 0.0, %v1041
    %1043 = vdwg.mxu0
    %1044 = vmatprep.subr.mxu0 %v236
    %1045 = vmatpush1.msra.mxu0 %v235
    %1046 = vmatprep.subr.mxu0 %v240
    %1047 = vmatpush1.msra.mxu0 %v239
    %1048 = vmatprep.subr.mxu0 %v244
    %1049 = vmatpush1.msra.mxu0 %v243
    %1050 = vmatprep.subr.mxu0 %v248
    %1051 = vmatpush1.msra.mxu0 %v247
    %1052 = vmatprep.subr.mxu0 %v252
    %1053 = vmatpush1.msra.mxu0 %v251
    %1054 = vmatprep.subr.mxu0 %v256
    %1055 = vmatpush1.msra.mxu0 %v255
    %1056 = vmatprep.subr.mxu0 %v260
    %1057 = vmatpush1.msra.mxu0 %v259
    %1058 = vmatprep.subr.mxu0 %v264
    %1059 = vmatpush1.msra.mxu0 %v263
    %1060 = vmatprep.subr.mxu0 %v268
    %1061 = vmatpush1.msra.mxu0 %v267
    %1062 = vmatprep.subr.mxu0 %v272
    %1063 = vmatpush1.msra.mxu0 %v271
    %1064 = vmatprep.subr.mxu0 %v276
    %1065 = vmatpush1.msra.mxu0 %v275
    %1066 = vmatprep.subr.mxu0 %v280
    %1067 = vmatpush1.msra.mxu0 %v279
    %1068 = vmatprep.subr.mxu0 %v284
    %1069 = vmatpush1.msra.mxu0 %v283
    %1070 = vmatprep.subr.mxu0 %v288
    %1071 = vmatpush1.msra.mxu0 %v287
    %1072 = vmatprep.subr.mxu0 %v292
    %1073 = vmatpush1.msra.mxu0 %v291
    %1074 = vmatprep.subr.mxu0 %v296
    %1075 = vmatpush1.msra.mxu0 %v295
    %1076 = vmatprep.subr.mxu0 0.0
    %1077 = vmatpush1.msra.mxu0 0.0
    %1078 = vmatprep.subr.mxu0 0.0
    %1079 = vmatpush1.msra.mxu0 0.0
    %1080 = vmatprep.subr.mxu0 0.0
    %1081 = vmatpush1.msra.mxu0 0.0
    %1082 = vmatprep.subr.mxu0 0.0
    %1083 = vmatpush1.msra.mxu0 0.0
    %1084 = vmatprep.subr.mxu0 0.0
    %1085 = vmatpush1.msra.mxu0 0.0
    %1086 = vmatprep.subr.mxu0 0.0
    %1087 = vmatpush1.msra.mxu0 0.0
    %1088 = vmatprep.subr.mxu0 0.0
    %1089 = vmatpush1.msra.mxu0 0.0
    %1090 = vmatprep.subr.mxu0 0.0
    %1091 = vmatpush1.msra.mxu0 0.0
    %1092 = vmatprep.subr.mxu0 0.0
    %1093 = vmatpush1.msra.mxu0 0.0
    %1094 = vmatprep.subr.mxu0 0.0
    %1095 = vmatpush1.msra.mxu0 0.0
    %1096 = vmatprep.subr.mxu0 0.0
    %1097 = vmatpush1.msra.mxu0 0.0
    %1098 = vmatprep.subr.mxu0 0.0
    %1099 = vmatpush1.msra.mxu0 0.0
    %1100 = vmatprep.subr.mxu0 0.0
    %1101 = vmatpush1.msra.mxu0 0.0
    %1102 = vmatprep.subr.mxu0 0.0
    %1103 = vmatpush1.msra.mxu0 0.0
    %1104 = vmatprep.subr.mxu0 0.0
    %1105 = vmatpush1.msra.mxu0 0.0
    %1106 = vmatprep.subr.mxu0 0.0
    %1107 = vmatpush1.msra.mxu0 0.0
    %1108 = vmatprep.mubr.f32.mxu0 0.0
    %1109 = vmatmul.mubr.f32.gmra.mrb[0].mxu0 %v806
    %v1110 = vpop.f32.mrb[0].mxu0
    %v1111 = vadd.f32 0.0, %v1110
    %v1112 = vpop.f32.mrb[0].mxu0
    %v1113 = vadd.f32 0.0, %v1112
    %1114 = vdwg.mxu0
    %v1115 = vadd.f32 %v209, %v1040
    %v1116 = vadd.f32 %v210, %v1042
    %v1117 = vadd.f32 %v211, %v1111
    %v1118 = vadd.f32 %v212, %v1113
    %v1119 = vxor.u32 %v1115, 2147483648
    %v1120 = vmul.f32 %v1119, 1.442695
    %v1121 = vpow.pop %v1120
    %v1122 = vadd.f32 %v1121, 1.0
    %v1123 = vrcp.pop %v1122
    %v1124 = vmul.f32 1.0, %v1123
    %v1125 = vxor.u32 %v1116, 2147483648
    %v1126 = vmul.f32 %v1125, 1.442695
    %v1127 = vpow.pop %v1126
    %v1128 = vadd.f32 %v1127, 1.0
    %v1129 = vrcp.pop %v1128
    %v1130 = vmul.f32 1.0, %v1129
    %v1131 = vtanh.pop %v1117
    %v1132 = vxor.u32 %v1118, 2147483648
    %v1133 = vmul.f32 %v1132, 1.442695
    %v1134 = vpow.pop %v1133
    %v1135 = vadd.f32 %v1134, 1.0
    %v1136 = vrcp.pop %v1135
    %v1137 = vmul.f32 1.0, %v1136
    %v1138 = vmul.f32 %v1130, %v804
    %v1139 = vmul.f32 %v1124, %v1131
    %v1140 = vadd.f32 %v1138, %v1139
    %v1141 = vtanh.pop %v1140
    %v1142 = vmul.f32 %v1137, %v1141
    %1143 = vmatprep.subr.mxu0 %v298
    %1144 = vmatpush1.msra.mxu0 %v297
    %1145 = vmatprep.subr.mxu0 %v302
    %1146 = vmatpush1.msra.mxu0 %v301
    %1147 = vmatprep.subr.mxu0 %v306
    %1148 = vmatpush1.msra.mxu0 %v305
    %1149 = vmatprep.subr.mxu0 %v310
    %1150 = vmatpush1.msra.mxu0 %v309
    %1151 = vmatprep.subr.mxu0 %v314
    %1152 = vmatpush1.msra.mxu0 %v313
    %1153 = vmatprep.subr.mxu0 %v318
    %1154 = vmatpush1.msra.mxu0 %v317
    %1155 = vmatprep.subr.mxu0 %v322
    %1156 = vmatpush1.msra.mxu0 %v321
    %1157 = vmatprep.subr.mxu0 %v326
    %1158 = vmatpush1.msra.mxu0 %v325
    %1159 = vmatprep.subr.mxu0 %v330
    %1160 = vmatpush1.msra.mxu0 %v329
    %1161 = vmatprep.subr.mxu0 %v334
    %1162 = vmatpush1.msra.mxu0 %v333
    %1163 = vmatprep.subr.mxu0 %v338
    %1164 = vmatpush1.msra.mxu0 %v337
    %1165 = vmatprep.subr.mxu0 %v342
    %1166 = vmatpush1.msra.mxu0 %v341
    %1167 = vmatprep.subr.mxu0 %v346
    %1168 = vmatpush1.msra.mxu0 %v345
    %1169 = vmatprep.subr.mxu0 %v350
    %1170 = vmatpush1.msra.mxu0 %v349
    %1171 = vmatprep.subr.mxu0 %v354
    %1172 = vmatpush1.msra.mxu0 %v353
    %1173 = vmatprep.subr.mxu0 %v358
    %1174 = vmatpush1.msra.mxu0 %v357
    %1175 = vmatprep.subr.mxu0 %v362
    %1176 = vmatpush1.msra.mxu0 %v361
    %1177 = vmatprep.subr.mxu0 %v366
    %1178 = vmatpush1.msra.mxu0 %v365
    %1179 = vmatprep.subr.mxu0 %v370
    %1180 = vmatpush1.msra.mxu0 %v369
    %1181 = vmatprep.subr.mxu0 %v374
    %1182 = vmatpush1.msra.mxu0 %v373
    %1183 = vmatprep.subr.mxu0 %v378
    %1184 = vmatpush1.msra.mxu0 %v377
    %1185 = vmatprep.subr.mxu0 %v382
    %1186 = vmatpush1.msra.mxu0 %v381
    %1187 = vmatprep.subr.mxu0 %v386
    %1188 = vmatpush1.msra.mxu0 %v385
    %1189 = vmatprep.subr.mxu0 %v390
    %1190 = vmatpush1.msra.mxu0 %v389
    %1191 = vmatprep.subr.mxu0 %v394
    %1192 = vmatpush1.msra.mxu0 %v393
    %1193 = vmatprep.subr.mxu0 %v398
    %1194 = vmatpush1.msra.mxu0 %v397
    %1195 = vmatprep.subr.mxu0 %v402
    %1196 = vmatpush1.msra.mxu0 %v401
    %1197 = vmatprep.subr.mxu0 %v406
    %1198 = vmatpush1.msra.mxu0 %v405
    %1199 = vmatprep.subr.mxu0 %v410
    %1200 = vmatpush1.msra.mxu0 %v409
    %1201 = vmatprep.subr.mxu0 %v414
    %1202 = vmatpush1.msra.mxu0 %v413
    %1203 = vmatprep.subr.mxu0 %v418
    %1204 = vmatpush1.msra.mxu0 %v417
    %1205 = vmatprep.subr.mxu0 %v422
    %1206 = vmatpush1.msra.mxu0 %v421
    %1207 = vmatprep.mubr.f32.mxu0 %v972
    %1208 = vmatmul.mubr.f32.gmra.mrb[0].mxu0 %v1142
    %v1209 = vpop.f32.mrb[0].mxu0
    %v1210 = vadd.f32 %v454, %v1209
    %v1211 = vpop.f32.mrb[0].mxu0
    %v1212 = vadd.f32 %v458, %v1211
    %1213 = vdwg.mxu0
    %1214 = vmatprep.subr.mxu0 %v300
    %1215 = vmatpush1.msra.mxu0 %v299
    %1216 = vmatprep.subr.mxu0 %v304
    %1217 = vmatpush1.msra.mxu0 %v303
    %1218 = vmatprep.subr.mxu0 %v308
    %1219 = vmatpush1.msra.mxu0 %v307
    %1220 = vmatprep.subr.mxu0 %v312
    %1221 = vmatpush1.msra.mxu0 %v311
    %1222 = vmatprep.subr.mxu0 %v316
    %1223 = vmatpush1.msra.mxu0 %v315
    %1224 = vmatprep.subr.mxu0 %v320
    %1225 = vmatpush1.msra.mxu0 %v319
    %1226 = vmatprep.subr.mxu0 %v324
    %1227 = vmatpush1.msra.mxu0 %v323
    %1228 = vmatprep.subr.mxu0 %v328
    %1229 = vmatpush1.msra.mxu0 %v327
    %1230 = vmatprep.subr.mxu0 %v332
    %1231 = vmatpush1.msra.mxu0 %v331
    %1232 = vmatprep.subr.mxu0 %v336
    %1233 = vmatpush1.msra.mxu0 %v335
    %1234 = vmatprep.subr.mxu0 %v340
    %1235 = vmatpush1.msra.mxu0 %v339
    %1236 = vmatprep.subr.mxu0 %v344
    %1237 = vmatpush1.msra.mxu0 %v343
    %1238 = vmatprep.subr.mxu0 %v348
    %1239 = vmatpush1.msra.mxu0 %v347
    %1240 = vmatprep.subr.mxu0 %v352
    %1241 = vmatpush1.msra.mxu0 %v351
    %1242 = vmatprep.subr.mxu0 %v356
    %1243 = vmatpush1.msra.mxu0 %v355
    %1244 = vmatprep.subr.mxu0 %v360
    %1245 = vmatpush1.msra.mxu0 %v359
    %1246 = vmatprep.subr.mxu0 %v364
    %1247 = vmatpush1.msra.mxu0 %v363
    %1248 = vmatprep.subr.mxu0 %v368
    %1249 = vmatpush1.msra.mxu0 %v367
    %1250 = vmatprep.subr.mxu0 %v372
    %1251 = vmatpush1.msra.mxu0 %v371
    %1252 = vmatprep.subr.mxu0 %v376
    %1253 = vmatpush1.msra.mxu0 %v375
    %1254 = vmatprep.subr.mxu0 %v380
    %1255 = vmatpush1.msra.mxu0 %v379
    %1256 = vmatprep.subr.mxu0 %v384
    %1257 = vmatpush1.msra.mxu0 %v383
    %1258 = vmatprep.subr.mxu0 %v388
    %1259 = vmatpush1.msra.mxu0 %v387
    %1260 = vmatprep.subr.mxu0 %v392
    %1261 = vmatpush1.msra.mxu0 %v391
    %1262 = vmatprep.subr.mxu0 %v396
    %1263 = vmatpush1.msra.mxu0 %v395
    %1264 = vmatprep.subr.mxu0 %v400
    %1265 = vmatpush1.msra.mxu0 %v399
    %1266 = vmatprep.subr.mxu0 %v404
    %1267 = vmatpush1.msra.mxu0 %v403
    %1268 = vmatprep.subr.mxu0 %v408
    %1269 = vmatpush1.msra.mxu0 %v407
    %1270 = vmatprep.subr.mxu0 %v412
    %1271 = vmatpush1.msra.mxu0 %v411
    %1272 = vmatprep.subr.mxu0 %v416
    %1273 = vmatpush1.msra.mxu0 %v415
    %1274 = vmatprep.subr.mxu0 %v420
    %1275 = vmatpush1.msra.mxu0 %v419
    %1276 = vmatprep.subr.mxu0 %v424
    %1277 = vmatpush1.msra.mxu0 %v423
    %1278 = vmatprep.mubr.f32.mxu0 %v972
    %1279 = vmatmul.mubr.f32.gmra.mrb[0].mxu0 %v1142
    %v1280 = vpop.f32.mrb[0].mxu0
    %v1281 = vadd.f32 %v462, %v1280
    %v1282 = vpop.f32.mrb[0].mxu0
    %v1283 = vadd.f32 %v466, %v1282
    %1284 = vdwg.mxu0
    %v1285 = vxor.u32 %v1210, 2147483648
    %v1286 = vmul.f32 %v1285, 1.442695
    %v1287 = vpow.pop %v1286
    %v1288 = vadd.f32 %v1287, 1.0
    %v1289 = vrcp.pop %v1288
    %v1290 = vmul.f32 1.0, %v1289
    %v1291 = vxor.u32 %v1212, 2147483648
    %v1292 = vmul.f32 %v1291, 1.442695
    %v1293 = vpow.pop %v1292
    %v1294 = vadd.f32 %v1293, 1.0
    %v1295 = vrcp.pop %v1294
    %v1296 = vmul.f32 1.0, %v1295
    %v1297 = vtanh.pop %v1281
    %v1298 = vxor.u32 %v1283, 2147483648
    %v1299 = vmul.f32 %v1298, 1.442695
    %v1300 = vpow.pop %v1299
    %v1301 = vadd.f32 %v1300, 1.0
    %v1302 = vrcp.pop %v1301
    %v1303 = vmul.f32 1.0, %v1302
    %v1304 = vmul.f32 %v1296, %v970
    %v1305 = vmul.f32 %v1290, %v1297
    %v1306 = vadd.f32 %v1304, %v1305
    %v1307 = vtanh.pop %v1306
    %v1308 = vmul.f32 %v1303, %v1307
    %1309 = vmatprep.subr.mxu0 %v234
    %1310 = vmatpush1.msra.mxu0 %v233
    %1311 = vmatprep.subr.mxu0 %v238
    %1312 = vmatpush1.msra.mxu0 %v237
    %1313 = vmatprep.subr.mxu0 %v242
    %1314 = vmatpush1.msra.mxu0 %v241
    %1315 = vmatprep.subr.mxu0 %v246
    %1316 = vmatpush1.msra.mxu0 %v245
    %1317 = vmatprep.subr.mxu0 %v250
    %1318 = vmatpush1.msra.mxu0 %v249
    %1319 = vmatprep.subr.mxu0 %v254
    %1320 = vmatpush1.msra.mxu0 %v253
    %1321 = vmatprep.subr.mxu0 %v258
    %1322 = vmatpush1.msra.mxu0 %v257
    %1323 = vmatprep.subr.mxu0 %v262
    %1324 = vmatpush1.msra.mxu0 %v261
    %1325 = vmatprep.subr.mxu0 %v266
    %1326 = vmatpush1.msra.mxu0 %v265
    %1327 = vmatprep.subr.mxu0 %v270
    %1328 = vmatpush1.msra.mxu0 %v269
    %1329 = vmatprep.subr.mxu0 %v274
    %1330 = vmatpush1.msra.mxu0 %v273
    %1331 = vmatprep.subr.mxu0 %v278
    %1332 = vmatpush1.msra.mxu0 %v277
    %1333 = vmatprep.subr.mxu0 %v282
    %1334 = vmatpush1.msra.mxu0 %v281
    %1335 = vmatprep.subr.mxu0 %v286
    %1336 = vmatpush1.msra.mxu0 %v285
    %1337 = vmatprep.subr.mxu0 %v290
    %1338 = vmatpush1.msra.mxu0 %v289
    %1339 = vmatprep.subr.mxu0 %v294
    %1340 = vmatpush1.msra.mxu0 %v293
    %1341 = vmatprep.subr.mxu0 0.0
    %1342 = vmatpush1.msra.mxu0 0.0
    %1343 = vmatprep.subr.mxu0 0.0
    %1344 = vmatpush1.msra.mxu0 0.0
    %1345 = vmatprep.subr.mxu0 0.0
    %1346 = vmatpush1.msra.mxu0 0.0
    %1347 = vmatprep.subr.mxu0 0.0
    %1348 = vmatpush1.msra.mxu0 0.0
    %1349 = vmatprep.subr.mxu0 0.0
    %1350 = vmatpush1.msra.mxu0 0.0
    %1351 = vmatprep.subr.mxu0 0.0
    %1352 = vmatpush1.msra.mxu0 0.0
    %1353 = vmatprep.subr.mxu0 0.0
    %1354 = vmatpush1.msra.mxu0 0.0
    %1355 = vmatprep.subr.mxu0 0.0
    %1356 = vmatpush1.msra.mxu0 0.0
    %1357 = vmatprep.subr.mxu0 0.0
    %1358 = vmatpush1.msra.mxu0 0.0
    %1359 = vmatprep.subr.mxu0 0.0
    %1360 = vmatpush1.msra.mxu0 0.0
    %1361 = vmatprep.subr.mxu0 0.0
    %1362 = vmatpush1.msra.mxu0 0.0
    %1363 = vmatprep.subr.mxu0 0.0
    %1364 = vmatpush1.msra.mxu0 0.0
    %1365 = vmatprep.subr.mxu0 0.0
    %1366 = vmatpush1.msra.mxu0 0.0
    %1367 = vmatprep.subr.mxu0 0.0
    %1368 = vmatpush1.msra.mxu0 0.0
    %1369 = vmatprep.subr.mxu0 0.0
    %1370 = vmatpush1.msra.mxu0 0.0
    %1371 = vmatprep.subr.mxu0 0.0
    %1372 = vmatpush1.msra.mxu0 0.0
    %1373 = vmatprep.mubr.f32.mxu0 0.0
    %1374 = vmatmul.mubr.f32.gmra.mrb[0].mxu0 %v1142
    %v1375 = vpop.f32.mrb[0].mxu0
    %v1376 = vadd.f32 0.0, %v1375
    %v1377 = vpop.f32.mrb[0].mxu0
    %v1378 = vadd.f32 0.0, %v1377
    %1379 = vdwg.mxu0
    %1380 = vmatprep.subr.mxu0 %v236
    %1381 = vmatpush1.msra.mxu0 %v235
    %1382 = vmatprep.subr.mxu0 %v240
    %1383 = vmatpush1.msra.mxu0 %v239
    %1384 = vmatprep.subr.mxu0 %v244
    %1385 = vmatpush1.msra.mxu0 %v243
    %1386 = vmatprep.subr.mxu0 %v248
    %1387 = vmatpush1.msra.mxu0 %v247
    %1388 = vmatprep.subr.mxu0 %v252
    %1389 = vmatpush1.msra.mxu0 %v251
    %1390 = vmatprep.subr.mxu0 %v256
    %1391 = vmatpush1.msra.mxu0 %v255
    %1392 = vmatprep.subr.mxu0 %v260
    %1393 = vmatpush1.msra.mxu0 %v259
    %1394 = vmatprep.subr.mxu0 %v264
    %1395 = vmatpush1.msra.mxu0 %v263
    %1396 = vmatprep.subr.mxu0 %v268
    %1397 = vmatpush1.msra.mxu0 %v267
    %1398 = vmatprep.subr.mxu0 %v272
    %1399 = vmatpush1.msra.mxu0 %v271
    %1400 = vmatprep.subr.mxu0 %v276
    %1401 = vmatpush1.msra.mxu0 %v275
    %1402 = vmatprep.subr.mxu0 %v280
    %1403 = vmatpush1.msra.mxu0 %v279
    %1404 = vmatprep.subr.mxu0 %v284
    %1405 = vmatpush1.msra.mxu0 %v283
    %1406 = vmatprep.subr.mxu0 %v288
    %1407 = vmatpush1.msra.mxu0 %v287
    %1408 = vmatprep.subr.mxu0 %v292
    %1409 = vmatpush1.msra.mxu0 %v291
    %1410 = vmatprep.subr.mxu0 %v296
    %1411 = vmatpush1.msra.mxu0 %v295
    %1412 = vmatprep.subr.mxu0 0.0
    %1413 = vmatpush1.msra.mxu0 0.0
    %1414 = vmatprep.subr.mxu0 0.0
    %1415 = vmatpush1.msra.mxu0 0.0
    %1416 = vmatprep.subr.mxu0 0.0
    %1417 = vmatpush1.msra.mxu0 0.0
    %1418 = vmatprep.subr.mxu0 0.0
    %1419 = vmatpush1.msra.mxu0 0.0
    %1420 = vmatprep.subr.mxu0 0.0
    %1421 = vmatpush1.msra.mxu0 0.0
    %1422 = vmatprep.subr.mxu0 0.0
    %1423 = vmatpush1.msra.mxu0 0.0
    %1424 = vmatprep.subr.mxu0 0.0
    %1425 = vmatpush1.msra.mxu0 0.0
    %1426 = vmatprep.subr.mxu0 0.0
    %1427 = vmatpush1.msra.mxu0 0.0
    %1428 = vmatprep.subr.mxu0 0.0
    %1429 = vmatpush1.msra.mxu0 0.0
    %1430 = vmatprep.subr.mxu0 0.0
    %1431 = vmatpush1.msra.mxu0 0.0
    %1432 = vmatprep.subr.mxu0 0.0
    %1433 = vmatpush1.msra.mxu0 0.0
    %1434 = vmatprep.subr.mxu0 0.0
    %1435 = vmatpush1.msra.mxu0 0.0
    %1436 = vmatprep.subr.mxu0 0.0
    %1437 = vmatpush1.msra.mxu0 0.0
    %1438 = vmatprep.subr.mxu0 0.0
    %1439 = vmatpush1.msra.mxu0 0.0
    %1440 = vmatprep.subr.mxu0 0.0
    %1441 = vmatpush1.msra.mxu0 0.0
    %1442 = vmatprep.subr.mxu0 0.0
    %1443 = vmatpush1.msra.mxu0 0.0
    %1444 = vmatprep.mubr.f32.mxu0 0.0
    %1445 = vmatmul.mubr.f32.gmra.mrb[0].mxu0 %v1142
    %v1446 = vpop.f32.mrb[0].mxu0
    %v1447 = vadd.f32 0.0, %v1446
    %v1448 = vpop.f32.mrb[0].mxu0
    %v1449 = vadd.f32 0.0, %v1448
    %1450 = vdwg.mxu0
    %v1451 = vadd.f32 %v213, %v1376
    %v1452 = vadd.f32 %v214, %v1378
    %v1453 = vadd.f32 %v215, %v1447
    %v1454 = vadd.f32 %v216, %v1449
    %v1455 = vxor.u32 %v1451, 2147483648
    %v1456 = vmul.f32 %v1455, 1.442695
    %v1457 = vpow.pop %v1456
    %v1458 = vadd.f32 %v1457, 1.0
    %v1459 = vrcp.pop %v1458
    %v1460 = vmul.f32 1.0, %v1459
    %v1461 = vxor.u32 %v1452, 2147483648
    %v1462 = vmul.f32 %v1461, 1.442695
    %v1463 = vpow.pop %v1462
    %v1464 = vadd.f32 %v1463, 1.0
    %v1465 = vrcp.pop %v1464
    %v1466 = vmul.f32 1.0, %v1465
    %v1467 = vtanh.pop %v1453
    %v1468 = vxor.u32 %v1454, 2147483648
    %v1469 = vmul.f32 %v1468, 1.442695
    %v1470 = vpow.pop %v1469
    %v1471 = vadd.f32 %v1470, 1.0
    %v1472 = vrcp.pop %v1471
    %v1473 = vmul.f32 1.0, %v1472
    %v1474 = vmul.f32 %v1466, %v1140
    %v1475 = vmul.f32 %v1460, %v1467
    %v1476 = vadd.f32 %v1474, %v1475
    %v1477 = vtanh.pop %v1476
    %v1478 = vmul.f32 %v1473, %v1477
    %1479 = vmatprep.subr.mxu0 %v298
    %1480 = vmatpush1.msra.mxu0 %v297
    %1481 = vmatprep.subr.mxu0 %v302
    %1482 = vmatpush1.msra.mxu0 %v301
    %1483 = vmatprep.subr.mxu0 %v306
    %1484 = vmatpush1.msra.mxu0 %v305
    %1485 = vmatprep.subr.mxu0 %v310
    %1486 = vmatpush1.msra.mxu0 %v309
    %1487 = vmatprep.subr.mxu0 %v314
    %1488 = vmatpush1.msra.mxu0 %v313
    %1489 = vmatprep.subr.mxu0 %v318
    %1490 = vmatpush1.msra.mxu0 %v317
    %1491 = vmatprep.subr.mxu0 %v322
    %1492 = vmatpush1.msra.mxu0 %v321
    %1493 = vmatprep.subr.mxu0 %v326
    %1494 = vmatpush1.msra.mxu0 %v325
    %1495 = vmatprep.subr.mxu0 %v330
    %1496 = vmatpush1.msra.mxu0 %v329
    %1497 = vmatprep.subr.mxu0 %v334
    %1498 = vmatpush1.msra.mxu0 %v333
    %1499 = vmatprep.subr.mxu0 %v338
    %1500 = vmatpush1.msra.mxu0 %v337
    %1501 = vmatprep.subr.mxu0 %v342
    %1502 = vmatpush1.msra.mxu0 %v341
    %1503 = vmatprep.subr.mxu0 %v346
    %1504 = vmatpush1.msra.mxu0 %v345
    %1505 = vmatprep.subr.mxu0 %v350
    %1506 = vmatpush1.msra.mxu0 %v349
    %1507 = vmatprep.subr.mxu0 %v354
    %1508 = vmatpush1.msra.mxu0 %v353
    %1509 = vmatprep.subr.mxu0 %v358
    %1510 = vmatpush1.msra.mxu0 %v357
    %1511 = vmatprep.subr.mxu0 %v362
    %1512 = vmatpush1.msra.mxu0 %v361
    %1513 = vmatprep.subr.mxu0 %v366
    %1514 = vmatpush1.msra.mxu0 %v365
    %1515 = vmatprep.subr.mxu0 %v370
    %1516 = vmatpush1.msra.mxu0 %v369
    %1517 = vmatprep.subr.mxu0 %v374
    %1518 = vmatpush1.msra.mxu0 %v373
    %1519 = vmatprep.subr.mxu0 %v378
    %1520 = vmatpush1.msra.mxu0 %v377
    %1521 = vmatprep.subr.mxu0 %v382
    %1522 = vmatpush1.msra.mxu0 %v381
    %1523 = vmatprep.subr.mxu0 %v386
    %1524 = vmatpush1.msra.mxu0 %v385
    %1525 = vmatprep.subr.mxu0 %v390
    %1526 = vmatpush1.msra.mxu0 %v389
    %1527 = vmatprep.subr.mxu0 %v394
    %1528 = vmatpush1.msra.mxu0 %v393
    %1529 = vmatprep.subr.mxu0 %v398
    %1530 = vmatpush1.msra.mxu0 %v397
    %1531 = vmatprep.subr.mxu0 %v402
    %1532 = vmatpush1.msra.mxu0 %v401
    %1533 = vmatprep.subr.mxu0 %v406
    %1534 = vmatpush1.msra.mxu0 %v405
    %1535 = vmatprep.subr.mxu0 %v410
    %1536 = vmatpush1.msra.mxu0 %v409
    %1537 = vmatprep.subr.mxu0 %v414
    %1538 = vmatpush1.msra.mxu0 %v413
    %1539 = vmatprep.subr.mxu0 %v418
    %1540 = vmatpush1.msra.mxu0 %v417
    %1541 = vmatprep.subr.mxu0 %v422
    %1542 = vmatpush1.msra.mxu0 %v421
    %1543 = vmatprep.mubr.f32.mxu0 %v1308
    %1544 = vmatmul.mubr.f32.gmra.mrb[0].mxu0 %v1478
    %v1545 = vpop.f32.mrb[0].mxu0
    %v1546 = vadd.f32 %v454, %v1545
    %v1547 = vpop.f32.mrb[0].mxu0
    %v1548 = vadd.f32 %v458, %v1547
    %1549 = vdwg.mxu0
    %1550 = vmatprep.subr.mxu0 %v300
    %1551 = vmatpush1.msra.mxu0 %v299
    %1552 = vmatprep.subr.mxu0 %v304
    %1553 = vmatpush1.msra.mxu0 %v303
    %1554 = vmatprep.subr.mxu0 %v308
    %1555 = vmatpush1.msra.mxu0 %v307
    %1556 = vmatprep.subr.mxu0 %v312
    %1557 = vmatpush1.msra.mxu0 %v311
    %1558 = vmatprep.subr.mxu0 %v316
    %1559 = vmatpush1.msra.mxu0 %v315
    %1560 = vmatprep.subr.mxu0 %v320
    %1561 = vmatpush1.msra.mxu0 %v319
    %1562 = vmatprep.subr.mxu0 %v324
    %1563 = vmatpush1.msra.mxu0 %v323
    %1564 = vmatprep.subr.mxu0 %v328
    %1565 = vmatpush1.msra.mxu0 %v327
    %1566 = vmatprep.subr.mxu0 %v332
    %1567 = vmatpush1.msra.mxu0 %v331
    %1568 = vmatprep.subr.mxu0 %v336
    %1569 = vmatpush1.msra.mxu0 %v335
    %1570 = vmatprep.subr.mxu0 %v340
    %1571 = vmatpush1.msra.mxu0 %v339
    %1572 = vmatprep.subr.mxu0 %v344
    %1573 = vmatpush1.msra.mxu0 %v343
    %1574 = vmatprep.subr.mxu0 %v348
    %1575 = vmatpush1.msra.mxu0 %v347
    %1576 = vmatprep.subr.mxu0 %v352
    %1577 = vmatpush1.msra.mxu0 %v351
    %1578 = vmatprep.subr.mxu0 %v356
    %1579 = vmatpush1.msra.mxu0 %v355
    %1580 = vmatprep.subr.mxu0 %v360
    %1581 = vmatpush1.msra.mxu0 %v359
    %1582 = vmatprep.subr.mxu0 %v364
    %1583 = vmatpush1.msra.mxu0 %v363
    %1584 = vmatprep.subr.mxu0 %v368
    %1585 = vmatpush1.msra.mxu0 %v367
    %1586 = vmatprep.subr.mxu0 %v372
    %1587 = vmatpush1.msra.mxu0 %v371
    %1588 = vmatprep.subr.mxu0 %v376
    %1589 = vmatpush1.msra.mxu0 %v375
    %1590 = vmatprep.subr.mxu0 %v380
    %1591 = vmatpush1.msra.mxu0 %v379
    %1592 = vmatprep.subr.mxu0 %v384
    %1593 = vmatpush1.msra.mxu0 %v383
    %1594 = vmatprep.subr.mxu0 %v388
    %1595 = vmatpush1.msra.mxu0 %v387
    %1596 = vmatprep.subr.mxu0 %v392
    %1597 = vmatpush1.msra.mxu0 %v391
    %1598 = vmatprep.subr.mxu0 %v396
    %1599 = vmatpush1.msra.mxu0 %v395
    %1600 = vmatprep.subr.mxu0 %v400
    %1601 = vmatpush1.msra.mxu0 %v399
    %1602 = vmatprep.subr.mxu0 %v404
    %1603 = vmatpush1.msra.mxu0 %v403
    %1604 = vmatprep.subr.mxu0 %v408
    %1605 = vmatpush1.msra.mxu0 %v407
    %1606 = vmatprep.subr.mxu0 %v412
    %1607 = vmatpush1.msra.mxu0 %v411
    %1608 = vmatprep.subr.mxu0 %v416
    %1609 = vmatpush1.msra.mxu0 %v415
    %1610 = vmatprep.subr.mxu0 %v420
    %1611 = vmatpush1.msra.mxu0 %v419
    %1612 = vmatprep.subr.mxu0 %v424
    %1613 = vmatpush1.msra.mxu0 %v423
    %1614 = vmatprep.mubr.f32.mxu0 %v1308
    %1615 = vmatmul.mubr.f32.gmra.mrb[0].mxu0 %v1478
    %v1616 = vpop.f32.mrb[0].mxu0
    %v1617 = vadd.f32 %v462, %v1616
    %v1618 = vpop.f32.mrb[0].mxu0
    %v1619 = vadd.f32 %v466, %v1618
    %1620 = vdwg.mxu0
    %v1621 = vxor.u32 %v1546, 2147483648
    %v1622 = vmul.f32 %v1621, 1.442695
    %v1623 = vpow.pop %v1622
    %v1624 = vadd.f32 %v1623, 1.0
    %v1625 = vrcp.pop %v1624
    %v1626 = vmul.f32 1.0, %v1625
    %v1627 = vxor.u32 %v1548, 2147483648
    %v1628 = vmul.f32 %v1627, 1.442695
    %v1629 = vpow.pop %v1628
    %v1630 = vadd.f32 %v1629, 1.0
    %v1631 = vrcp.pop %v1630
    %v1632 = vmul.f32 1.0, %v1631
    %v1633 = vtanh.pop %v1617
    %v1634 = vxor.u32 %v1619, 2147483648
    %v1635 = vmul.f32 %v1634, 1.442695
    %v1636 = vpow.pop %v1635
    %v1637 = vadd.f32 %v1636, 1.0
    %v1638 = vrcp.pop %v1637
    %v1639 = vmul.f32 1.0, %v1638
    %v1640 = vmul.f32 %v1632, %v1306
    %v1641 = vmul.f32 %v1626, %v1633
    %v1642 = vadd.f32 %v1640, %v1641
    %v1643 = vtanh.pop %v1642
    %v1644 = vmul.f32 %v1639, %v1643
    %1645 = vmatprep.subr.mxu0 %v234
    %1646 = vmatpush1.msra.mxu0 %v233
    %1647 = vmatprep.subr.mxu0 %v238
    %1648 = vmatpush1.msra.mxu0 %v237
    %1649 = vmatprep.subr.mxu0 %v242
    %1650 = vmatpush1.msra.mxu0 %v241
    %1651 = vmatprep.subr.mxu0 %v246
    %1652 = vmatpush1.msra.mxu0 %v245
    %1653 = vmatprep.subr.mxu0 %v250
    %1654 = vmatpush1.msra.mxu0 %v249
    %1655 = vmatprep.subr.mxu0 %v254
    %1656 = vmatpush1.msra.mxu0 %v253
    %1657 = vmatprep.subr.mxu0 %v258
    %1658 = vmatpush1.msra.mxu0 %v257
    %1659 = vmatprep.subr.mxu0 %v262
    %1660 = vmatpush1.msra.mxu0 %v261
    %1661 = vmatprep.subr.mxu0 %v266
    %1662 = vmatpush1.msra.mxu0 %v265
    %1663 = vmatprep.subr.mxu0 %v270
    %1664 = vmatpush1.msra.mxu0 %v269
    %1665 = vmatprep.subr.mxu0 %v274
    %1666 = vmatpush1.msra.mxu0 %v273
    %1667 = vmatprep.subr.mxu0 %v278
    %1668 = vmatpush1.msra.mxu0 %v277
    %1669 = vmatprep.subr.mxu0 %v282
    %1670 = vmatpush1.msra.mxu0 %v281
    %1671 = vmatprep.subr.mxu0 %v286
    %1672 = vmatpush1.msra.mxu0 %v285
    %1673 = vmatprep.subr.mxu0 %v290
    %1674 = vmatpush1.msra.mxu0 %v289
    %1675 = vmatprep.subr.mxu0 %v294
    %1676 = vmatpush1.msra.mxu0 %v293
    %1677 = vmatprep.subr.mxu0 0.0
    %1678 = vmatpush1.msra.mxu0 0.0
    %1679 = vmatprep.subr.mxu0 0.0
    %1680 = vmatpush1.msra.mxu0 0.0
    %1681 = vmatprep.subr.mxu0 0.0
    %1682 = vmatpush1.msra.mxu0 0.0
    %1683 = vmatprep.subr.mxu0 0.0
    %1684 = vmatpush1.msra.mxu0 0.0
    %1685 = vmatprep.subr.mxu0 0.0
    %1686 = vmatpush1.msra.mxu0 0.0
    %1687 = vmatprep.subr.mxu0 0.0
    %1688 = vmatpush1.msra.mxu0 0.0
    %1689 = vmatprep.subr.mxu0 0.0
    %1690 = vmatpush1.msra.mxu0 0.0
    %1691 = vmatprep.subr.mxu0 0.0
    %1692 = vmatpush1.msra.mxu0 0.0
    %1693 = vmatprep.subr.mxu0 0.0
    %1694 = vmatpush1.msra.mxu0 0.0
    %1695 = vmatprep.subr.mxu0 0.0
    %1696 = vmatpush1.msra.mxu0 0.0
    %1697 = vmatprep.subr.mxu0 0.0
    %1698 = vmatpush1.msra.mxu0 0.0
    %1699 = vmatprep.subr.mxu0 0.0
    %1700 = vmatpush1.msra.mxu0 0.0
    %1701 = vmatprep.subr.mxu0 0.0
    %1702 = vmatpush1.msra.mxu0 0.0
    %1703 = vmatprep.subr.mxu0 0.0
    %1704 = vmatpush1.msra.mxu0 0.0
    %1705 = vmatprep.subr.mxu0 0.0
    %1706 = vmatpush1.msra.mxu0 0.0
    %1707 = vmatprep.subr.mxu0 0.0
    %1708 = vmatpush1.msra.mxu0 0.0
    %1709 = vmatprep.mubr.f32.mxu0 0.0
    %1710 = vmatmul.mubr.f32.gmra.mrb[0].mxu0 %v1478
    %v1711 = vpop.f32.mrb[0].mxu0
    %v1712 = vadd.f32 0.0, %v1711
    %v1713 = vpop.f32.mrb[0].mxu0
    %v1714 = vadd.f32 0.0, %v1713
    %1715 = vdwg.mxu0
    %1716 = vmatprep.subr.mxu0 %v236
    %1717 = vmatpush1.msra.mxu0 %v235
    %1718 = vmatprep.subr.mxu0 %v240
    %1719 = vmatpush1.msra.mxu0 %v239
    %1720 = vmatprep.subr.mxu0 %v244
    %1721 = vmatpush1.msra.mxu0 %v243
    %1722 = vmatprep.subr.mxu0 %v248
    %1723 = vmatpush1.msra.mxu0 %v247
    %1724 = vmatprep.subr.mxu0 %v252
    %1725 = vmatpush1.msra.mxu0 %v251
    %1726 = vmatprep.subr.mxu0 %v256
    %1727 = vmatpush1.msra.mxu0 %v255
    %1728 = vmatprep.subr.mxu0 %v260
    %1729 = vmatpush1.msra.mxu0 %v259
    %1730 = vmatprep.subr.mxu0 %v264
    %1731 = vmatpush1.msra.mxu0 %v263
    %1732 = vmatprep.subr.mxu0 %v268
    %1733 = vmatpush1.msra.mxu0 %v267
    %1734 = vmatprep.subr.mxu0 %v272
    %1735 = vmatpush1.msra.mxu0 %v271
    %1736 = vmatprep.subr.mxu0 %v276
    %1737 = vmatpush1.msra.mxu0 %v275
    %1738 = vmatprep.subr.mxu0 %v280
    %1739 = vmatpush1.msra.mxu0 %v279
    %1740 = vmatprep.subr.mxu0 %v284
    %1741 = vmatpush1.msra.mxu0 %v283
    %1742 = vmatprep.subr.mxu0 %v288
    %1743 = vmatpush1.msra.mxu0 %v287
    %1744 = vmatprep.subr.mxu0 %v292
    %1745 = vmatpush1.msra.mxu0 %v291
    %1746 = vmatprep.subr.mxu0 %v296
    %1747 = vmatpush1.msra.mxu0 %v295
    %1748 = vmatprep.subr.mxu0 0.0
    %1749 = vmatpush1.msra.mxu0 0.0
    %1750 = vmatprep.subr.mxu0 0.0
    %1751 = vmatpush1.msra.mxu0 0.0
    %1752 = vmatprep.subr.mxu0 0.0
    %1753 = vmatpush1.msra.mxu0 0.0
    %1754 = vmatprep.subr.mxu0 0.0
    %1755 = vmatpush1.msra.mxu0 0.0
    %1756 = vmatprep.subr.mxu0 0.0
    %1757 = vmatpush1.msra.mxu0 0.0
    %1758 = vmatprep.subr.mxu0 0.0
    %1759 = vmatpush1.msra.mxu0 0.0
    %1760 = vmatprep.subr.mxu0 0.0
    %1761 = vmatpush1.msra.mxu0 0.0
    %1762 = vmatprep.subr.mxu0 0.0
    %1763 = vmatpush1.msra.mxu0 0.0
    %1764 = vmatprep.subr.mxu0 0.0
    %1765 = vmatpush1.msra.mxu0 0.0
    %1766 = vmatprep.subr.mxu0 0.0
    %1767 = vmatpush1.msra.mxu0 0.0
    %1768 = vmatprep.subr.mxu0 0.0
    %1769 = vmatpush1.msra.mxu0 0.0
    %1770 = vmatprep.subr.mxu0 0.0
    %1771 = vmatpush1.msra.mxu0 0.0
    %1772 = vmatprep.subr.mxu0 0.0
    %1773 = vmatpush1.msra.mxu0 0.0
    %1774 = vmatprep.subr.mxu0 0.0
    %1775 = vmatpush1.msra.mxu0 0.0
    %1776 = vmatprep.subr.mxu0 0.0
    %1777 = vmatpush1.msra.mxu0 0.0
    %1778 = vmatprep.subr.mxu0 0.0
    %1779 = vmatpush1.msra.mxu0 0.0
    %1780 = vmatprep.mubr.f32.mxu0 0.0
    %1781 = vmatmul.mubr.f32.gmra.mrb[0].mxu0 %v1478
    %v1782 = vpop.f32.mrb[0].mxu0
    %v1783 = vadd.f32 0.0, %v1782
    %v1784 = vpop.f32.mrb[0].mxu0
    %v1785 = vadd.f32 0.0, %v1784
    %1786 = vdwg.mxu0
    %v1787 = vadd.f32 %v217, %v1712
    %v1788 = vadd.f32 %v218, %v1714
    %v1789 = vadd.f32 %v219, %v1783
    %v1790 = vadd.f32 %v220, %v1785
    %v1791 = vxor.u32 %v1787, 2147483648
    %v1792 = vmul.f32 %v1791, 1.442695
    %v1793 = vpow.pop %v1792
    %v1794 = vadd.f32 %v1793, 1.0
    %v1795 = vrcp.pop %v1794
    %v1796 = vmul.f32 1.0, %v1795
    %v1797 = vxor.u32 %v1788, 2147483648
    %v1798 = vmul.f32 %v1797, 1.442695
    %v1799 = vpow.pop %v1798
    %v1800 = vadd.f32 %v1799, 1.0
    %v1801 = vrcp.pop %v1800
    %v1802 = vmul.f32 1.0, %v1801
    %v1803 = vtanh.pop %v1789
    %v1804 = vxor.u32 %v1790, 2147483648
    %v1805 = vmul.f32 %v1804, 1.442695
    %v1806 = vpow.pop %v1805
    %v1807 = vadd.f32 %v1806, 1.0
    %v1808 = vrcp.pop %v1807
    %v1809 = vmul.f32 1.0, %v1808
    %v1810 = vmul.f32 %v1802, %v1476
    %v1811 = vmul.f32 %v1796, %v1803
    %v1812 = vadd.f32 %v1810, %v1811
    %v1813 = vtanh.pop %v1812
    %v1814 = vmul.f32 %v1809, %v1813
    %1815 = vmatprep.subr.mxu0 %v298
    %1816 = vmatpush1.msra.mxu0 %v297
    %1817 = vmatprep.subr.mxu0 %v302
    %1818 = vmatpush1.msra.mxu0 %v301
    %1819 = vmatprep.subr.mxu0 %v306
    %1820 = vmatpush1.msra.mxu0 %v305
    %1821 = vmatprep.subr.mxu0 %v310
    %1822 = vmatpush1.msra.mxu0 %v309
    %1823 = vmatprep.subr.mxu0 %v314
    %1824 = vmatpush1.msra.mxu0 %v313
    %1825 = vmatprep.subr.mxu0 %v318
    %1826 = vmatpush1.msra.mxu0 %v317
    %1827 = vmatprep.subr.mxu0 %v322
    %1828 = vmatpush1.msra.mxu0 %v321
    %1829 = vmatprep.subr.mxu0 %v326
    %1830 = vmatpush1.msra.mxu0 %v325
    %1831 = vmatprep.subr.mxu0 %v330
    %1832 = vmatpush1.msra.mxu0 %v329
    %1833 = vmatprep.subr.mxu0 %v334
    %1834 = vmatpush1.msra.mxu0 %v333
    %1835 = vmatprep.subr.mxu0 %v338
    %1836 = vmatpush1.msra.mxu0 %v337
    %1837 = vmatprep.subr.mxu0 %v342
    %1838 = vmatpush1.msra.mxu0 %v341
    %1839 = vmatprep.subr.mxu0 %v346
    %1840 = vmatpush1.msra.mxu0 %v345
    %1841 = vmatprep.subr.mxu0 %v350
    %1842 = vmatpush1.msra.mxu0 %v349
    %1843 = vmatprep.subr.mxu0 %v354
    %1844 = vmatpush1.msra.mxu0 %v353
    %1845 = vmatprep.subr.mxu0 %v358
    %1846 = vmatpush1.msra.mxu0 %v357
    %1847 = vmatprep.subr.mxu0 %v362
    %1848 = vmatpush1.msra.mxu0 %v361
    %1849 = vmatprep.subr.mxu0 %v366
    %1850 = vmatpush1.msra.mxu0 %v365
    %1851 = vmatprep.subr.mxu0 %v370
    %1852 = vmatpush1.msra.mxu0 %v369
    %1853 = vmatprep.subr.mxu0 %v374
    %1854 = vmatpush1.msra.mxu0 %v373
    %1855 = vmatprep.subr.mxu0 %v378
    %1856 = vmatpush1.msra.mxu0 %v377
    %1857 = vmatprep.subr.mxu0 %v382
    %1858 = vmatpush1.msra.mxu0 %v381
    %1859 = vmatprep.subr.mxu0 %v386
    %1860 = vmatpush1.msra.mxu0 %v385
    %1861 = vmatprep.subr.mxu0 %v390
    %1862 = vmatpush1.msra.mxu0 %v389
    %1863 = vmatprep.subr.mxu0 %v394
    %1864 = vmatpush1.msra.mxu0 %v393
    %1865 = vmatprep.subr.mxu0 %v398
    %1866 = vmatpush1.msra.mxu0 %v397
    %1867 = vmatprep.subr.mxu0 %v402
    %1868 = vmatpush1.msra.mxu0 %v401
    %1869 = vmatprep.subr.mxu0 %v406
    %1870 = vmatpush1.msra.mxu0 %v405
    %1871 = vmatprep.subr.mxu0 %v410
    %1872 = vmatpush1.msra.mxu0 %v409
    %1873 = vmatprep.subr.mxu0 %v414
    %1874 = vmatpush1.msra.mxu0 %v413
    %1875 = vmatprep.subr.mxu0 %v418
    %1876 = vmatpush1.msra.mxu0 %v417
    %1877 = vmatprep.subr.mxu0 %v422
    %1878 = vmatpush1.msra.mxu0 %v421
    %1879 = vmatprep.mubr.f32.mxu0 %v1644
    %1880 = vmatmul.mubr.f32.gmra.mrb[0].mxu0 %v1814
    %v1881 = vpop.f32.mrb[0].mxu0
    %v1882 = vadd.f32 %v454, %v1881
    %v1883 = vpop.f32.mrb[0].mxu0
    %v1884 = vadd.f32 %v458, %v1883
    %1885 = vdwg.mxu0
    %1886 = vmatprep.subr.mxu0 %v300
    %1887 = vmatpush1.msra.mxu0 %v299
    %1888 = vmatprep.subr.mxu0 %v304
    %1889 = vmatpush1.msra.mxu0 %v303
    %1890 = vmatprep.subr.mxu0 %v308
    %1891 = vmatpush1.msra.mxu0 %v307
    %1892 = vmatprep.subr.mxu0 %v312
    %1893 = vmatpush1.msra.mxu0 %v311
    %1894 = vmatprep.subr.mxu0 %v316
    %1895 = vmatpush1.msra.mxu0 %v315
    %1896 = vmatprep.subr.mxu0 %v320
    %1897 = vmatpush1.msra.mxu0 %v319
    %1898 = vmatprep.subr.mxu0 %v324
    %1899 = vmatpush1.msra.mxu0 %v323
    %1900 = vmatprep.subr.mxu0 %v328
    %1901 = vmatpush1.msra.mxu0 %v327
    %1902 = vmatprep.subr.mxu0 %v332
    %1903 = vmatpush1.msra.mxu0 %v331
    %1904 = vmatprep.subr.mxu0 %v336
    %1905 = vmatpush1.msra.mxu0 %v335
    %1906 = vmatprep.subr.mxu0 %v340
    %1907 = vmatpush1.msra.mxu0 %v339
    %1908 = vmatprep.subr.mxu0 %v344
    %1909 = vmatpush1.msra.mxu0 %v343
    %1910 = vmatprep.subr.mxu0 %v348
    %1911 = vmatpush1.msra.mxu0 %v347
    %1912 = vmatprep.subr.mxu0 %v352
    %1913 = vmatpush1.msra.mxu0 %v351
    %1914 = vmatprep.subr.mxu0 %v356
    %1915 = vmatpush1.msra.mxu0 %v355
    %1916 = vmatprep.subr.mxu0 %v360
    %1917 = vmatpush1.msra.mxu0 %v359
    %1918 = vmatprep.subr.mxu0 %v364
    %1919 = vmatpush1.msra.mxu0 %v363
    %1920 = vmatprep.subr.mxu0 %v368
    %1921 = vmatpush1.msra.mxu0 %v367
    %1922 = vmatprep.subr.mxu0 %v372
    %1923 = vmatpush1.msra.mxu0 %v371
    %1924 = vmatprep.subr.mxu0 %v376
    %1925 = vmatpush1.msra.mxu0 %v375
    %1926 = vmatprep.subr.mxu0 %v380
    %1927 = vmatpush1.msra.mxu0 %v379
    %1928 = vmatprep.subr.mxu0 %v384
    %1929 = vmatpush1.msra.mxu0 %v383
    %1930 = vmatprep.subr.mxu0 %v388
    %1931 = vmatpush1.msra.mxu0 %v387
    %1932 = vmatprep.subr.mxu0 %v392
    %1933 = vmatpush1.msra.mxu0 %v391
    %1934 = vmatprep.subr.mxu0 %v396
    %1935 = vmatpush1.msra.mxu0 %v395
    %1936 = vmatprep.subr.mxu0 %v400
    %1937 = vmatpush1.msra.mxu0 %v399
    %1938 = vmatprep.subr.mxu0 %v404
    %1939 = vmatpush1.msra.mxu0 %v403
    %1940 = vmatprep.subr.mxu0 %v408
    %1941 = vmatpush1.msra.mxu0 %v407
    %1942 = vmatprep.subr.mxu0 %v412
    %1943 = vmatpush1.msra.mxu0 %v411
    %1944 = vmatprep.subr.mxu0 %v416
    %1945 = vmatpush1.msra.mxu0 %v415
    %1946 = vmatprep.subr.mxu0 %v420
    %1947 = vmatpush1.msra.mxu0 %v419
    %1948 = vmatprep.subr.mxu0 %v424
    %1949 = vmatpush1.msra.mxu0 %v423
    %1950 = vmatprep.mubr.f32.mxu0 %v1644
    %1951 = vmatmul.mubr.f32.gmra.mrb[0].mxu0 %v1814
    %v1952 = vpop.f32.mrb[0].mxu0
    %v1953 = vadd.f32 %v462, %v1952
    %v1954 = vpop.f32.mrb[0].mxu0
    %v1955 = vadd.f32 %v466, %v1954
    %1956 = vdwg.mxu0
    %v1957 = vxor.u32 %v1882, 2147483648
    %v1958 = vmul.f32 %v1957, 1.442695
    %v1959 = vpow.pop %v1958
    %v1960 = vadd.f32 %v1959, 1.0
    %v1961 = vrcp.pop %v1960
    %v1962 = vmul.f32 1.0, %v1961
    %v1963 = vxor.u32 %v1884, 2147483648
    %v1964 = vmul.f32 %v1963, 1.442695
    %v1965 = vpow.pop %v1964
    %v1966 = vadd.f32 %v1965, 1.0
    %v1967 = vrcp.pop %v1966
    %v1968 = vmul.f32 1.0, %v1967
    %v1969 = vtanh.pop %v1953
    %v1970 = vxor.u32 %v1955, 2147483648
    %v1971 = vmul.f32 %v1970, 1.442695
    %v1972 = vpow.pop %v1971
    %v1973 = vadd.f32 %v1972, 1.0
    %v1974 = vrcp.pop %v1973
    %v1975 = vmul.f32 1.0, %v1974
    %v1976 = vmul.f32 %v1968, %v1642
    %v1977 = vmul.f32 %v1962, %v1969
    %v1978 = vadd.f32 %v1976, %v1977
    %v1979 = vtanh.pop %v1978
    %v1980 = vmul.f32 %v1975, %v1979
    %1981 = vmatprep.subr.mxu0 %v234
    %1982 = vmatpush1.msra.mxu0 %v233
    %1983 = vmatprep.subr.mxu0 %v238
    %1984 = vmatpush1.msra.mxu0 %v237
    %1985 = vmatprep.subr.mxu0 %v242
    %1986 = vmatpush1.msra.mxu0 %v241
    %1987 = vmatprep.subr.mxu0 %v246
    %1988 = vmatpush1.msra.mxu0 %v245
    %1989 = vmatprep.subr.mxu0 %v250
    %1990 = vmatpush1.msra.mxu0 %v249
    %1991 = vmatprep.subr.mxu0 %v254
    %1992 = vmatpush1.msra.mxu0 %v253
    %1993 = vmatprep.subr.mxu0 %v258
    %1994 = vmatpush1.msra.mxu0 %v257
    %1995 = vmatprep.subr.mxu0 %v262
    %1996 = vmatpush1.msra.mxu0 %v261
    %1997 = vmatprep.subr.mxu0 %v266
    %1998 = vmatpush1.msra.mxu0 %v265
    %1999 = vmatprep.subr.mxu0 %v270
    %2000 = vmatpush1.msra.mxu0 %v269
    %2001 = vmatprep.subr.mxu0 %v274
    %2002 = vmatpush1.msra.mxu0 %v273
    %2003 = vmatprep.subr.mxu0 %v278
    %2004 = vmatpush1.msra.mxu0 %v277
    %2005 = vmatprep.subr.mxu0 %v282
    %2006 = vmatpush1.msra.mxu0 %v281
    %2007 = vmatprep.subr.mxu0 %v286
    %2008 = vmatpush1.msra.mxu0 %v285
    %2009 = vmatprep.subr.mxu0 %v290
    %2010 = vmatpush1.msra.mxu0 %v289
    %2011 = vmatprep.subr.mxu0 %v294
    %2012 = vmatpush1.msra.mxu0 %v293
    %2013 = vmatprep.subr.mxu0 0.0
    %2014 = vmatpush1.msra.mxu0 0.0
    %2015 = vmatprep.subr.mxu0 0.0
    %2016 = vmatpush1.msra.mxu0 0.0
    %2017 = vmatprep.subr.mxu0 0.0
    %2018 = vmatpush1.msra.mxu0 0.0
    %2019 = vmatprep.subr.mxu0 0.0
    %2020 = vmatpush1.msra.mxu0 0.0
    %2021 = vmatprep.subr.mxu0 0.0
    %2022 = vmatpush1.msra.mxu0 0.0
    %2023 = vmatprep.subr.mxu0 0.0
    %2024 = vmatpush1.msra.mxu0 0.0
    %2025 = vmatprep.subr.mxu0 0.0
    %2026 = vmatpush1.msra.mxu0 0.0
    %2027 = vmatprep.subr.mxu0 0.0
    %2028 = vmatpush1.msra.mxu0 0.0
    %2029 = vmatprep.subr.mxu0 0.0
    %2030 = vmatpush1.msra.mxu0 0.0
    %2031 = vmatprep.subr.mxu0 0.0
    %2032 = vmatpush1.msra.mxu0 0.0
    %2033 = vmatprep.subr.mxu0 0.0
    %2034 = vmatpush1.msra.mxu0 0.0
    %2035 = vmatprep.subr.mxu0 0.0
    %2036 = vmatpush1.msra.mxu0 0.0
    %2037 = vmatprep.subr.mxu0 0.0
    %2038 = vmatpush1.msra.mxu0 0.0
    %2039 = vmatprep.subr.mxu0 0.0
    %2040 = vmatpush1.msra.mxu0 0.0
    %2041 = vmatprep.subr.mxu0 0.0
    %2042 = vmatpush1.msra.mxu0 0.0
    %2043 = vmatprep.subr.mxu0 0.0
    %2044 = vmatpush1.msra.mxu0 0.0
    %2045 = vmatprep.mubr.f32.mxu0 0.0
    %2046 = vmatmul.mubr.f32.gmra.mrb[0].mxu0 %v1814
    %v2047 = vpop.f32.mrb[0].mxu0
    %v2048 = vadd.f32 0.0, %v2047
    %v2049 = vpop.f32.mrb[0].mxu0
    %v2050 = vadd.f32 0.0, %v2049
    %2051 = vdwg.mxu0
    %2052 = vmatprep.subr.mxu0 %v236
    %2053 = vmatpush1.msra.mxu0 %v235
    %2054 = vmatprep.subr.mxu0 %v240
    %2055 = vmatpush1.msra.mxu0 %v239
    %2056 = vmatprep.subr.mxu0 %v244
    %2057 = vmatpush1.msra.mxu0 %v243
    %2058 = vmatprep.subr.mxu0 %v248
    %2059 = vmatpush1.msra.mxu0 %v247
    %2060 = vmatprep.subr.mxu0 %v252
    %2061 = vmatpush1.msra.mxu0 %v251
    %2062 = vmatprep.subr.mxu0 %v256
    %2063 = vmatpush1.msra.mxu0 %v255
    %2064 = vmatprep.subr.mxu0 %v260
    %2065 = vmatpush1.msra.mxu0 %v259
    %2066 = vmatprep.subr.mxu0 %v264
    %2067 = vmatpush1.msra.mxu0 %v263
    %2068 = vmatprep.subr.mxu0 %v268
    %2069 = vmatpush1.msra.mxu0 %v267
    %2070 = vmatprep.subr.mxu0 %v272
    %2071 = vmatpush1.msra.mxu0 %v271
    %2072 = vmatprep.subr.mxu0 %v276
    %2073 = vmatpush1.msra.mxu0 %v275
    %2074 = vmatprep.subr.mxu0 %v280
    %2075 = vmatpush1.msra.mxu0 %v279
    %2076 = vmatprep.subr.mxu0 %v284
    %2077 = vmatpush1.msra.mxu0 %v283
    %2078 = vmatprep.subr.mxu0 %v288
    %2079 = vmatpush1.msra.mxu0 %v287
    %2080 = vmatprep.subr.mxu0 %v292
    %2081 = vmatpush1.msra.mxu0 %v291
    %2082 = vmatprep.subr.mxu0 %v296
    %2083 = vmatpush1.msra.mxu0 %v295
    %2084 = vmatprep.subr.mxu0 0.0
    %2085 = vmatpush1.msra.mxu0 0.0
    %2086 = vmatprep.subr.mxu0 0.0
    %2087 = vmatpush1.msra.mxu0 0.0
    %2088 = vmatprep.subr.mxu0 0.0
    %2089 = vmatpush1.msra.mxu0 0.0
    %2090 = vmatprep.subr.mxu0 0.0
    %2091 = vmatpush1.msra.mxu0 0.0
    %2092 = vmatprep.subr.mxu0 0.0
    %2093 = vmatpush1.msra.mxu0 0.0
    %2094 = vmatprep.subr.mxu0 0.0
    %2095 = vmatpush1.msra.mxu0 0.0
    %2096 = vmatprep.subr.mxu0 0.0
    %2097 = vmatpush1.msra.mxu0 0.0
    %2098 = vmatprep.subr.mxu0 0.0
    %2099 = vmatpush1.msra.mxu0 0.0
    %2100 = vmatprep.subr.mxu0 0.0
    %2101 = vmatpush1.msra.mxu0 0.0
    %2102 = vmatprep.subr.mxu0 0.0
    %2103 = vmatpush1.msra.mxu0 0.0
    %2104 = vmatprep.subr.mxu0 0.0
    %2105 = vmatpush1.msra.mxu0 0.0
    %2106 = vmatprep.subr.mxu0 0.0
    %2107 = vmatpush1.msra.mxu0 0.0
    %2108 = vmatprep.subr.mxu0 0.0
    %2109 = vmatpush1.msra.mxu0 0.0
    %2110 = vmatprep.subr.mxu0 0.0
    %2111 = vmatpush1.msra.mxu0 0.0
    %2112 = vmatprep.subr.mxu0 0.0
    %2113 = vmatpush1.msra.mxu0 0.0
    %2114 = vmatprep.subr.mxu0 0.0
    %2115 = vmatpush1.msra.mxu0 0.0
    %2116 = vmatprep.mubr.f32.mxu0 0.0
    %2117 = vmatmul.mubr.f32.gmra.mrb[0].mxu0 %v1814
    %v2118 = vpop.f32.mrb[0].mxu0
    %v2119 = vadd.f32 0.0, %v2118
    %v2120 = vpop.f32.mrb[0].mxu0
    %v2121 = vadd.f32 0.0, %v2120
    %2122 = vdwg.mxu0
    %v2123 = vadd.f32 %v221, %v2048
    %v2124 = vadd.f32 %v222, %v2050
    %v2125 = vadd.f32 %v223, %v2119
    %v2126 = vadd.f32 %v224, %v2121
    %v2127 = vxor.u32 %v2123, 2147483648
    %v2128 = vmul.f32 %v2127, 1.442695
    %v2129 = vpow.pop %v2128
    %v2130 = vadd.f32 %v2129, 1.0
    %v2131 = vrcp.pop %v2130
    %v2132 = vmul.f32 1.0, %v2131
    %v2133 = vxor.u32 %v2124, 2147483648
    %v2134 = vmul.f32 %v2133, 1.442695
    %v2135 = vpow.pop %v2134
    %v2136 = vadd.f32 %v2135, 1.0
    %v2137 = vrcp.pop %v2136
    %v2138 = vmul.f32 1.0, %v2137
    %v2139 = vtanh.pop %v2125
    %v2140 = vxor.u32 %v2126, 2147483648
    %v2141 = vmul.f32 %v2140, 1.442695
    %v2142 = vpow.pop %v2141
    %v2143 = vadd.f32 %v2142, 1.0
    %v2144 = vrcp.pop %v2143
    %v2145 = vmul.f32 1.0, %v2144
    %v2146 = vmul.f32 %v2138, %v1812
    %v2147 = vmul.f32 %v2132, %v2139
    %v2148 = vadd.f32 %v2146, %v2147
    %v2149 = vtanh.pop %v2148
    %v2150 = vmul.f32 %v2145, %v2149
    %2151 = vmatprep.subr.mxu0 %v298
    %2152 = vmatpush1.msra.mxu0 %v297
    %2153 = vmatprep.subr.mxu0 %v302
    %2154 = vmatpush1.msra.mxu0 %v301
    %2155 = vmatprep.subr.mxu0 %v306
    %2156 = vmatpush1.msra.mxu0 %v305
    %2157 = vmatprep.subr.mxu0 %v310
    %2158 = vmatpush1.msra.mxu0 %v309
    %2159 = vmatprep.subr.mxu0 %v314
    %2160 = vmatpush1.msra.mxu0 %v313
    %2161 = vmatprep.subr.mxu0 %v318
    %2162 = vmatpush1.msra.mxu0 %v317
    %2163 = vmatprep.subr.mxu0 %v322
    %2164 = vmatpush1.msra.mxu0 %v321
    %2165 = vmatprep.subr.mxu0 %v326
    %2166 = vmatpush1.msra.mxu0 %v325
    %2167 = vmatprep.subr.mxu0 %v330
    %2168 = vmatpush1.msra.mxu0 %v329
    %2169 = vmatprep.subr.mxu0 %v334
    %2170 = vmatpush1.msra.mxu0 %v333
    %2171 = vmatprep.subr.mxu0 %v338
    %2172 = vmatpush1.msra.mxu0 %v337
    %2173 = vmatprep.subr.mxu0 %v342
    %2174 = vmatpush1.msra.mxu0 %v341
    %2175 = vmatprep.subr.mxu0 %v346
    %2176 = vmatpush1.msra.mxu0 %v345
    %2177 = vmatprep.subr.mxu0 %v350
    %2178 = vmatpush1.msra.mxu0 %v349
    %2179 = vmatprep.subr.mxu0 %v354
    %2180 = vmatpush1.msra.mxu0 %v353
    %2181 = vmatprep.subr.mxu0 %v358
    %2182 = vmatpush1.msra.mxu0 %v357
    %2183 = vmatprep.subr.mxu0 %v362
    %2184 = vmatpush1.msra.mxu0 %v361
    %2185 = vmatprep.subr.mxu0 %v366
    %2186 = vmatpush1.msra.mxu0 %v365
    %2187 = vmatprep.subr.mxu0 %v370
    %2188 = vmatpush1.msra.mxu0 %v369
    %2189 = vmatprep.subr.mxu0 %v374
    %2190 = vmatpush1.msra.mxu0 %v373
    %2191 = vmatprep.subr.mxu0 %v378
    %2192 = vmatpush1.msra.mxu0 %v377
    %2193 = vmatprep.subr.mxu0 %v382
    %2194 = vmatpush1.msra.mxu0 %v381
    %2195 = vmatprep.subr.mxu0 %v386
    %2196 = vmatpush1.msra.mxu0 %v385
    %2197 = vmatprep.subr.mxu0 %v390
    %2198 = vmatpush1.msra.mxu0 %v389
    %2199 = vmatprep.subr.mxu0 %v394
    %2200 = vmatpush1.msra.mxu0 %v393
    %2201 = vmatprep.subr.mxu0 %v398
    %2202 = vmatpush1.msra.mxu0 %v397
    %2203 = vmatprep.subr.mxu0 %v402
    %2204 = vmatpush1.msra.mxu0 %v401
    %2205 = vmatprep.subr.mxu0 %v406
    %2206 = vmatpush1.msra.mxu0 %v405
    %2207 = vmatprep.subr.mxu0 %v410
    %2208 = vmatpush1.msra.mxu0 %v409
    %2209 = vmatprep.subr.mxu0 %v414
    %2210 = vmatpush1.msra.mxu0 %v413
    %2211 = vmatprep.subr.mxu0 %v418
    %2212 = vmatpush1.msra.mxu0 %v417
    %2213 = vmatprep.subr.mxu0 %v422
    %2214 = vmatpush1.msra.mxu0 %v421
    %2215 = vmatprep.mubr.f32.mxu0 %v1980
    %2216 = vmatmul.mubr.f32.gmra.mrb[0].mxu0 %v2150
    %v2217 = vpop.f32.mrb[0].mxu0
    %v2218 = vadd.f32 %v454, %v2217
    %v2219 = vpop.f32.mrb[0].mxu0
    %v2220 = vadd.f32 %v458, %v2219
    %2221 = vdwg.mxu0
    %2222 = vmatprep.subr.mxu0 %v300
    %2223 = vmatpush1.msra.mxu0 %v299
    %2224 = vmatprep.subr.mxu0 %v304
    %2225 = vmatpush1.msra.mxu0 %v303
    %2226 = vmatprep.subr.mxu0 %v308
    %2227 = vmatpush1.msra.mxu0 %v307
    %2228 = vmatprep.subr.mxu0 %v312
    %2229 = vmatpush1.msra.mxu0 %v311
    %2230 = vmatprep.subr.mxu0 %v316
    %2231 = vmatpush1.msra.mxu0 %v315
    %2232 = vmatprep.subr.mxu0 %v320
    %2233 = vmatpush1.msra.mxu0 %v319
    %2234 = vmatprep.subr.mxu0 %v324
    %2235 = vmatpush1.msra.mxu0 %v323
    %2236 = vmatprep.subr.mxu0 %v328
    %2237 = vmatpush1.msra.mxu0 %v327
    %2238 = vmatprep.subr.mxu0 %v332
    %2239 = vmatpush1.msra.mxu0 %v331
    %2240 = vmatprep.subr.mxu0 %v336
    %2241 = vmatpush1.msra.mxu0 %v335
    %2242 = vmatprep.subr.mxu0 %v340
    %2243 = vmatpush1.msra.mxu0 %v339
    %2244 = vmatprep.subr.mxu0 %v344
    %2245 = vmatpush1.msra.mxu0 %v343
    %2246 = vmatprep.subr.mxu0 %v348
    %2247 = vmatpush1.msra.mxu0 %v347
    %2248 = vmatprep.subr.mxu0 %v352
    %2249 = vmatpush1.msra.mxu0 %v351
    %2250 = vmatprep.subr.mxu0 %v356
    %2251 = vmatpush1.msra.mxu0 %v355
    %2252 = vmatprep.subr.mxu0 %v360
    %2253 = vmatpush1.msra.mxu0 %v359
    %2254 = vmatprep.subr.mxu0 %v364
    %2255 = vmatpush1.msra.mxu0 %v363
    %2256 = vmatprep.subr.mxu0 %v368
    %2257 = vmatpush1.msra.mxu0 %v367
    %2258 = vmatprep.subr.mxu0 %v372
    %2259 = vmatpush1.msra.mxu0 %v371
    %2260 = vmatprep.subr.mxu0 %v376
    %2261 = vmatpush1.msra.mxu0 %v375
    %2262 = vmatprep.subr.mxu0 %v380
    %2263 = vmatpush1.msra.mxu0 %v379
    %2264 = vmatprep.subr.mxu0 %v384
    %2265 = vmatpush1.msra.mxu0 %v383
    %2266 = vmatprep.subr.mxu0 %v388
    %2267 = vmatpush1.msra.mxu0 %v387
    %2268 = vmatprep.subr.mxu0 %v392
    %2269 = vmatpush1.msra.mxu0 %v391
    %2270 = vmatprep.subr.mxu0 %v396
    %2271 = vmatpush1.msra.mxu0 %v395
    %2272 = vmatprep.subr.mxu0 %v400
    %2273 = vmatpush1.msra.mxu0 %v399
    %2274 = vmatprep.subr.mxu0 %v404
    %2275 = vmatpush1.msra.mxu0 %v403
    %2276 = vmatprep.subr.mxu0 %v408
    %2277 = vmatpush1.msra.mxu0 %v407
    %2278 = vmatprep.subr.mxu0 %v412
    %2279 = vmatpush1.msra.mxu0 %v411
    %2280 = vmatprep.subr.mxu0 %v416
    %2281 = vmatpush1.msra.mxu0 %v415
    %2282 = vmatprep.subr.mxu0 %v420
    %2283 = vmatpush1.msra.mxu0 %v419
    %2284 = vmatprep.subr.mxu0 %v424
    %2285 = vmatpush1.msra.mxu0 %v423
    %2286 = vmatprep.mubr.f32.mxu0 %v1980
    %2287 = vmatmul.mubr.f32.gmra.mrb[0].mxu0 %v2150
    %v2288 = vpop.f32.mrb[0].mxu0
    %v2289 = vadd.f32 %v462, %v2288
    %v2290 = vpop.f32.mrb[0].mxu0
    %v2291 = vadd.f32 %v466, %v2290
    %2292 = vdwg.mxu0
    %v2293 = vxor.u32 %v2218, 2147483648
    %v2294 = vmul.f32 %v2293, 1.442695
    %v2295 = vpow.pop %v2294
    %v2296 = vadd.f32 %v2295, 1.0
    %v2297 = vrcp.pop %v2296
    %v2298 = vmul.f32 1.0, %v2297
    %v2299 = vxor.u32 %v2220, 2147483648
    %v2300 = vmul.f32 %v2299, 1.442695
    %v2301 = vpow.pop %v2300
    %v2302 = vadd.f32 %v2301, 1.0
    %v2303 = vrcp.pop %v2302
    %v2304 = vmul.f32 1.0, %v2303
    %v2305 = vtanh.pop %v2289
    %v2306 = vxor.u32 %v2291, 2147483648
    %v2307 = vmul.f32 %v2306, 1.442695
    %v2308 = vpow.pop %v2307
    %v2309 = vadd.f32 %v2308, 1.0
    %v2310 = vrcp.pop %v2309
    %v2311 = vmul.f32 1.0, %v2310
    %v2312 = vmul.f32 %v2304, %v1978
    %v2313 = vmul.f32 %v2298, %v2305
    %v2314 = vadd.f32 %v2312, %v2313
    %v2315 = vtanh.pop %v2314
    %v2316 = vmul.f32 %v2311, %v2315
    %2317 = vmatprep.subr.mxu0 %v234
    %2318 = vmatpush1.msra.mxu0 %v233
    %2319 = vmatprep.subr.mxu0 %v238
    %2320 = vmatpush1.msra.mxu0 %v237
    %2321 = vmatprep.subr.mxu0 %v242
    %2322 = vmatpush1.msra.mxu0 %v241
    %2323 = vmatprep.subr.mxu0 %v246
    %2324 = vmatpush1.msra.mxu0 %v245
    %2325 = vmatprep.subr.mxu0 %v250
    %2326 = vmatpush1.msra.mxu0 %v249
    %2327 = vmatprep.subr.mxu0 %v254
    %2328 = vmatpush1.msra.mxu0 %v253
    %2329 = vmatprep.subr.mxu0 %v258
    %2330 = vmatpush1.msra.mxu0 %v257
    %2331 = vmatprep.subr.mxu0 %v262
    %2332 = vmatpush1.msra.mxu0 %v261
    %2333 = vmatprep.subr.mxu0 %v266
    %2334 = vmatpush1.msra.mxu0 %v265
    %2335 = vmatprep.subr.mxu0 %v270
    %2336 = vmatpush1.msra.mxu0 %v269
    %2337 = vmatprep.subr.mxu0 %v274
    %2338 = vmatpush1.msra.mxu0 %v273
    %2339 = vmatprep.subr.mxu0 %v278
    %2340 = vmatpush1.msra.mxu0 %v277
    %2341 = vmatprep.subr.mxu0 %v282
    %2342 = vmatpush1.msra.mxu0 %v281
    %2343 = vmatprep.subr.mxu0 %v286
    %2344 = vmatpush1.msra.mxu0 %v285
    %2345 = vmatprep.subr.mxu0 %v290
    %2346 = vmatpush1.msra.mxu0 %v289
    %2347 = vmatprep.subr.mxu0 %v294
    %2348 = vmatpush1.msra.mxu0 %v293
    %2349 = vmatprep.subr.mxu0 0.0
    %2350 = vmatpush1.msra.mxu0 0.0
    %2351 = vmatprep.subr.mxu0 0.0
    %2352 = vmatpush1.msra.mxu0 0.0
    %2353 = vmatprep.subr.mxu0 0.0
    %2354 = vmatpush1.msra.mxu0 0.0
    %2355 = vmatprep.subr.mxu0 0.0
    %2356 = vmatpush1.msra.mxu0 0.0
    %2357 = vmatprep.subr.mxu0 0.0
    %2358 = vmatpush1.msra.mxu0 0.0
    %2359 = vmatprep.subr.mxu0 0.0
    %2360 = vmatpush1.msra.mxu0 0.0
    %2361 = vmatprep.subr.mxu0 0.0
    %2362 = vmatpush1.msra.mxu0 0.0
    %2363 = vmatprep.subr.mxu0 0.0
    %2364 = vmatpush1.msra.mxu0 0.0
    %2365 = vmatprep.subr.mxu0 0.0
    %2366 = vmatpush1.msra.mxu0 0.0
    %2367 = vmatprep.subr.mxu0 0.0
    %2368 = vmatpush1.msra.mxu0 0.0
    %2369 = vmatprep.subr.mxu0 0.0
    %2370 = vmatpush1.msra.mxu0 0.0
    %2371 = vmatprep.subr.mxu0 0.0
    %2372 = vmatpush1.msra.mxu0 0.0
    %2373 = vmatprep.subr.mxu0 0.0
    %2374 = vmatpush1.msra.mxu0 0.0
    %2375 = vmatprep.subr.mxu0 0.0
    %2376 = vmatpush1.msra.mxu0 0.0
    %2377 = vmatprep.subr.mxu0 0.0
    %2378 = vmatpush1.msra.mxu0 0.0
    %2379 = vmatprep.subr.mxu0 0.0
    %2380 = vmatpush1.msra.mxu0 0.0
    %2381 = vmatprep.mubr.f32.mxu0 0.0
    %2382 = vmatmul.mubr.f32.gmra.mrb[0].mxu0 %v2150
    %v2383 = vpop.f32.mrb[0].mxu0
    %v2384 = vadd.f32 0.0, %v2383
    %v2385 = vpop.f32.mrb[0].mxu0
    %v2386 = vadd.f32 0.0, %v2385
    %2387 = vdwg.mxu0
    %2388 = vmatprep.subr.mxu0 %v236
    %2389 = vmatpush1.msra.mxu0 %v235
    %2390 = vmatprep.subr.mxu0 %v240
    %2391 = vmatpush1.msra.mxu0 %v239
    %2392 = vmatprep.subr.mxu0 %v244
    %2393 = vmatpush1.msra.mxu0 %v243
    %2394 = vmatprep.subr.mxu0 %v248
    %2395 = vmatpush1.msra.mxu0 %v247
    %2396 = vmatprep.subr.mxu0 %v252
    %2397 = vmatpush1.msra.mxu0 %v251
    %2398 = vmatprep.subr.mxu0 %v256
    %2399 = vmatpush1.msra.mxu0 %v255
    %2400 = vmatprep.subr.mxu0 %v260
    %2401 = vmatpush1.msra.mxu0 %v259
    %2402 = vmatprep.subr.mxu0 %v264
    %2403 = vmatpush1.msra.mxu0 %v263
    %2404 = vmatprep.subr.mxu0 %v268
    %2405 = vmatpush1.msra.mxu0 %v267
    %2406 = vmatprep.subr.mxu0 %v272
    %2407 = vmatpush1.msra.mxu0 %v271
    %2408 = vmatprep.subr.mxu0 %v276
    %2409 = vmatpush1.msra.mxu0 %v275
    %2410 = vmatprep.subr.mxu0 %v280
    %2411 = vmatpush1.msra.mxu0 %v279
    %2412 = vmatprep.subr.mxu0 %v284
    %2413 = vmatpush1.msra.mxu0 %v283
    %2414 = vmatprep.subr.mxu0 %v288
    %2415 = vmatpush1.msra.mxu0 %v287
    %2416 = vmatprep.subr.mxu0 %v292
    %2417 = vmatpush1.msra.mxu0 %v291
    %2418 = vmatprep.subr.mxu0 %v296
    %2419 = vmatpush1.msra.mxu0 %v295
    %2420 = vmatprep.subr.mxu0 0.0
    %2421 = vmatpush1.msra.mxu0 0.0
    %2422 = vmatprep.subr.mxu0 0.0
    %2423 = vmatpush1.msra.mxu0 0.0
    %2424 = vmatprep.subr.mxu0 0.0
    %2425 = vmatpush1.msra.mxu0 0.0
    %2426 = vmatprep.subr.mxu0 0.0
    %2427 = vmatpush1.msra.mxu0 0.0
    %2428 = vmatprep.subr.mxu0 0.0
    %2429 = vmatpush1.msra.mxu0 0.0
    %2430 = vmatprep.subr.mxu0 0.0
    %2431 = vmatpush1.msra.mxu0 0.0
    %2432 = vmatprep.subr.mxu0 0.0
    %2433 = vmatpush1.msra.mxu0 0.0
    %2434 = vmatprep.subr.mxu0 0.0
    %2435 = vmatpush1.msra.mxu0 0.0
    %2436 = vmatprep.subr.mxu0 0.0
    %2437 = vmatpush1.msra.mxu0 0.0
    %2438 = vmatprep.subr.mxu0 0.0
    %2439 = vmatpush1.msra.mxu0 0.0
    %2440 = vmatprep.subr.mxu0 0.0
    %2441 = vmatpush1.msra.mxu0 0.0
    %2442 = vmatprep.subr.mxu0 0.0
    %2443 = vmatpush1.msra.mxu0 0.0
    %2444 = vmatprep.subr.mxu0 0.0
    %2445 = vmatpush1.msra.mxu0 0.0
    %2446 = vmatprep.subr.mxu0 0.0
    %2447 = vmatpush1.msra.mxu0 0.0
    %2448 = vmatprep.subr.mxu0 0.0
    %2449 = vmatpush1.msra.mxu0 0.0
    %2450 = vmatprep.subr.mxu0 0.0
    %2451 = vmatpush1.msra.mxu0 0.0
    %2452 = vmatprep.mubr.f32.mxu0 0.0
    %2453 = vmatmul.mubr.f32.gmra.mrb[0].mxu0 %v2150
    %v2454 = vpop.f32.mrb[0].mxu0
    %v2455 = vadd.f32 0.0, %v2454
    %v2456 = vpop.f32.mrb[0].mxu0
    %v2457 = vadd.f32 0.0, %v2456
    %2458 = vdwg.mxu0
    %v2459 = vadd.f32 %v225, %v2384
    %v2460 = vadd.f32 %v226, %v2386
    %v2461 = vadd.f32 %v227, %v2455
    %v2462 = vadd.f32 %v228, %v2457
    %v2463 = vxor.u32 %v2459, 2147483648
    %v2464 = vmul.f32 %v2463, 1.442695
    %v2465 = vpow.pop %v2464
    %v2466 = vadd.f32 %v2465, 1.0
    %v2467 = vrcp.pop %v2466
    %v2468 = vmul.f32 1.0, %v2467
    %v2469 = vxor.u32 %v2460, 2147483648
    %v2470 = vmul.f32 %v2469, 1.442695
    %v2471 = vpow.pop %v2470
    %v2472 = vadd.f32 %v2471, 1.0
    %v2473 = vrcp.pop %v2472
    %v2474 = vmul.f32 1.0, %v2473
    %v2475 = vtanh.pop %v2461
    %v2476 = vxor.u32 %v2462, 2147483648
    %v2477 = vmul.f32 %v2476, 1.442695
    %v2478 = vpow.pop %v2477
    %v2479 = vadd.f32 %v2478, 1.0
    %v2480 = vrcp.pop %v2479
    %v2481 = vmul.f32 1.0, %v2480
    %v2482 = vmul.f32 %v2474, %v2148
    %v2483 = vmul.f32 %v2468, %v2475
    %v2484 = vadd.f32 %v2482, %v2483
    %v2485 = vtanh.pop %v2484
    %v2486 = vmul.f32 %v2481, %v2485
    %2487 = vmatprep.subr.mxu0 %v298
    %2488 = vmatpush1.msra.mxu0 %v297
    %2489 = vmatprep.subr.mxu0 %v302
    %2490 = vmatpush1.msra.mxu0 %v301
    %2491 = vmatprep.subr.mxu0 %v306
    %2492 = vmatpush1.msra.mxu0 %v305
    %2493 = vmatprep.subr.mxu0 %v310
    %2494 = vmatpush1.msra.mxu0 %v309
    %2495 = vmatprep.subr.mxu0 %v314
    %2496 = vmatpush1.msra.mxu0 %v313
    %2497 = vmatprep.subr.mxu0 %v318
    %2498 = vmatpush1.msra.mxu0 %v317
    %2499 = vmatprep.subr.mxu0 %v322
    %2500 = vmatpush1.msra.mxu0 %v321
    %2501 = vmatprep.subr.mxu0 %v326
    %2502 = vmatpush1.msra.mxu0 %v325
    %2503 = vmatprep.subr.mxu0 %v330
    %2504 = vmatpush1.msra.mxu0 %v329
    %2505 = vmatprep.subr.mxu0 %v334
    %2506 = vmatpush1.msra.mxu0 %v333
    %2507 = vmatprep.subr.mxu0 %v338
    %2508 = vmatpush1.msra.mxu0 %v337
    %2509 = vmatprep.subr.mxu0 %v342
    %2510 = vmatpush1.msra.mxu0 %v341
    %2511 = vmatprep.subr.mxu0 %v346
    %2512 = vmatpush1.msra.mxu0 %v345
    %2513 = vmatprep.subr.mxu0 %v350
    %2514 = vmatpush1.msra.mxu0 %v349
    %2515 = vmatprep.subr.mxu0 %v354
    %2516 = vmatpush1.msra.mxu0 %v353
    %2517 = vmatprep.subr.mxu0 %v358
    %2518 = vmatpush1.msra.mxu0 %v357
    %2519 = vmatprep.subr.mxu0 %v362
    %2520 = vmatpush1.msra.mxu0 %v361
    %2521 = vmatprep.subr.mxu0 %v366
    %2522 = vmatpush1.msra.mxu0 %v365
    %2523 = vmatprep.subr.mxu0 %v370
    %2524 = vmatpush1.msra.mxu0 %v369
    %2525 = vmatprep.subr.mxu0 %v374
    %2526 = vmatpush1.msra.mxu0 %v373
    %2527 = vmatprep.subr.mxu0 %v378
    %2528 = vmatpush1.msra.mxu0 %v377
    %2529 = vmatprep.subr.mxu0 %v382
    %2530 = vmatpush1.msra.mxu0 %v381
    %2531 = vmatprep.subr.mxu0 %v386
    %2532 = vmatpush1.msra.mxu0 %v385
    %2533 = vmatprep.subr.mxu0 %v390
    %2534 = vmatpush1.msra.mxu0 %v389
    %2535 = vmatprep.subr.mxu0 %v394
    %2536 = vmatpush1.msra.mxu0 %v393
    %2537 = vmatprep.subr.mxu0 %v398
    %2538 = vmatpush1.msra.mxu0 %v397
    %2539 = vmatprep.subr.mxu0 %v402
    %2540 = vmatpush1.msra.mxu0 %v401
    %2541 = vmatprep.subr.mxu0 %v406
    %2542 = vmatpush1.msra.mxu0 %v405
    %2543 = vmatprep.subr.mxu0 %v410
    %2544 = vmatpush1.msra.mxu0 %v409
    %2545 = vmatprep.subr.mxu0 %v414
    %2546 = vmatpush1.msra.mxu0 %v413
    %2547 = vmatprep.subr.mxu0 %v418
    %2548 = vmatpush1.msra.mxu0 %v417
    %2549 = vmatprep.subr.mxu0 %v422
    %2550 = vmatpush1.msra.mxu0 %v421
    %2551 = vmatprep.mubr.f32.mxu0 %v2316
    %2552 = vmatmul.mubr.f32.gmra.mrb[0].mxu0 %v2486
    %v2553 = vpop.f32.mrb[0].mxu0
    %v2554 = vadd.f32 %v454, %v2553
    %v2555 = vpop.f32.mrb[0].mxu0
    %v2556 = vadd.f32 %v458, %v2555
    %2557 = vdwg.mxu0
    %2558 = vmatprep.subr.mxu0 %v300
    %2559 = vmatpush1.msra.mxu0 %v299
    %2560 = vmatprep.subr.mxu0 %v304
    %2561 = vmatpush1.msra.mxu0 %v303
    %2562 = vmatprep.subr.mxu0 %v308
    %2563 = vmatpush1.msra.mxu0 %v307
    %2564 = vmatprep.subr.mxu0 %v312
    %2565 = vmatpush1.msra.mxu0 %v311
    %2566 = vmatprep.subr.mxu0 %v316
    %2567 = vmatpush1.msra.mxu0 %v315
    %2568 = vmatprep.subr.mxu0 %v320
    %2569 = vmatpush1.msra.mxu0 %v319
    %2570 = vmatprep.subr.mxu0 %v324
    %2571 = vmatpush1.msra.mxu0 %v323
    %2572 = vmatprep.subr.mxu0 %v328
    %2573 = vmatpush1.msra.mxu0 %v327
    %2574 = vmatprep.subr.mxu0 %v332
    %2575 = vmatpush1.msra.mxu0 %v331
    %2576 = vmatprep.subr.mxu0 %v336
    %2577 = vmatpush1.msra.mxu0 %v335
    %2578 = vmatprep.subr.mxu0 %v340
    %2579 = vmatpush1.msra.mxu0 %v339
    %2580 = vmatprep.subr.mxu0 %v344
    %2581 = vmatpush1.msra.mxu0 %v343
    %2582 = vmatprep.subr.mxu0 %v348
    %2583 = vmatpush1.msra.mxu0 %v347
    %2584 = vmatprep.subr.mxu0 %v352
    %2585 = vmatpush1.msra.mxu0 %v351
    %2586 = vmatprep.subr.mxu0 %v356
    %2587 = vmatpush1.msra.mxu0 %v355
    %2588 = vmatprep.subr.mxu0 %v360
    %2589 = vmatpush1.msra.mxu0 %v359
    %2590 = vmatprep.subr.mxu0 %v364
    %2591 = vmatpush1.msra.mxu0 %v363
    %2592 = vmatprep.subr.mxu0 %v368
    %2593 = vmatpush1.msra.mxu0 %v367
    %2594 = vmatprep.subr.mxu0 %v372
    %2595 = vmatpush1.msra.mxu0 %v371
    %2596 = vmatprep.subr.mxu0 %v376
    %2597 = vmatpush1.msra.mxu0 %v375
    %2598 = vmatprep.subr.mxu0 %v380
    %2599 = vmatpush1.msra.mxu0 %v379
    %2600 = vmatprep.subr.mxu0 %v384
    %2601 = vmatpush1.msra.mxu0 %v383
    %2602 = vmatprep.subr.mxu0 %v388
    %2603 = vmatpush1.msra.mxu0 %v387
    %2604 = vmatprep.subr.mxu0 %v392
    %2605 = vmatpush1.msra.mxu0 %v391
    %2606 = vmatprep.subr.mxu0 %v396
    %2607 = vmatpush1.msra.mxu0 %v395
    %2608 = vmatprep.subr.mxu0 %v400
    %2609 = vmatpush1.msra.mxu0 %v399
    %2610 = vmatprep.subr.mxu0 %v404
    %2611 = vmatpush1.msra.mxu0 %v403
    %2612 = vmatprep.subr.mxu0 %v408
    %2613 = vmatpush1.msra.mxu0 %v407
    %2614 = vmatprep.subr.mxu0 %v412
    %2615 = vmatpush1.msra.mxu0 %v411
    %2616 = vmatprep.subr.mxu0 %v416
    %2617 = vmatpush1.msra.mxu0 %v415
    %2618 = vmatprep.subr.mxu0 %v420
    %2619 = vmatpush1.msra.mxu0 %v419
    %2620 = vmatprep.subr.mxu0 %v424
    %2621 = vmatpush1.msra.mxu0 %v423
    %2622 = vmatprep.mubr.f32.mxu0 %v2316
    %2623 = vmatmul.mubr.f32.gmra.mrb[0].mxu0 %v2486
    %v2624 = vpop.f32.mrb[0].mxu0
    %v2625 = vadd.f32 %v462, %v2624
    %v2626 = vpop.f32.mrb[0].mxu0
    %v2627 = vadd.f32 %v466, %v2626
    %2628 = vdwg.mxu0
    %v2629 = vxor.u32 %v2554, 2147483648
    %v2630 = vmul.f32 %v2629, 1.442695
    %v2631 = vpow.pop %v2630
    %v2632 = vadd.f32 %v2631, 1.0
    %v2633 = vrcp.pop %v2632
    %v2634 = vmul.f32 1.0, %v2633
    %v2635 = vxor.u32 %v2556, 2147483648
    %v2636 = vmul.f32 %v2635, 1.442695
    %v2637 = vpow.pop %v2636
    %v2638 = vadd.f32 %v2637, 1.0
    %v2639 = vrcp.pop %v2638
    %v2640 = vmul.f32 1.0, %v2639
    %v2641 = vtanh.pop %v2625
    %v2642 = vxor.u32 %v2627, 2147483648
    %v2643 = vmul.f32 %v2642, 1.442695
    %v2644 = vpow.pop %v2643
    %v2645 = vadd.f32 %v2644, 1.0
    %v2646 = vrcp.pop %v2645
    %v2647 = vmul.f32 1.0, %v2646
    %v2648 = vmul.f32 %v2640, %v2314
    %v2649 = vmul.f32 %v2634, %v2641
    %v2650 = vadd.f32 %v2648, %v2649
    %v2651 = vtanh.pop %v2650
    %v2652 = vmul.f32 %v2647, %v2651
    %2653 = vmatprep.subr.mxu0 %v234
    %2654 = vmatpush1.msra.mxu0 %v233
    %2655 = vmatprep.subr.mxu0 %v238
    %2656 = vmatpush1.msra.mxu0 %v237
    %2657 = vmatprep.subr.mxu0 %v242
    %2658 = vmatpush1.msra.mxu0 %v241
    %2659 = vmatprep.subr.mxu0 %v246
    %2660 = vmatpush1.msra.mxu0 %v245
    %2661 = vmatprep.subr.mxu0 %v250
    %2662 = vmatpush1.msra.mxu0 %v249
    %2663 = vmatprep.subr.mxu0 %v254
    %2664 = vmatpush1.msra.mxu0 %v253
    %2665 = vmatprep.subr.mxu0 %v258
    %2666 = vmatpush1.msra.mxu0 %v257
    %2667 = vmatprep.subr.mxu0 %v262
    %2668 = vmatpush1.msra.mxu0 %v261
    %2669 = vmatprep.subr.mxu0 %v266
    %2670 = vmatpush1.msra.mxu0 %v265
    %2671 = vmatprep.subr.mxu0 %v270
    %2672 = vmatpush1.msra.mxu0 %v269
    %2673 = vmatprep.subr.mxu0 %v274
    %2674 = vmatpush1.msra.mxu0 %v273
    %2675 = vmatprep.subr.mxu0 %v278
    %2676 = vmatpush1.msra.mxu0 %v277
    %2677 = vmatprep.subr.mxu0 %v282
    %2678 = vmatpush1.msra.mxu0 %v281
    %2679 = vmatprep.subr.mxu0 %v286
    %2680 = vmatpush1.msra.mxu0 %v285
    %2681 = vmatprep.subr.mxu0 %v290
    %2682 = vmatpush1.msra.mxu0 %v289
    %2683 = vmatprep.subr.mxu0 %v294
    %2684 = vmatpush1.msra.mxu0 %v293
    %2685 = vmatprep.subr.mxu0 0.0
    %2686 = vmatpush1.msra.mxu0 0.0
    %2687 = vmatprep.subr.mxu0 0.0
    %2688 = vmatpush1.msra.mxu0 0.0
    %2689 = vmatprep.subr.mxu0 0.0
    %2690 = vmatpush1.msra.mxu0 0.0
    %2691 = vmatprep.subr.mxu0 0.0
    %2692 = vmatpush1.msra.mxu0 0.0
    %2693 = vmatprep.subr.mxu0 0.0
    %2694 = vmatpush1.msra.mxu0 0.0
    %2695 = vmatprep.subr.mxu0 0.0
    %2696 = vmatpush1.msra.mxu0 0.0
    %2697 = vmatprep.subr.mxu0 0.0
    %2698 = vmatpush1.msra.mxu0 0.0
    %2699 = vmatprep.subr.mxu0 0.0
    %2700 = vmatpush1.msra.mxu0 0.0
    %2701 = vmatprep.subr.mxu0 0.0
    %2702 = vmatpush1.msra.mxu0 0.0
    %2703 = vmatprep.subr.mxu0 0.0
    %2704 = vmatpush1.msra.mxu0 0.0
    %2705 = vmatprep.subr.mxu0 0.0
    %2706 = vmatpush1.msra.mxu0 0.0
    %2707 = vmatprep.subr.mxu0 0.0
    %2708 = vmatpush1.msra.mxu0 0.0
    %2709 = vmatprep.subr.mxu0 0.0
    %2710 = vmatpush1.msra.mxu0 0.0
    %2711 = vmatprep.subr.mxu0 0.0
    %2712 = vmatpush1.msra.mxu0 0.0
    %2713 = vmatprep.subr.mxu0 0.0
    %2714 = vmatpush1.msra.mxu0 0.0
    %2715 = vmatprep.subr.mxu0 0.0
    %2716 = vmatpush1.msra.mxu0 0.0
    %2717 = vmatprep.mubr.f32.mxu0 0.0
    %2718 = vmatmul.mubr.f32.gmra.mrb[0].mxu0 %v2486
    %v2719 = vpop.f32.mrb[0].mxu0
    %v2720 = vadd.f32 0.0, %v2719
    %v2721 = vpop.f32.mrb[0].mxu0
    %v2722 = vadd.f32 0.0, %v2721
    %2723 = vdwg.mxu0
    %2724 = vmatprep.subr.mxu0 %v236
    %2725 = vmatpush1.msra.mxu0 %v235
    %2726 = vmatprep.subr.mxu0 %v240
    %2727 = vmatpush1.msra.mxu0 %v239
    %2728 = vmatprep.subr.mxu0 %v244
    %2729 = vmatpush1.msra.mxu0 %v243
    %2730 = vmatprep.subr.mxu0 %v248
    %2731 = vmatpush1.msra.mxu0 %v247
    %2732 = vmatprep.subr.mxu0 %v252
    %2733 = vmatpush1.msra.mxu0 %v251
    %2734 = vmatprep.subr.mxu0 %v256
    %2735 = vmatpush1.msra.mxu0 %v255
    %2736 = vmatprep.subr.mxu0 %v260
    %2737 = vmatpush1.msra.mxu0 %v259
    %2738 = vmatprep.subr.mxu0 %v264
    %2739 = vmatpush1.msra.mxu0 %v263
    %2740 = vmatprep.subr.mxu0 %v268
    %2741 = vmatpush1.msra.mxu0 %v267
    %2742 = vmatprep.subr.mxu0 %v272
    %2743 = vmatpush1.msra.mxu0 %v271
    %2744 = vmatprep.subr.mxu0 %v276
    %2745 = vmatpush1.msra.mxu0 %v275
    %2746 = vmatprep.subr.mxu0 %v280
    %2747 = vmatpush1.msra.mxu0 %v279
    %2748 = vmatprep.subr.mxu0 %v284
    %2749 = vmatpush1.msra.mxu0 %v283
    %2750 = vmatprep.subr.mxu0 %v288
    %2751 = vmatpush1.msra.mxu0 %v287
    %2752 = vmatprep.subr.mxu0 %v292
    %2753 = vmatpush1.msra.mxu0 %v291
    %2754 = vmatprep.subr.mxu0 %v296
    %2755 = vmatpush1.msra.mxu0 %v295
    %2756 = vmatprep.subr.mxu0 0.0
    %2757 = vmatpush1.msra.mxu0 0.0
    %2758 = vmatprep.subr.mxu0 0.0
    %2759 = vmatpush1.msra.mxu0 0.0
    %2760 = vmatprep.subr.mxu0 0.0
    %2761 = vmatpush1.msra.mxu0 0.0
    %2762 = vmatprep.subr.mxu0 0.0
    %2763 = vmatpush1.msra.mxu0 0.0
    %2764 = vmatprep.subr.mxu0 0.0
    %2765 = vmatpush1.msra.mxu0 0.0
    %2766 = vmatprep.subr.mxu0 0.0
    %2767 = vmatpush1.msra.mxu0 0.0
    %2768 = vmatprep.subr.mxu0 0.0
    %2769 = vmatpush1.msra.mxu0 0.0
    %2770 = vmatprep.subr.mxu0 0.0
    %2771 = vmatpush1.msra.mxu0 0.0
    %2772 = vmatprep.subr.mxu0 0.0
    %2773 = vmatpush1.msra.mxu0 0.0
    %2774 = vmatprep.subr.mxu0 0.0
    %2775 = vmatpush1.msra.mxu0 0.0
    %2776 = vmatprep.subr.mxu0 0.0
    %2777 = vmatpush1.msra.mxu0 0.0
    %2778 = vmatprep.subr.mxu0 0.0
    %2779 = vmatpush1.msra.mxu0 0.0
    %2780 = vmatprep.subr.mxu0 0.0
    %2781 = vmatpush1.msra.mxu0 0.0
    %2782 = vmatprep.subr.mxu0 0.0
    %2783 = vmatpush1.msra.mxu0 0.0
    %2784 = vmatprep.subr.mxu0 0.0
    %2785 = vmatpush1.msra.mxu0 0.0
    %2786 = vmatprep.subr.mxu0 0.0
    %2787 = vmatpush1.msra.mxu0 0.0
    %2788 = vmatprep.mubr.f32.mxu0 0.0
    %2789 = vmatmul.mubr.f32.gmra.mrb[0].mxu0 %v2486
    %v2790 = vpop.f32.mrb[0].mxu0
    %v2791 = vadd.f32 0.0, %v2790
    %v2792 = vpop.f32.mrb[0].mxu0
    %v2793 = vadd.f32 0.0, %v2792
    %2794 = vdwg.mxu0
    %v2795 = vadd.f32 %v229, %v2720
    %v2796 = vadd.f32 %v230, %v2722
    %v2797 = vadd.f32 %v231, %v2791
    %v2798 = vadd.f32 %v232, %v2793
    %v2799 = vxor.u32 %v2795, 2147483648
    %v2800 = vmul.f32 %v2799, 1.442695
    %v2801 = vpow.pop %v2800
    %v2802 = vadd.f32 %v2801, 1.0
    %v2803 = vrcp.pop %v2802
    %v2804 = vmul.f32 1.0, %v2803
    %v2805 = vxor.u32 %v2796, 2147483648
    %v2806 = vmul.f32 %v2805, 1.442695
    %v2807 = vpow.pop %v2806
    %v2808 = vadd.f32 %v2807, 1.0
    %v2809 = vrcp.pop %v2808
    %v2810 = vmul.f32 1.0, %v2809
    %v2811 = vtanh.pop %v2797
    %v2812 = vxor.u32 %v2798, 2147483648
    %v2813 = vmul.f32 %v2812, 1.442695
    %v2814 = vpow.pop %v2813
    %v2815 = vadd.f32 %v2814, 1.0
    %v2816 = vrcp.pop %v2815
    %v2817 = vmul.f32 1.0, %v2816
    %v2818 = vmul.f32 %v2810, %v2484
    %v2819 = vmul.f32 %v2804, %v2811
    %v2820 = vadd.f32 %v2818, %v2819
    %v2821 = vtanh.pop %v2820
    %v2822 = vmul.f32 %v2817, %v2821
    %2823 = vmatprep.subr.mxu0 %v298
    %2824 = vmatpush1.msra.mxu0 %v297
    %2825 = vmatprep.subr.mxu0 %v302
    %2826 = vmatpush1.msra.mxu0 %v301
    %2827 = vmatprep.subr.mxu0 %v306
    %2828 = vmatpush1.msra.mxu0 %v305
    %2829 = vmatprep.subr.mxu0 %v310
    %2830 = vmatpush1.msra.mxu0 %v309
    %2831 = vmatprep.subr.mxu0 %v314
    %2832 = vmatpush1.msra.mxu0 %v313
    %2833 = vmatprep.subr.mxu0 %v318
    %2834 = vmatpush1.msra.mxu0 %v317
    %2835 = vmatprep.subr.mxu0 %v322
    %2836 = vmatpush1.msra.mxu0 %v321
    %2837 = vmatprep.subr.mxu0 %v326
    %2838 = vmatpush1.msra.mxu0 %v325
    %2839 = vmatprep.subr.mxu0 %v330
    %2840 = vmatpush1.msra.mxu0 %v329
    %2841 = vmatprep.subr.mxu0 %v334
    %2842 = vmatpush1.msra.mxu0 %v333
    %2843 = vmatprep.subr.mxu0 %v338
    %2844 = vmatpush1.msra.mxu0 %v337
    %2845 = vmatprep.subr.mxu0 %v342
    %2846 = vmatpush1.msra.mxu0 %v341
    %2847 = vmatprep.subr.mxu0 %v346
    %2848 = vmatpush1.msra.mxu0 %v345
    %2849 = vmatprep.subr.mxu0 %v350
    %2850 = vmatpush1.msra.mxu0 %v349
    %2851 = vmatprep.subr.mxu0 %v354
    %2852 = vmatpush1.msra.mxu0 %v353
    %2853 = vmatprep.subr.mxu0 %v358
    %2854 = vmatpush1.msra.mxu0 %v357
    %2855 = vmatprep.subr.mxu0 %v362
    %2856 = vmatpush1.msra.mxu0 %v361
    %2857 = vmatprep.subr.mxu0 %v366
    %2858 = vmatpush1.msra.mxu0 %v365
    %2859 = vmatprep.subr.mxu0 %v370
    %2860 = vmatpush1.msra.mxu0 %v369
    %2861 = vmatprep.subr.mxu0 %v374
    %2862 = vmatpush1.msra.mxu0 %v373
    %2863 = vmatprep.subr.mxu0 %v378
    %2864 = vmatpush1.msra.mxu0 %v377
    %2865 = vmatprep.subr.mxu0 %v382
    %2866 = vmatpush1.msra.mxu0 %v381
    %2867 = vmatprep.subr.mxu0 %v386
    %2868 = vmatpush1.msra.mxu0 %v385
    %2869 = vmatprep.subr.mxu0 %v390
    %2870 = vmatpush1.msra.mxu0 %v389
    %2871 = vmatprep.subr.mxu0 %v394
    %2872 = vmatpush1.msra.mxu0 %v393
    %2873 = vmatprep.subr.mxu0 %v398
    %2874 = vmatpush1.msra.mxu0 %v397
    %2875 = vmatprep.subr.mxu0 %v402
    %2876 = vmatpush1.msra.mxu0 %v401
    %2877 = vmatprep.subr.mxu0 %v406
    %2878 = vmatpush1.msra.mxu0 %v405
    %2879 = vmatprep.subr.mxu0 %v410
    %2880 = vmatpush1.msra.mxu0 %v409
    %2881 = vmatprep.subr.mxu0 %v414
    %2882 = vmatpush1.msra.mxu0 %v413
    %2883 = vmatprep.subr.mxu0 %v418
    %2884 = vmatpush1.msra.mxu0 %v417
    %2885 = vmatprep.subr.mxu0 %v422
    %2886 = vmatpush1.msra.mxu0 %v421
    %2887 = vmatprep.mubr.f32.mxu0 %v2652
    %2888 = vmatmul.mubr.f32.gmra.mrb[0].mxu0 %v2822
    %v2889 = vpop.f32.mrb[0].mxu0
    %v2890 = vadd.f32 %v454, %v2889
    %v2891 = vpop.f32.mrb[0].mxu0
    %v2892 = vadd.f32 %v458, %v2891
    %2893 = vdwg.mxu0
    %2894 = vmatprep.subr.mxu0 %v300
    %2895 = vmatpush1.msra.mxu0 %v299
    %2896 = vmatprep.subr.mxu0 %v304
    %2897 = vmatpush1.msra.mxu0 %v303
    %2898 = vmatprep.subr.mxu0 %v308
    %2899 = vmatpush1.msra.mxu0 %v307
    %2900 = vmatprep.subr.mxu0 %v312
    %2901 = vmatpush1.msra.mxu0 %v311
    %2902 = vmatprep.subr.mxu0 %v316
    %2903 = vmatpush1.msra.mxu0 %v315
    %2904 = vmatprep.subr.mxu0 %v320
    %2905 = vmatpush1.msra.mxu0 %v319
    %2906 = vmatprep.subr.mxu0 %v324
    %2907 = vmatpush1.msra.mxu0 %v323
    %2908 = vmatprep.subr.mxu0 %v328
    %2909 = vmatpush1.msra.mxu0 %v327
    %2910 = vmatprep.subr.mxu0 %v332
    %2911 = vmatpush1.msra.mxu0 %v331
    %2912 = vmatprep.subr.mxu0 %v336
    %2913 = vmatpush1.msra.mxu0 %v335
    %2914 = vmatprep.subr.mxu0 %v340
    %2915 = vmatpush1.msra.mxu0 %v339
    %2916 = vmatprep.subr.mxu0 %v344
    %2917 = vmatpush1.msra.mxu0 %v343
    %2918 = vmatprep.subr.mxu0 %v348
    %2919 = vmatpush1.msra.mxu0 %v347
    %2920 = vmatprep.subr.mxu0 %v352
    %2921 = vmatpush1.msra.mxu0 %v351
    %2922 = vmatprep.subr.mxu0 %v356
    %2923 = vmatpush1.msra.mxu0 %v355
    %2924 = vmatprep.subr.mxu0 %v360
    %2925 = vmatpush1.msra.mxu0 %v359
    %2926 = vmatprep.subr.mxu0 %v364
    %2927 = vmatpush1.msra.mxu0 %v363
    %2928 = vmatprep.subr.mxu0 %v368
    %2929 = vmatpush1.msra.mxu0 %v367
    %2930 = vmatprep.subr.mxu0 %v372
    %2931 = vmatpush1.msra.mxu0 %v371
    %2932 = vmatprep.subr.mxu0 %v376
    %2933 = vmatpush1.msra.mxu0 %v375
    %2934 = vmatprep.subr.mxu0 %v380
    %2935 = vmatpush1.msra.mxu0 %v379
    %2936 = vmatprep.subr.mxu0 %v384
    %2937 = vmatpush1.msra.mxu0 %v383
    %2938 = vmatprep.subr.mxu0 %v388
    %2939 = vmatpush1.msra.mxu0 %v387
    %2940 = vmatprep.subr.mxu0 %v392
    %2941 = vmatpush1.msra.mxu0 %v391
    %2942 = vmatprep.subr.mxu0 %v396
    %2943 = vmatpush1.msra.mxu0 %v395
    %2944 = vmatprep.subr.mxu0 %v400
    %2945 = vmatpush1.msra.mxu0 %v399
    %2946 = vmatprep.subr.mxu0 %v404
    %2947 = vmatpush1.msra.mxu0 %v403
    %2948 = vmatprep.subr.mxu0 %v408
    %2949 = vmatpush1.msra.mxu0 %v407
    %2950 = vmatprep.subr.mxu0 %v412
    %2951 = vmatpush1.msra.mxu0 %v411
    %2952 = vmatprep.subr.mxu0 %v416
    %2953 = vmatpush1.msra.mxu0 %v415
    %2954 = vmatprep.subr.mxu0 %v420
    %2955 = vmatpush1.msra.mxu0 %v419
    %2956 = vmatprep.subr.mxu0 %v424
    %2957 = vmatpush1.msra.mxu0 %v423
    %2958 = vmatprep.mubr.f32.mxu0 %v2652
    %2959 = vmatmul.mubr.f32.gmra.mrb[0].mxu0 %v2822
    %v2960 = vpop.f32.mrb[0].mxu0
    %v2961 = vadd.f32 %v462, %v2960
    %v2962 = vpop.f32.mrb[0].mxu0
    %v2963 = vadd.f32 %v466, %v2962
    %2964 = vdwg.mxu0
    %v2965 = vxor.u32 %v2890, 2147483648
    %v2966 = vmul.f32 %v2965, 1.442695
    %v2967 = vpow.pop %v2966
    %v2968 = vadd.f32 %v2967, 1.0
    %v2969 = vrcp.pop %v2968
    %v2970 = vmul.f32 1.0, %v2969
    %v2971 = vxor.u32 %v2892, 2147483648
    %v2972 = vmul.f32 %v2971, 1.442695
    %v2973 = vpow.pop %v2972
    %v2974 = vadd.f32 %v2973, 1.0
    %v2975 = vrcp.pop %v2974
    %v2976 = vmul.f32 1.0, %v2975
    %v2977 = vtanh.pop %v2961
    %v2978 = vxor.u32 %v2963, 2147483648
    %v2979 = vmul.f32 %v2978, 1.442695
    %v2980 = vpow.pop %v2979
    %v2981 = vadd.f32 %v2980, 1.0
    %v2982 = vrcp.pop %v2981
    %v2983 = vmul.f32 1.0, %v2982
    %v2984 = vmul.f32 %v2976, %v2650
    %v2985 = vmul.f32 %v2970, %v2977
    %v2986 = vadd.f32 %v2984, %v2985
    %v2987 = vtanh.pop %v2986
    %v2988 = vmul.f32 %v2983, %v2987
    %v2989 = vld [vmem:[%s1] sm:$0xff]
    %v2990 = vld [vmem:[%s7] sm:$0x7]
    %v2991 = vld [vmem:[%s8] sm:$0x1]
    %v2993 = vlaneseq
    %v2994 = vshrl.u32 %v2993, 7
    %v2995 = vsub.s32 0, %v2994
    %v2996 = vrot.slane %v2991, %v2995
    %vm2998 = vcmask 23552
    %v3000 = vsel %vm2998, %v2989, 0
    %vm3002 = vcmask 1042432
    %v3004 = vsel %vm3002, %v2990, 0
    %3006 = vmatprep.subr.mxu0 0.0
    %3007 = vmatpush1.msra.mxu0 %v3004
    %3008 = vmatprep.subr.mxu0 0.0
    %3009 = vmatpush1.msra.mxu0 0.0
    %3010 = vmatprep.subr.mxu0 0.0
    %3011 = vmatpush1.msra.mxu0 0.0
    %3012 = vmatprep.subr.mxu0 0.0
    %3013 = vmatpush1.msra.mxu0 0.0
    %3014 = vmatprep.subr.mxu0 0.0
    %3015 = vmatpush1.msra.mxu0 0.0
    %3016 = vmatprep.subr.mxu0 0.0
    %3017 = vmatpush1.msra.mxu0 0.0
    %3018 = vmatprep.subr.mxu0 0.0
    %3019 = vmatpush1.msra.mxu0 0.0
    %3020 = vmatprep.subr.mxu0 0.0
    %3021 = vmatpush1.msra.mxu0 0.0
    %3022 = vmatprep.subr.mxu0 0.0
    %3023 = vmatpush1.msra.mxu0 0.0
    %3024 = vmatprep.subr.mxu0 0.0
    %3025 = vmatpush1.msra.mxu0 0.0
    %3026 = vmatprep.subr.mxu0 0.0
    %3027 = vmatpush1.msra.mxu0 0.0
    %3028 = vmatprep.subr.mxu0 0.0
    %3029 = vmatpush1.msra.mxu0 0.0
    %3030 = vmatprep.subr.mxu0 0.0
    %3031 = vmatpush1.msra.mxu0 0.0
    %3032 = vmatprep.subr.mxu0 0.0
    %3033 = vmatpush1.msra.mxu0 0.0
    %3034 = vmatprep.subr.mxu0 0.0
    %3035 = vmatpush1.msra.mxu0 0.0
    %3036 = vmatprep.subr.mxu0 0.0
    %3037 = vmatpush1.msra.mxu0 0.0
    %3038 = vmatprep.subr.mxu0 0.0
    %3039 = vmatpush1.msra.mxu0 0.0
    %3040 = vmatprep.subr.mxu0 0.0
    %3041 = vmatpush1.msra.mxu0 0.0
    %3042 = vmatprep.subr.mxu0 0.0
    %3043 = vmatpush1.msra.mxu0 0.0
    %3044 = vmatprep.subr.mxu0 0.0
    %3045 = vmatpush1.msra.mxu0 0.0
    %3046 = vmatprep.subr.mxu0 0.0
    %3047 = vmatpush1.msra.mxu0 0.0
    %3048 = vmatprep.subr.mxu0 0.0
    %3049 = vmatpush1.msra.mxu0 0.0
    %3050 = vmatprep.subr.mxu0 0.0
    %3051 = vmatpush1.msra.mxu0 0.0
    %3052 = vmatprep.subr.mxu0 0.0
    %3053 = vmatpush1.msra.mxu0 0.0
    %3054 = vmatprep.subr.mxu0 0.0
    %3055 = vmatpush1.msra.mxu0 0.0
    %3056 = vmatprep.subr.mxu0 0.0
    %3057 = vmatpush1.msra.mxu0 0.0
    %3058 = vmatprep.subr.mxu0 0.0
    %3059 = vmatpush1.msra.mxu0 0.0
    %3060 = vmatprep.subr.mxu0 0.0
    %3061 = vmatpush1.msra.mxu0 0.0
    %3062 = vmatprep.subr.mxu0 0.0
    %3063 = vmatpush1.msra.mxu0 0.0
    %3064 = vmatprep.subr.mxu0 0.0
    %3065 = vmatpush1.msra.mxu0 0.0
    %3066 = vmatprep.subr.mxu0 0.0
    %3067 = vmatpush1.msra.mxu0 0.0
    %3068 = vmatprep.subr.mxu0 0.0
    %3069 = vmatpush1.msra.mxu0 0.0
    %3070 = vmatprep.mubr.f32.mxu0 0.0
    %3071 = vmatmul.mubr.f32.gmra.mrb[0].mxu0 %v3000
    %v3072 = vpop.f32.mrb[0].mxu0
    %v3073 = vadd.f32 %v2996, %v3072
    %v3074 = vpop.f32.mrb[0].mxu0
    %3075 = vdwg.mxu0
    %v3076 = vmax.f32 %v3073, 0.0
    %v3077 = vld [vmem:[%s9] sm:$0xff]
    %v3078 = vld [vmem:[%s9 + $0x8] sm:$0xff]
    %v3079 = vld [vmem:[%s9 + $0x10] sm:$0xff]
    %v3080 = vld [vmem:[%s9 + $0x18] sm:$0xff]
    %v3081 = vld [vmem:[%s9 + $0x20] sm:$0xff]
    %v3082 = vld [vmem:[%s9 + $0x28] sm:$0xff]
    %v3083 = vld [vmem:[%s9 + $0x30] sm:$0xff]
    %v3084 = vld [vmem:[%s9 + $0x38] sm:$0xff]
    %v3085 = vld [vmem:[%s9 + $0x40] sm:$0xff]
    %v3086 = vld [vmem:[%s9 + $0x48] sm:$0xff]
    %v3087 = vld [vmem:[%s9 + $0x50] sm:$0xff]
    %v3088 = vld [vmem:[%s9 + $0x58] sm:$0xff]
    %v3089 = vld [vmem:[%s9 + $0x60] sm:$0xff]
    %v3090 = vld [vmem:[%s9 + $0x68] sm:$0xff]
    %v3091 = vld [vmem:[%s9 + $0x70] sm:$0xff]
    %v3092 = vld [vmem:[%s9 + $0x78] sm:$0xff]
    %v3093 = vld [vmem:[%s10] sm:$0xff]
    %v3094 = vld [vmem:[%s10 + $0x8] sm:$0xff]
    %v3095 = vld [vmem:[%s10 + $0x10] sm:$0xff]
    %v3096 = vld [vmem:[%s10 + $0x18] sm:$0xff]
    %vm3097 = vcmask 261120
    %v3099 = vsel %vm3097, %v3076, 0
    %3101 = vmatprep.subr.mxu0 0.0
    %3102 = vmatpush1.msra.mxu0 %v3093
    %3103 = vmatprep.subr.mxu0 0.0
    %3104 = vmatpush1.msra.mxu0 %v3094
    %3105 = vmatprep.subr.mxu0 0.0
    %3106 = vmatpush1.msra.mxu0 %v3095
    %3107 = vmatprep.subr.mxu0 0.0
    %3108 = vmatpush1.msra.mxu0 %v3096
    %3109 = vmatprep.subr.mxu0 0.0
    %3110 = vmatpush1.msra.mxu0 0.0
    %3111 = vmatprep.subr.mxu0 0.0
    %3112 = vmatpush1.msra.mxu0 0.0
    %3113 = vmatprep.subr.mxu0 0.0
    %3114 = vmatpush1.msra.mxu0 0.0
    %3115 = vmatprep.subr.mxu0 0.0
    %3116 = vmatpush1.msra.mxu0 0.0
    %3117 = vmatprep.subr.mxu0 0.0
    %3118 = vmatpush1.msra.mxu0 0.0
    %3119 = vmatprep.subr.mxu0 0.0
    %3120 = vmatpush1.msra.mxu0 0.0
    %3121 = vmatprep.subr.mxu0 0.0
    %3122 = vmatpush1.msra.mxu0 0.0
    %3123 = vmatprep.subr.mxu0 0.0
    %3124 = vmatpush1.msra.mxu0 0.0
    %3125 = vmatprep.subr.mxu0 0.0
    %3126 = vmatpush1.msra.mxu0 0.0
    %3127 = vmatprep.subr.mxu0 0.0
    %3128 = vmatpush1.msra.mxu0 0.0
    %3129 = vmatprep.subr.mxu0 0.0
    %3130 = vmatpush1.msra.mxu0 0.0
    %3131 = vmatprep.subr.mxu0 0.0
    %3132 = vmatpush1.msra.mxu0 0.0
    %3133 = vmatprep.subr.mxu0 0.0
    %3134 = vmatpush1.msra.mxu0 0.0
    %3135 = vmatprep.subr.mxu0 0.0
    %3136 = vmatpush1.msra.mxu0 0.0
    %3137 = vmatprep.subr.mxu0 0.0
    %3138 = vmatpush1.msra.mxu0 0.0
    %3139 = vmatprep.subr.mxu0 0.0
    %3140 = vmatpush1.msra.mxu0 0.0
    %3141 = vmatprep.subr.mxu0 0.0
    %3142 = vmatpush1.msra.mxu0 0.0
    %3143 = vmatprep.subr.mxu0 0.0
    %3144 = vmatpush1.msra.mxu0 0.0
    %3145 = vmatprep.subr.mxu0 0.0
    %3146 = vmatpush1.msra.mxu0 0.0
    %3147 = vmatprep.subr.mxu0 0.0
    %3148 = vmatpush1.msra.mxu0 0.0
    %3149 = vmatprep.subr.mxu0 0.0
    %3150 = vmatpush1.msra.mxu0 0.0
    %3151 = vmatprep.subr.mxu0 0.0
    %3152 = vmatpush1.msra.mxu0 0.0
    %3153 = vmatprep.subr.mxu0 0.0
    %3154 = vmatpush1.msra.mxu0 0.0
    %3155 = vmatprep.subr.mxu0 0.0
    %3156 = vmatpush1.msra.mxu0 0.0
    %3157 = vmatprep.subr.mxu0 0.0
    %3158 = vmatpush1.msra.mxu0 0.0
    %3159 = vmatprep.subr.mxu0 0.0
    %3160 = vmatpush1.msra.mxu0 0.0
    %3161 = vmatprep.subr.mxu0 0.0
    %3162 = vmatpush1.msra.mxu0 0.0
    %3163 = vmatprep.subr.mxu0 0.0
    %3164 = vmatpush1.msra.mxu0 0.0
    %3165 = vmatprep.mubr.f32.mxu0 0.0
    %3166 = vmatmul.mubr.f32.gmra.mrb[0].mxu0 %v3099
    %v3167 = vpop.f32.mrb[0].mxu0
    %v3168 = vadd.f32 0.0, %v3167
    %v3169 = vpop.f32.mrb[0].mxu0
    %3170 = vdwg.mxu0
    %3171 = vmatprep.subr.mxu0 0.0
    %3172 = vmatpush1.msra.mxu0 %v3077
    %3173 = vmatprep.subr.mxu0 0.0
    %3174 = vmatpush1.msra.mxu0 %v3078
    %3175 = vmatprep.subr.mxu0 0.0
    %3176 = vmatpush1.msra.mxu0 %v3079
    %3177 = vmatprep.subr.mxu0 0.0
    %3178 = vmatpush1.msra.mxu0 %v3080
    %3179 = vmatprep.subr.mxu0 0.0
    %3180 = vmatpush1.msra.mxu0 %v3081
    %3181 = vmatprep.subr.mxu0 0.0
    %3182 = vmatpush1.msra.mxu0 %v3082
    %3183 = vmatprep.subr.mxu0 0.0
    %3184 = vmatpush1.msra.mxu0 %v3083
    %3185 = vmatprep.subr.mxu0 0.0
    %3186 = vmatpush1.msra.mxu0 %v3084
    %3187 = vmatprep.subr.mxu0 0.0
    %3188 = vmatpush1.msra.mxu0 %v3085
    %3189 = vmatprep.subr.mxu0 0.0
    %3190 = vmatpush1.msra.mxu0 %v3086
    %3191 = vmatprep.subr.mxu0 0.0
    %3192 = vmatpush1.msra.mxu0 %v3087
    %3193 = vmatprep.subr.mxu0 0.0
    %3194 = vmatpush1.msra.mxu0 %v3088
    %3195 = vmatprep.subr.mxu0 0.0
    %3196 = vmatpush1.msra.mxu0 %v3089
    %3197 = vmatprep.subr.mxu0 0.0
    %3198 = vmatpush1.msra.mxu0 %v3090
    %3199 = vmatprep.subr.mxu0 0.0
    %3200 = vmatpush1.msra.mxu0 %v3091
    %3201 = vmatprep.subr.mxu0 0.0
    %3202 = vmatpush1.msra.mxu0 %v3092
    %3203 = vmatprep.subr.mxu0 0.0
    %3204 = vmatpush1.msra.mxu0 0.0
    %3205 = vmatprep.subr.mxu0 0.0
    %3206 = vmatpush1.msra.mxu0 0.0
    %3207 = vmatprep.subr.mxu0 0.0
    %3208 = vmatpush1.msra.mxu0 0.0
    %3209 = vmatprep.subr.mxu0 0.0
    %3210 = vmatpush1.msra.mxu0 0.0
    %3211 = vmatprep.subr.mxu0 0.0
    %3212 = vmatpush1.msra.mxu0 0.0
    %3213 = vmatprep.subr.mxu0 0.0
    %3214 = vmatpush1.msra.mxu0 0.0
    %3215 = vmatprep.subr.mxu0 0.0
    %3216 = vmatpush1.msra.mxu0 0.0
    %3217 = vmatprep.subr.mxu0 0.0
    %3218 = vmatpush1.msra.mxu0 0.0
    %3219 = vmatprep.subr.mxu0 0.0
    %3220 = vmatpush1.msra.mxu0 0.0
    %3221 = vmatprep.subr.mxu0 0.0
    %3222 = vmatpush1.msra.mxu0 0.0
    %3223 = vmatprep.subr.mxu0 0.0
    %3224 = vmatpush1.msra.mxu0 0.0
    %3225 = vmatprep.subr.mxu0 0.0
    %3226 = vmatpush1.msra.mxu0 0.0
    %3227 = vmatprep.subr.mxu0 0.0
    %3228 = vmatpush1.msra.mxu0 0.0
    %3229 = vmatprep.subr.mxu0 0.0
    %3230 = vmatpush1.msra.mxu0 0.0
    %3231 = vmatprep.subr.mxu0 0.0
    %3232 = vmatpush1.msra.mxu0 0.0
    %3233 = vmatprep.subr.mxu0 0.0
    %3234 = vmatpush1.msra.mxu0 0.0
    %3235 = vmatprep.mubr.f32.mxu0 0.0
    %3236 = vmatmul.mubr.f32.gmra.mrb[0].mxu0 %v2988
    %v3237 = vpop.f32.mrb[0].mxu0
    %v3238 = vadd.f32 %v3168, %v3237
    %v3239 = vpop.f32.mrb[0].mxu0
    %3240 = vdwg.mxu0
    %v3241 = vld [vmem:[%s11] sm:$0x1]
    %v3243 = vlaneseq
    %v3244 = vshrl.u32 %v3243, 7
    %v3245 = vsub.s32 0, %v3244
    %v3246 = vrot.slane %v3241, %v3245
    %v3248 = vadd.f32 %v3238, %v3246
    %v3249 = vmax.f32 %v3248, 0.0
    %v3250 = vld [vmem:[%s12] sm:$0xff]
    %v3251 = vld [vmem:[%s12 + $0x8] sm:$0xff]
    %v3252 = vld [vmem:[%s12 + $0x10] sm:$0xff]
    %v3253 = vld [vmem:[%s12 + $0x18] sm:$0xff]
    %v3254 = vld [vmem:[#allocation2] sm:$0x1]
    %v3256 = vlaneseq
    %v3257 = vshrl.u32 %v3256, 7
    %v3258 = vsub.s32 0, %v3257
    %v3259 = vrot.slane %v3254, %v3258
    %v3262 = vsel %vm3097, %v3249, 0
    %3264 = vmatprep.subr.mxu0 0.0
    %3265 = vmatpush1.msra.mxu0 %v3250
    %3266 = vmatprep.subr.mxu0 0.0
    %3267 = vmatpush1.msra.mxu0 %v3251
    %3268 = vmatprep.subr.mxu0 0.0
    %3269 = vmatpush1.msra.mxu0 %v3252
    %3270 = vmatprep.subr.mxu0 0.0
    %3271 = vmatpush1.msra.mxu0 %v3253
    %3272 = vmatprep.subr.mxu0 0.0
    %3273 = vmatpush1.msra.mxu0 0.0
    %3274 = vmatprep.subr.mxu0 0.0
    %3275 = vmatpush1.msra.mxu0 0.0
    %3276 = vmatprep.subr.mxu0 0.0
    %3277 = vmatpush1.msra.mxu0 0.0
    %3278 = vmatprep.subr.mxu0 0.0
    %3279 = vmatpush1.msra.mxu0 0.0
    %3280 = vmatprep.subr.mxu0 0.0
    %3281 = vmatpush1.msra.mxu0 0.0
    %3282 = vmatprep.subr.mxu0 0.0
    %3283 = vmatpush1.msra.mxu0 0.0
    %3284 = vmatprep.subr.mxu0 0.0
    %3285 = vmatpush1.msra.mxu0 0.0
    %3286 = vmatprep.subr.mxu0 0.0
    %3287 = vmatpush1.msra.mxu0 0.0
    %3288 = vmatprep.subr.mxu0 0.0
    %3289 = vmatpush1.msra.mxu0 0.0
    %3290 = vmatprep.subr.mxu0 0.0
    %3291 = vmatpush1.msra.mxu0 0.0
    %3292 = vmatprep.subr.mxu0 0.0
    %3293 = vmatpush1.msra.mxu0 0.0
    %3294 = vmatprep.subr.mxu0 0.0
    %3295 = vmatpush1.msra.mxu0 0.0
    %3296 = vmatprep.subr.mxu0 0.0
    %3297 = vmatpush1.msra.mxu0 0.0
    %3298 = vmatprep.subr.mxu0 0.0
    %3299 = vmatpush1.msra.mxu0 0.0
    %3300 = vmatprep.subr.mxu0 0.0
    %3301 = vmatpush1.msra.mxu0 0.0
    %3302 = vmatprep.subr.mxu0 0.0
    %3303 = vmatpush1.msra.mxu0 0.0
    %3304 = vmatprep.subr.mxu0 0.0
    %3305 = vmatpush1.msra.mxu0 0.0
    %3306 = vmatprep.subr.mxu0 0.0
    %3307 = vmatpush1.msra.mxu0 0.0
    %3308 = vmatprep.subr.mxu0 0.0
    %3309 = vmatpush1.msra.mxu0 0.0
    %3310 = vmatprep.subr.mxu0 0.0
    %3311 = vmatpush1.msra.mxu0 0.0
    %3312 = vmatprep.subr.mxu0 0.0
    %3313 = vmatpush1.msra.mxu0 0.0
    %3314 = vmatprep.subr.mxu0 0.0
    %3315 = vmatpush1.msra.mxu0 0.0
    %3316 = vmatprep.subr.mxu0 0.0
    %3317 = vmatpush1.msra.mxu0 0.0
    %3318 = vmatprep.subr.mxu0 0.0
    %3319 = vmatpush1.msra.mxu0 0.0
    %3320 = vmatprep.subr.mxu0 0.0
    %3321 = vmatpush1.msra.mxu0 0.0
    %3322 = vmatprep.subr.mxu0 0.0
    %3323 = vmatpush1.msra.mxu0 0.0
    %3324 = vmatprep.subr.mxu0 0.0
    %3325 = vmatpush1.msra.mxu0 0.0
    %3326 = vmatprep.subr.mxu0 0.0
    %3327 = vmatpush1.msra.mxu0 0.0
    %3328 = vmatprep.mubr.f32.mxu0 0.0
    %3329 = vmatmul.mubr.f32.gmra.mrb[0].mxu0 %v3262
    %v3330 = vpop.f32.mrb[0].mxu0
    %v3331 = vadd.f32 %v3259, %v3330
    %v3332 = vpop.f32.mrb[0].mxu0
    %3333 = vdwg.mxu0
    %v3334 = vxor.u32 %v3331, 2147483648
    %v3335 = vmul.f32 %v3334, 1.442695
    %v3336 = vpow.pop %v3335
    %v3337 = vadd.f32 %v3336, 1.0
    %v3338 = vrcp.pop %v3337
    %v3339 = vmul.f32 1.0, %v3338
    %vm3340 = vcmask 7168
    %3341 = vst.msk [vmem:[%s14] sm:$0xff] %vm3340, %v3339
    // Predicated region
    $region66: #{tpu_custom_call.1} parent=1 // pred_check
      _
    $region67: #{tpu_custom_call.1} parent=1 // pred_check_branch
      %3343 = sbr.rel (0) target = $region69
    $region68: #{tpu_custom_call.1} parent=1 // pred_region
      _
    $region69: #{tpu_custom_call.1} parent=1 // pred_fallthru
      _
    // Predicated region
    $region70: #{tpu_custom_call.1} parent=1 // pred_check
      _
    $region71: #{tpu_custom_call.1} parent=1 // pred_check_branch
      %3345 = sbr.rel (0) target = $region73
    $region72: #{tpu_custom_call.1} parent=1 // pred_region
      _
    $region73: #{tpu_custom_call.1} parent=1 // pred_fallthru
      _
    %3346 = vsyncpa [#allocation4], 1
    %3347 = vsyncpa [#allocation6], 1

</llo_original>
